<compile_context>
chip_gen: v5e
topology: v5e:2x2
jax: 0.10.0
libtpu: 0.0.40
codegen_flags: <defaults>
</compile_context>

<pallas_src>
import jax
import jax.numpy as jnp
from jax import lax
from jax.experimental import pallas as pl
from jax.experimental.pallas import tpu as pltpu


def _round_up(x, m):
    return ((x + m - 1) // m) * m


def _pick_unroll(S):
    if S <= 16:
        return S            # full unroll for short sequences
    for u in (8, 4, 2):
        if S % u == 0:
            return u
    return 1


def iin_kernel(hist_ref, am_ref,
               wx_ref, bx_ref, whru_ref, wch_ref,
               wout_ref, bout_ref,
               out_ref, gx_ref):
    bm, S, H = hist_ref.shape          # H is the (padded) hidden dim
    G = wx_ref.shape[1]                # 3*H
    w_dtype = whru_ref.dtype

    # ---- Hoisted input-path matmul for ALL time steps (one big MXU op) ----
    x_all = hist_ref[...].reshape(bm * S, H)
    gx_all = (jnp.dot(x_all, wx_ref[...], preferred_element_type=jnp.float32)
              + bx_ref[...])                               # (bm*S, 3H), f32
    gx_ref[...] = gx_all.reshape(bm, S, G)

    # Recurrent-path weights loaded once, outside the loop.
    wh_ru = whru_ref[...]              # (H, 2H)  [Wrh | Wuh]
    wch = wch_ref[...]                 # (H, H)

    h0 = jnp.zeros((bm, H), jnp.float32)
    pooled0 = jnp.full((bm, H), -jnp.inf, jnp.float32)

    def step(t, carry):
        h_prev, pooled = carry
        gx = gx_ref[:, t, :]                              # (bm, 3H), f32
        am = am_ref[:, t, :]                              # (bm, 2): [att, mask]
        a_t = am[:, 0:1]
        m_t = am[:, 1:2]

        gh = jnp.dot(h_prev.astype(w_dtype), wh_ru,
                     preferred_element_type=jnp.float32)  # (bm, 2H)
        r = jax.nn.sigmoid(gx[:, :H] + gh[:, :H])
        u = jax.nn.sigmoid(gx[:, H:2 * H] + gh[:, H:])
        c = jnp.tanh(gx[:, 2 * H:] +
                     jnp.dot((r * h_prev).astype(w_dtype), wch,
                             preferred_element_type=jnp.float32))
        u_ = a_t * u
        h = (1.0 - u_) * h_prev + u_ * c

        # masked_fill(mask == 0, 0.0) followed by running max over time.
        pooled = jnp.maximum(pooled, jnp.where(m_t != 0.0, h, 0.0))
        return h, pooled

    # NOTE: h_last is the hidden state after all S steps (matches the PyTorch
    # forward, which takes h[:, -1]), including padded time steps.
    h_last, pooled = lax.fori_loop(0, S, step, (h0, pooled0),
                                   unroll=_pick_unroll(S))

    pooled_out = (jnp.dot(pooled.astype(w_dtype), wout_ref[...],
                          preferred_element_type=jnp.float32) + bout_ref[...])

    # Two lane-aligned stores instead of a concatenate + single store.
    out_ref[:, :H] = h_last.astype(out_ref.dtype)
    out_ref[:, H:] = pooled_out.astype(out_ref.dtype)


def _weight_spec(shape):
    """Replicated (constant index_map) block; single-buffered when supported."""
    index_map = lambda i: (0,) * len(shape)
    if hasattr(pl, "Buffered"):
        try:
            return pl.BlockSpec(shape, index_map, pipeline_mode=pl.Buffered(1))
        except TypeError:
            pass
    return pl.BlockSpec(shape, index_map)


def iin_forward(hist_emb, att_scores, mask, params, *, block_m=None,
                weight_dtype=jnp.float32):
    """hist_emb: (B, S, H); att_scores: (B, S); mask: (B, S) (nonzero = valid)."""
    B, S, H = hist_emb.shape
    Hp = _round_up(H, 128)             # lane-aligned hidden dim
    pad_h = Hp - H

    # Pad each per-gate weight BEFORE folding so gate boundaries stay 128-aligned.
    def padw(w):                       # (H, H) -> (Hp, Hp), zeros elsewhere
        return jnp.pad(w, ((0, pad_h), (0, pad_h)))

    def padb(b):                       # (1, H) -> (1, Hp)
        return jnp.pad(b, ((0, 0), (0, pad_h)))

    p = params
    wx_all = jnp.concatenate([padw(p["wrx"]), padw(p["wux"]), padw(p["wcx"])],
                             axis=1).astype(weight_dtype)            # (Hp, 3Hp)
    bx_all = jnp.concatenate([padb(p["br"]), padb(p["bu"]), padb(p["bc"])],
                             axis=1).astype(jnp.float32)             # (1, 3Hp)
    wh_ru = jnp.concatenate([padw(p["wrh"]), padw(p["wuh"])],
                            axis=1).astype(weight_dtype)             # (Hp, 2Hp)
    wch = padw(p["wch"]).astype(weight_dtype)                        # (Hp, Hp)
    wout = padw(p["wout"]).astype(weight_dtype)                      # (Hp, Hp)
    bout = padb(p["bout"]).astype(jnp.float32)                       # (1, Hp)

    # Batch tiling: multiple of 8 sublanes, capped at 128 rows per tile.
    if block_m is None:
        block_m = min(128, _round_up(B, 8))
    block_m = _round_up(block_m, 8)
    Bp = _round_up(B, block_m)

    hist = hist_emb.astype(weight_dtype)
    if pad_h:
        hist = jnp.pad(hist, ((0, 0), (0, 0), (0, pad_h)))
    if Bp != B:
        hist = jnp.pad(hist, ((0, Bp - B), (0, 0), (0, 0)))
        att_scores = jnp.pad(att_scores, ((0, Bp - B), (0, 0)))
        mask = jnp.pad(mask, ((0, Bp - B), (0, 0)))

    # Attention score + validity mask packed into one small input.
    am = jnp.stack([att_scores.astype(jnp.float32),
                    (mask != 0).astype(jnp.float32)], axis=-1)       # (Bp, S, 2)

    out = pl.pallas_call(
        iin_kernel,
        out_shape=jax.ShapeDtypeStruct((Bp, 2 * Hp), jnp.float32),
        grid_spec=pltpu.PrefetchScalarGridSpec(
            num_scalar_prefetch=0,
            grid=(Bp // block_m,),
            in_specs=[
                pl.BlockSpec((block_m, S, Hp), lambda i: (i, 0, 0)),  # hist (B,S,H)
                pl.BlockSpec((block_m, S, 2), lambda i: (i, 0, 0)),   # [att | mask]
                _weight_spec((Hp, 3 * Hp)),   # [Wrx|Wux|Wcx]
                _weight_spec((1, 3 * Hp)),    # [br|bu|bc]
                _weight_spec((Hp, 2 * Hp)),   # [Wrh|Wuh]
                _weight_spec((Hp, Hp)),       # Wch
                _weight_spec((Hp, Hp)),       # W_out
                _weight_spec((1, Hp)),        # b_out
            ],
            out_specs=pl.BlockSpec((block_m, 2 * Hp), lambda i: (i, 0)),
            scratch_shapes=[pltpu.VMEM((block_m, S, 3 * Hp), jnp.float32)],
        ),
        compiler_params=pltpu.CompilerParams(
            dimension_semantics=("parallel",),
            vmem_limit_bytes=64 * 1024 * 1024),
    )(hist, am, wx_all, bx_all, wh_ru, wch, wout, bout)

    if Bp == B and Hp == H:
        return out
    return jnp.concatenate([out[:B, :H], out[:B, Hp:Hp + H]], axis=-1)


def iin_reference(hist_emb, att_scores, mask, params):
    """Pure-JAX reference mirroring the PyTorch forward (for verification)."""
    B, S, H = hist_emb.shape
    p = params
    h = jnp.zeros((B, H), jnp.float32)
    hs = []
    for t in range(S):
        x_t = hist_emb[:, t, :]
        r = jax.nn.sigmoid(x_t @ p["wrx"] + h @ p["wrh"] + p["br"])
        u = jax.nn.sigmoid(x_t @ p["wux"] + h @ p["wuh"] + p["bu"])
        c = jnp.tanh(x_t @ p["wcx"] + (r * h) @ p["wch"] + p["bc"])
        u_ = att_scores[:, t:t + 1] * u
        h = (1.0 - u_) * h + u_ * c
        hs.append(h)
    hstack = jnp.stack(hs, axis=1)                       # (B, S, H)
    last = hstack[:, -1, :]
    masked = jnp.where((mask == 0)[:, :, None], 0.0, hstack)
    pooled = masked.max(axis=1)
    pooled_out = pooled @ p["wout"] + p["bout"]
    return jnp.concatenate([last, pooled_out], axis=-1)


def make_params(key, hidden_dim):
    """Synthetic AUGRUCell + out_linear parameters (torch Linear, pre-transposed)."""
    H = hidden_dim
    ks = jax.random.split(key, 11)
    scale_gate = 1.0 / jnp.sqrt(2.0 * H)   # fan_in of the gate Linears is 2H
    scale_out = 1.0 / jnp.sqrt(1.0 * H)

    def w(k, s):
        return jax.random.normal(k, (H, H), jnp.float32) * s

    def b(k):
        return jax.random.normal(k, (1, H), jnp.float32) * 0.01

    return {
        "wrx": w(ks[0], scale_gate), "wrh": w(ks[1], scale_gate), "br": b(ks[2]),
        "wux": w(ks[3], scale_gate), "wuh": w(ks[4], scale_gate), "bu": b(ks[5]),
        "wcx": w(ks[6], scale_gate), "wch": w(ks[7], scale_gate), "bc": b(ks[8]),
        "wout": w(ks[9], scale_out), "bout": b(ks[10]),
    }


if __name__ == "__main__":
    key = jax.random.PRNGKey(0)
    k_hist, k_tgt, kp = jax.random.split(key, 3)

    # Small but alignment-friendly shapes: H = one 128-lane block, two batch tiles.
    B, S, H = 16, 8, 128
    block_m = 8   # grid of 2 -> pipelined tiles / dual-TC sharding on v7x

    hist_emb = jax.random.normal(k_hist, (B, S, H), jnp.float32) * 0.5
    target_emb = jax.random.normal(k_tgt, (B, H), jnp.float32) * 0.5

    # Valid-position mask (1 = valid, 0 = padding), variable-length histories.
    lengths = jnp.array([8, 6, 3, 5, 8, 1, 7, 2, 4, 8, 6, 5, 3, 8, 2, 7],
                        dtype=jnp.int32)
    mask = (jnp.arange(S)[None, :] < lengths[:, None]).astype(jnp.float32)

    params = make_params(kp, H)

    # TODO(synk): `attention_layers` (self.att_unit) is an external module with
    # no definition in the spec; use a masked scaled-dot-product stand-in.
    logits = jnp.einsum("bsh,bh->bs", hist_emb, target_emb) / jnp.sqrt(float(H))
    logits = jnp.where(mask > 0, logits, -1e9)
    att_scores = jax.nn.softmax(logits, axis=-1)

    out = iin_forward(hist_emb, att_scores, mask, params, block_m=block_m)
    out = jax.block_until_ready(out)

    ref = iin_reference(hist_emb, att_scores, mask, params)
    assert out.shape == (B, 2 * H)
    err = jnp.max(jnp.abs(out - ref))
    assert jnp.allclose(out, ref, atol=1e-4, rtol=1e-4), f"max abs err {err}"

    print("KERNEL_OK")
</pallas_src>

<mosaic_0001>
module attributes {stable_mosaic.version = 11 : i64} {
  func.func @iin_kernel(%arg0: i32, %arg1: memref<8x8x128xf32, #tpu.memory_space<vmem>>, %arg2: memref<8x8x2xf32, #tpu.memory_space<vmem>>, %arg3: memref<128x384xf32, #tpu.memory_space<vmem>>, %arg4: memref<1x384xf32, #tpu.memory_space<vmem>>, %arg5: memref<128x256xf32, #tpu.memory_space<vmem>>, %arg6: memref<128x128xf32, #tpu.memory_space<vmem>>, %arg7: memref<128x128xf32, #tpu.memory_space<vmem>>, %arg8: memref<1x128xf32, #tpu.memory_space<vmem>>, %arg9: memref<8x256xf32, #tpu.memory_space<vmem>>, %arg10: memref<8x8x384xf32, #tpu.memory_space<vmem>>) attributes {dimension_semantics = [#tpu.dimension_semantics<parallel>], iteration_bounds = array<i64: 2>, scalar_prefetch = 0 : i64, scratch_operands = 1 : i64, tpu.core_type = #tpu.core_type<tc>, window_params = [{transform_indices = @transform_0, window_bounds = array<i64: 8, 8, 128>}, {transform_indices = @transform_1, window_bounds = array<i64: 8, 8, 2>}, {pipeline_mode = #tpu.pipeline_mode<synchronous>, transform_indices = @transform_2, window_bounds = array<i64: 128, 384>}, {pipeline_mode = #tpu.pipeline_mode<synchronous>, transform_indices = @transform_3, window_bounds = array<i64: 1, 384>}, {pipeline_mode = #tpu.pipeline_mode<synchronous>, transform_indices = @transform_4, window_bounds = array<i64: 128, 256>}, {pipeline_mode = #tpu.pipeline_mode<synchronous>, transform_indices = @transform_5, window_bounds = array<i64: 128, 128>}, {pipeline_mode = #tpu.pipeline_mode<synchronous>, transform_indices = @transform_6, window_bounds = array<i64: 128, 128>}, {pipeline_mode = #tpu.pipeline_mode<synchronous>, transform_indices = @transform_7, window_bounds = array<i64: 1, 128>}, {transform_indices = @transform_8, window_bounds = array<i64: 8, 256>}]} {
    %c0 = arith.constant 0 : index
    %c0_0 = arith.constant 0 : index
    %c0_1 = arith.constant 0 : index
    %0 = vector.load %arg1[%c0, %c0_0, %c0_1] : memref<8x8x128xf32, #tpu.memory_space<vmem>>, vector<8x8x128xf32>
    %1 = vector.shape_cast %0 : vector<8x8x128xf32> to vector<64x128xf32>
    %c0_2 = arith.constant 0 : index
    %c0_3 = arith.constant 0 : index
    %2 = vector.load %arg3[%c0_2, %c0_3] : memref<128x384xf32, #tpu.memory_space<vmem>>, vector<128x384xf32>
    %cst = arith.constant dense<0.000000e+00> : vector<64x384xf32>
    %3 = tpu.matmul %1, %2, %cst {dimension_numbers = #tpu.dot_dimension_numbers<[1], [0], [0], [1], [0, 0, 1, 1], [], []>} : vector<64x128xf32>, vector<128x384xf32>, vector<64x384xf32> -> vector<64x384xf32>
    %c0_4 = arith.constant 0 : index
    %c0_5 = arith.constant 0 : index
    %4 = vector.load %arg4[%c0_4, %c0_5] : memref<1x384xf32, #tpu.memory_space<vmem>>, vector<1x384xf32>
    %5 = vector.broadcast %4 : vector<1x384xf32> to vector<64x384xf32>
    %6 = arith.addf %3, %5 : vector<64x384xf32>
    %7 = vector.shape_cast %6 : vector<64x384xf32> to vector<8x8x384xf32>
    %c0_6 = arith.constant 0 : index
    %c0_7 = arith.constant 0 : index
    %c0_8 = arith.constant 0 : index
    %8 = vector.load %arg10[%c0_6, %c0_7, %c0_8] : memref<8x8x384xf32, #tpu.memory_space<vmem>>, vector<8x8x384xf32>
    tpu.vector_store %arg10[%c0_6, %c0_7, %c0_8], %7 {strides = array<i32>} : memref<8x8x384xf32, #tpu.memory_space<vmem>>, vector<8x8x384xf32>,
    %c0_9 = arith.constant 0 : index
    %c0_10 = arith.constant 0 : index
    %9 = vector.load %arg5[%c0_9, %c0_10] : memref<128x256xf32, #tpu.memory_space<vmem>>, vector<128x256xf32>
    %c0_11 = arith.constant 0 : index
    %c0_12 = arith.constant 0 : index
    %10 = vector.load %arg6[%c0_11, %c0_12] : memref<128x128xf32, #tpu.memory_space<vmem>>, vector<128x128xf32>
    %cst_13 = arith.constant 0.000000e+00 : f32
    %11 = vector.broadcast %cst_13 : f32 to vector<8x128xf32>
    %cst_14 = arith.constant 0xFF800000 : f32
    %12 = vector.broadcast %cst_14 : f32 to vector<8x128xf32>
    %c0_i32 = arith.constant 0 : i32
    %c0_15 = arith.constant 0 : index
    %13 = arith.index_cast %c0_i32 : i32 to index
    %c0_16 = arith.constant 0 : index
    %14 = vector.load %arg10[%c0_15, %13, %c0_16] : memref<8x8x384xf32, #tpu.memory_space<vmem>>, vector<8x1x384xf32>
    %15 = vector.shape_cast %14 : vector<8x1x384xf32> to vector<8x384xf32>
    %c0_17 = arith.constant 0 : index
    %16 = arith.index_cast %c0_i32 : i32 to index
    %c0_18 = arith.constant 0 : index
    %17 = vector.load %arg2[%c0_17, %16, %c0_18] : memref<8x8x2xf32, #tpu.memory_space<vmem>>, vector<8x1x2xf32>
    %18 = vector.shape_cast %17 : vector<8x1x2xf32> to vector<8x2xf32>
    %19 = vector.extract_strided_slice %18 {offsets = [0, 0], sizes = [8, 1], strides = [1, 1]} : vector<8x2xf32> to vector<8x1xf32>
    %20 = vector.extract_strided_slice %18 {offsets = [0, 1], sizes = [8, 1], strides = [1, 1]} : vector<8x2xf32> to vector<8x1xf32>
    %cst_19 = arith.constant dense<0.000000e+00> : vector<8x256xf32>
    %21 = tpu.matmul %11, %9, %cst_19 {dimension_numbers = #tpu.dot_dimension_numbers<[1], [0], [0], [1], [0, 0, 1, 1], [], []>} : vector<8x128xf32>, vector<128x256xf32>, vector<8x256xf32> -> vector<8x256xf32>
    %22 = vector.extract_strided_slice %15 {offsets = [0, 0], sizes = [8, 128], strides = [1, 1]} : vector<8x384xf32> to vector<8x128xf32>
    %23 = vector.extract_strided_slice %21 {offsets = [0, 0], sizes = [8, 128], strides = [1, 1]} : vector<8x256xf32> to vector<8x128xf32>
    %24 = arith.addf %22, %23 : vector<8x128xf32>
    %25 = arith.negf %24 : vector<8x128xf32>
    %26 = math.exp %25 : vector<8x128xf32>
    %cst_20 = arith.constant 1.000000e+00 : f32
    %27 = vector.broadcast %cst_20 : f32 to vector<8x128xf32>
    %28 = arith.addf %27, %26 : vector<8x128xf32>
    %29 = arith.divf %27, %28 : vector<8x128xf32>
    %30 = vector.extract_strided_slice %15 {offsets = [0, 128], sizes = [8, 128], strides = [1, 1]} : vector<8x384xf32> to vector<8x128xf32>
    %31 = vector.extract_strided_slice %21 {offsets = [0, 128], sizes = [8, 128], strides = [1, 1]} : vector<8x256xf32> to vector<8x128xf32>
    %32 = arith.addf %30, %31 : vector<8x128xf32>
    %33 = arith.negf %32 : vector<8x128xf32>
    %34 = math.exp %33 : vector<8x128xf32>
    %cst_21 = arith.constant 1.000000e+00 : f32
    %35 = vector.broadcast %cst_21 : f32 to vector<8x128xf32>
    %36 = arith.addf %35, %34 : vector<8x128xf32>
    %37 = arith.divf %35, %36 : vector<8x128xf32>
    %38 = vector.extract_strided_slice %15 {offsets = [0, 256], sizes = [8, 128], strides = [1, 1]} : vector<8x384xf32> to vector<8x128xf32>
    %39 = arith.mulf %29, %11 : vector<8x128xf32>
    %cst_22 = arith.constant dense<0.000000e+00> : vector<8x128xf32>
    %40 = tpu.matmul %39, %10, %cst_22 {dimension_numbers = #tpu.dot_dimension_numbers<[1], [0], [0], [1], [0, 0, 1, 1], [], []>} : vector<8x128xf32>, vector<128x128xf32>, vector<8x128xf32> -> vector<8x128xf32>
    %41 = arith.addf %38, %40 : vector<8x128xf32>
    %42 = math.tanh %41 : vector<8x128xf32>
    %43 = vector.broadcast %19 : vector<8x1xf32> to vector<8x128xf32>
    %44 = arith.mulf %43, %37 : vector<8x128xf32>
    %cst_23 = arith.constant 1.000000e+00 : f32
    %45 = vector.broadcast %cst_23 : f32 to vector<8x128xf32>
    %46 = arith.subf %45, %44 : vector<8x128xf32>
    %47 = arith.mulf %46, %11 : vector<8x128xf32>
    %48 = arith.mulf %44, %42 : vector<8x128xf32>
    %49 = arith.addf %47, %48 : vector<8x128xf32>
    %cst_24 = arith.constant 0.000000e+00 : f32
    %50 = vector.broadcast %cst_24 : f32 to vector<8x1xf32>
    %51 = arith.cmpf one, %20, %50 : vector<8x1xf32>
    %cst_25 = arith.constant 0.000000e+00 : f32
    %52 = vector.shape_cast %51 : vector<8x1xi1> to vector<8x1xi1>
    %53 = vector.broadcast %52 : vector<8x1xi1> to vector<8x128xi1>
    %54 = vector.broadcast %cst_25 : f32 to vector<8x128xf32>
    %55 = arith.select %53, %49, %54 : vector<8x128xi1>, vector<8x128xf32>
    %56 = arith.maximumf %12, %55 : vector<8x128xf32>
    %c1_i32 = arith.constant 1 : i32
    %c0_26 = arith.constant 0 : index
    %57 = arith.index_cast %c1_i32 : i32 to index
    %c0_27 = arith.constant 0 : index
    %58 = vector.load %arg10[%c0_26, %57, %c0_27] : memref<8x8x384xf32, #tpu.memory_space<vmem>>, vector<8x1x384xf32>
    %59 = vector.shape_cast %58 : vector<8x1x384xf32> to vector<8x384xf32>
    %c0_28 = arith.constant 0 : index
    %60 = arith.index_cast %c1_i32 : i32 to index
    %c0_29 = arith.constant 0 : index
    %61 = vector.load %arg2[%c0_28, %60, %c0_29] : memref<8x8x2xf32, #tpu.memory_space<vmem>>, vector<8x1x2xf32>
    %62 = vector.shape_cast %61 : vector<8x1x2xf32> to vector<8x2xf32>
    %63 = vector.extract_strided_slice %62 {offsets = [0, 0], sizes = [8, 1], strides = [1, 1]} : vector<8x2xf32> to vector<8x1xf32>
    %64 = vector.extract_strided_slice %62 {offsets = [0, 1], sizes = [8, 1], strides = [1, 1]} : vector<8x2xf32> to vector<8x1xf32>
    %cst_30 = arith.constant dense<0.000000e+00> : vector<8x256xf32>
    %65 = tpu.matmul %49, %9, %cst_30 {dimension_numbers = #tpu.dot_dimension_numbers<[1], [0], [0], [1], [0, 0, 1, 1], [], []>} : vector<8x128xf32>, vector<128x256xf32>, vector<8x256xf32> -> vector<8x256xf32>
    %66 = vector.extract_strided_slice %59 {offsets = [0, 0], sizes = [8, 128], strides = [1, 1]} : vector<8x384xf32> to vector<8x128xf32>
    %67 = vector.extract_strided_slice %65 {offsets = [0, 0], sizes = [8, 128], strides = [1, 1]} : vector<8x256xf32> to vector<8x128xf32>
    %68 = arith.addf %66, %67 : vector<8x128xf32>
    %69 = arith.negf %68 : vector<8x128xf32>
    %70 = math.exp %69 : vector<8x128xf32>
    %cst_31 = arith.constant 1.000000e+00 : f32
    %71 = vector.broadcast %cst_31 : f32 to vector<8x128xf32>
    %72 = arith.addf %71, %70 : vector<8x128xf32>
    %73 = arith.divf %71, %72 : vector<8x128xf32>
    %74 = vector.extract_strided_slice %59 {offsets = [0, 128], sizes = [8, 128], strides = [1, 1]} : vector<8x384xf32> to vector<8x128xf32>
    %75 = vector.extract_strided_slice %65 {offsets = [0, 128], sizes = [8, 128], strides = [1, 1]} : vector<8x256xf32> to vector<8x128xf32>
    %76 = arith.addf %74, %75 : vector<8x128xf32>
    %77 = arith.negf %76 : vector<8x128xf32>
    %78 = math.exp %77 : vector<8x128xf32>
    %cst_32 = arith.constant 1.000000e+00 : f32
    %79 = vector.broadcast %cst_32 : f32 to vector<8x128xf32>
    %80 = arith.addf %79, %78 : vector<8x128xf32>
    %81 = arith.divf %79, %80 : vector<8x128xf32>
    %82 = vector.extract_strided_slice %59 {offsets = [0, 256], sizes = [8, 128], strides = [1, 1]} : vector<8x384xf32> to vector<8x128xf32>
    %83 = arith.mulf %73, %49 : vector<8x128xf32>
    %cst_33 = arith.constant dense<0.000000e+00> : vector<8x128xf32>
    %84 = tpu.matmul %83, %10, %cst_33 {dimension_numbers = #tpu.dot_dimension_numbers<[1], [0], [0], [1], [0, 0, 1, 1], [], []>} : vector<8x128xf32>, vector<128x128xf32>, vector<8x128xf32> -> vector<8x128xf32>
    %85 = arith.addf %82, %84 : vector<8x128xf32>
    %86 = math.tanh %85 : vector<8x128xf32>
    %87 = vector.broadcast %63 : vector<8x1xf32> to vector<8x128xf32>
    %88 = arith.mulf %87, %81 : vector<8x128xf32>
    %cst_34 = arith.constant 1.000000e+00 : f32
    %89 = vector.broadcast %cst_34 : f32 to vector<8x128xf32>
    %90 = arith.subf %89, %88 : vector<8x128xf32>
    %91 = arith.mulf %90, %49 : vector<8x128xf32>
    %92 = arith.mulf %88, %86 : vector<8x128xf32>
    %93 = arith.addf %91, %92 : vector<8x128xf32>
    %cst_35 = arith.constant 0.000000e+00 : f32
    %94 = vector.broadcast %cst_35 : f32 to vector<8x1xf32>
    %95 = arith.cmpf one, %64, %94 : vector<8x1xf32>
    %cst_36 = arith.constant 0.000000e+00 : f32
    %96 = vector.shape_cast %95 : vector<8x1xi1> to vector<8x1xi1>
    %97 = vector.broadcast %96 : vector<8x1xi1> to vector<8x128xi1>
    %98 = vector.broadcast %cst_36 : f32 to vector<8x128xf32>
    %99 = arith.select %97, %93, %98 : vector<8x128xi1>, vector<8x128xf32>
    %100 = arith.maximumf %56, %99 : vector<8x128xf32>
    %c2_i32 = arith.constant 2 : i32
    %c0_37 = arith.constant 0 : index
    %101 = arith.index_cast %c2_i32 : i32 to index
    %c0_38 = arith.constant 0 : index
    %102 = vector.load %arg10[%c0_37, %101, %c0_38] : memref<8x8x384xf32, #tpu.memory_space<vmem>>, vector<8x1x384xf32>
    %103 = vector.shape_cast %102 : vector<8x1x384xf32> to vector<8x384xf32>
    %c0_39 = arith.constant 0 : index
    %104 = arith.index_cast %c2_i32 : i32 to index
    %c0_40 = arith.constant 0 : index
    %105 = vector.load %arg2[%c0_39, %104, %c0_40] : memref<8x8x2xf32, #tpu.memory_space<vmem>>, vector<8x1x2xf32>
    %106 = vector.shape_cast %105 : vector<8x1x2xf32> to vector<8x2xf32>
    %107 = vector.extract_strided_slice %106 {offsets = [0, 0], sizes = [8, 1], strides = [1, 1]} : vector<8x2xf32> to vector<8x1xf32>
    %108 = vector.extract_strided_slice %106 {offsets = [0, 1], sizes = [8, 1], strides = [1, 1]} : vector<8x2xf32> to vector<8x1xf32>
    %cst_41 = arith.constant dense<0.000000e+00> : vector<8x256xf32>
    %109 = tpu.matmul %93, %9, %cst_41 {dimension_numbers = #tpu.dot_dimension_numbers<[1], [0], [0], [1], [0, 0, 1, 1], [], []>} : vector<8x128xf32>, vector<128x256xf32>, vector<8x256xf32> -> vector<8x256xf32>
    %110 = vector.extract_strided_slice %103 {offsets = [0, 0], sizes = [8, 128], strides = [1, 1]} : vector<8x384xf32> to vector<8x128xf32>
    %111 = vector.extract_strided_slice %109 {offsets = [0, 0], sizes = [8, 128], strides = [1, 1]} : vector<8x256xf32> to vector<8x128xf32>
    %112 = arith.addf %110, %111 : vector<8x128xf32>
    %113 = arith.negf %112 : vector<8x128xf32>
    %114 = math.exp %113 : vector<8x128xf32>
    %cst_42 = arith.constant 1.000000e+00 : f32
    %115 = vector.broadcast %cst_42 : f32 to vector<8x128xf32>
    %116 = arith.addf %115, %114 : vector<8x128xf32>
    %117 = arith.divf %115, %116 : vector<8x128xf32>
    %118 = vector.extract_strided_slice %103 {offsets = [0, 128], sizes = [8, 128], strides = [1, 1]} : vector<8x384xf32> to vector<8x128xf32>
    %119 = vector.extract_strided_slice %109 {offsets = [0, 128], sizes = [8, 128], strides = [1, 1]} : vector<8x256xf32> to vector<8x128xf32>
    %120 = arith.addf %118, %119 : vector<8x128xf32>
    %121 = arith.negf %120 : vector<8x128xf32>
    %122 = math.exp %121 : vector<8x128xf32>
    %cst_43 = arith.constant 1.000000e+00 : f32
    %123 = vector.broadcast %cst_43 : f32 to vector<8x128xf32>
    %124 = arith.addf %123, %122 : vector<8x128xf32>
    %125 = arith.divf %123, %124 : vector<8x128xf32>
    %126 = vector.extract_strided_slice %103 {offsets = [0, 256], sizes = [8, 128], strides = [1, 1]} : vector<8x384xf32> to vector<8x128xf32>
    %127 = arith.mulf %117, %93 : vector<8x128xf32>
    %cst_44 = arith.constant dense<0.000000e+00> : vector<8x128xf32>
    %128 = tpu.matmul %127, %10, %cst_44 {dimension_numbers = #tpu.dot_dimension_numbers<[1], [0], [0], [1], [0, 0, 1, 1], [], []>} : vector<8x128xf32>, vector<128x128xf32>, vector<8x128xf32> -> vector<8x128xf32>
    %129 = arith.addf %126, %128 : vector<8x128xf32>
    %130 = math.tanh %129 : vector<8x128xf32>
    %131 = vector.broadcast %107 : vector<8x1xf32> to vector<8x128xf32>
    %132 = arith.mulf %131, %125 : vector<8x128xf32>
    %cst_45 = arith.constant 1.000000e+00 : f32
    %133 = vector.broadcast %cst_45 : f32 to vector<8x128xf32>
    %134 = arith.subf %133, %132 : vector<8x128xf32>
    %135 = arith.mulf %134, %93 : vector<8x128xf32>
    %136 = arith.mulf %132, %130 : vector<8x128xf32>
    %137 = arith.addf %135, %136 : vector<8x128xf32>
    %cst_46 = arith.constant 0.000000e+00 : f32
    %138 = vector.broadcast %cst_46 : f32 to vector<8x1xf32>
    %139 = arith.cmpf one, %108, %138 : vector<8x1xf32>
    %cst_47 = arith.constant 0.000000e+00 : f32
    %140 = vector.shape_cast %139 : vector<8x1xi1> to vector<8x1xi1>
    %141 = vector.broadcast %140 : vector<8x1xi1> to vector<8x128xi1>
    %142 = vector.broadcast %cst_47 : f32 to vector<8x128xf32>
    %143 = arith.select %141, %137, %142 : vector<8x128xi1>, vector<8x128xf32>
    %144 = arith.maximumf %100, %143 : vector<8x128xf32>
    %c3_i32 = arith.constant 3 : i32
    %c0_48 = arith.constant 0 : index
    %145 = arith.index_cast %c3_i32 : i32 to index
    %c0_49 = arith.constant 0 : index
    %146 = vector.load %arg10[%c0_48, %145, %c0_49] : memref<8x8x384xf32, #tpu.memory_space<vmem>>, vector<8x1x384xf32>
    %147 = vector.shape_cast %146 : vector<8x1x384xf32> to vector<8x384xf32>
    %c0_50 = arith.constant 0 : index
    %148 = arith.index_cast %c3_i32 : i32 to index
    %c0_51 = arith.constant 0 : index
    %149 = vector.load %arg2[%c0_50, %148, %c0_51] : memref<8x8x2xf32, #tpu.memory_space<vmem>>, vector<8x1x2xf32>
    %150 = vector.shape_cast %149 : vector<8x1x2xf32> to vector<8x2xf32>
    %151 = vector.extract_strided_slice %150 {offsets = [0, 0], sizes = [8, 1], strides = [1, 1]} : vector<8x2xf32> to vector<8x1xf32>
    %152 = vector.extract_strided_slice %150 {offsets = [0, 1], sizes = [8, 1], strides = [1, 1]} : vector<8x2xf32> to vector<8x1xf32>
    %cst_52 = arith.constant dense<0.000000e+00> : vector<8x256xf32>
    %153 = tpu.matmul %137, %9, %cst_52 {dimension_numbers = #tpu.dot_dimension_numbers<[1], [0], [0], [1], [0, 0, 1, 1], [], []>} : vector<8x128xf32>, vector<128x256xf32>, vector<8x256xf32> -> vector<8x256xf32>
    %154 = vector.extract_strided_slice %147 {offsets = [0, 0], sizes = [8, 128], strides = [1, 1]} : vector<8x384xf32> to vector<8x128xf32>
    %155 = vector.extract_strided_slice %153 {offsets = [0, 0], sizes = [8, 128], strides = [1, 1]} : vector<8x256xf32> to vector<8x128xf32>
    %156 = arith.addf %154, %155 : vector<8x128xf32>
    %157 = arith.negf %156 : vector<8x128xf32>
    %158 = math.exp %157 : vector<8x128xf32>
    %cst_53 = arith.constant 1.000000e+00 : f32
    %159 = vector.broadcast %cst_53 : f32 to vector<8x128xf32>
    %160 = arith.addf %159, %158 : vector<8x128xf32>
    %161 = arith.divf %159, %160 : vector<8x128xf32>
    %162 = vector.extract_strided_slice %147 {offsets = [0, 128], sizes = [8, 128], strides = [1, 1]} : vector<8x384xf32> to vector<8x128xf32>
    %163 = vector.extract_strided_slice %153 {offsets = [0, 128], sizes = [8, 128], strides = [1, 1]} : vector<8x256xf32> to vector<8x128xf32>
    %164 = arith.addf %162, %163 : vector<8x128xf32>
    %165 = arith.negf %164 : vector<8x128xf32>
    %166 = math.exp %165 : vector<8x128xf32>
    %cst_54 = arith.constant 1.000000e+00 : f32
    %167 = vector.broadcast %cst_54 : f32 to vector<8x128xf32>
    %168 = arith.addf %167, %166 : vector<8x128xf32>
    %169 = arith.divf %167, %168 : vector<8x128xf32>
    %170 = vector.extract_strided_slice %147 {offsets = [0, 256], sizes = [8, 128], strides = [1, 1]} : vector<8x384xf32> to vector<8x128xf32>
    %171 = arith.mulf %161, %137 : vector<8x128xf32>
    %cst_55 = arith.constant dense<0.000000e+00> : vector<8x128xf32>
    %172 = tpu.matmul %171, %10, %cst_55 {dimension_numbers = #tpu.dot_dimension_numbers<[1], [0], [0], [1], [0, 0, 1, 1], [], []>} : vector<8x128xf32>, vector<128x128xf32>, vector<8x128xf32> -> vector<8x128xf32>
    %173 = arith.addf %170, %172 : vector<8x128xf32>
    %174 = math.tanh %173 : vector<8x128xf32>
    %175 = vector.broadcast %151 : vector<8x1xf32> to vector<8x128xf32>
    %176 = arith.mulf %175, %169 : vector<8x128xf32>
    %cst_56 = arith.constant 1.000000e+00 : f32
    %177 = vector.broadcast %cst_56 : f32 to vector<8x128xf32>
    %178 = arith.subf %177, %176 : vector<8x128xf32>
    %179 = arith.mulf %178, %137 : vector<8x128xf32>
    %180 = arith.mulf %176, %174 : vector<8x128xf32>
    %181 = arith.addf %179, %180 : vector<8x128xf32>
    %cst_57 = arith.constant 0.000000e+00 : f32
    %182 = vector.broadcast %cst_57 : f32 to vector<8x1xf32>
    %183 = arith.cmpf one, %152, %182 : vector<8x1xf32>
    %cst_58 = arith.constant 0.000000e+00 : f32
    %184 = vector.shape_cast %183 : vector<8x1xi1> to vector<8x1xi1>
    %185 = vector.broadcast %184 : vector<8x1xi1> to vector<8x128xi1>
    %186 = vector.broadcast %cst_58 : f32 to vector<8x128xf32>
    %187 = arith.select %185, %181, %186 : vector<8x128xi1>, vector<8x128xf32>
    %188 = arith.maximumf %144, %187 : vector<8x128xf32>
    %c4_i32 = arith.constant 4 : i32
    %c0_59 = arith.constant 0 : index
    %189 = arith.index_cast %c4_i32 : i32 to index
    %c0_60 = arith.constant 0 : index
    %190 = vector.load %arg10[%c0_59, %189, %c0_60] : memref<8x8x384xf32, #tpu.memory_space<vmem>>, vector<8x1x384xf32>
    %191 = vector.shape_cast %190 : vector<8x1x384xf32> to vector<8x384xf32>
    %c0_61 = arith.constant 0 : index
    %192 = arith.index_cast %c4_i32 : i32 to index
    %c0_62 = arith.constant 0 : index
    %193 = vector.load %arg2[%c0_61, %192, %c0_62] : memref<8x8x2xf32, #tpu.memory_space<vmem>>, vector<8x1x2xf32>
    %194 = vector.shape_cast %193 : vector<8x1x2xf32> to vector<8x2xf32>
    %195 = vector.extract_strided_slice %194 {offsets = [0, 0], sizes = [8, 1], strides = [1, 1]} : vector<8x2xf32> to vector<8x1xf32>
    %196 = vector.extract_strided_slice %194 {offsets = [0, 1], sizes = [8, 1], strides = [1, 1]} : vector<8x2xf32> to vector<8x1xf32>
    %cst_63 = arith.constant dense<0.000000e+00> : vector<8x256xf32>
    %197 = tpu.matmul %181, %9, %cst_63 {dimension_numbers = #tpu.dot_dimension_numbers<[1], [0], [0], [1], [0, 0, 1, 1], [], []>} : vector<8x128xf32>, vector<128x256xf32>, vector<8x256xf32> -> vector<8x256xf32>
    %198 = vector.extract_strided_slice %191 {offsets = [0, 0], sizes = [8, 128], strides = [1, 1]} : vector<8x384xf32> to vector<8x128xf32>
    %199 = vector.extract_strided_slice %197 {offsets = [0, 0], sizes = [8, 128], strides = [1, 1]} : vector<8x256xf32> to vector<8x128xf32>
    %200 = arith.addf %198, %199 : vector<8x128xf32>
    %201 = arith.negf %200 : vector<8x128xf32>
    %202 = math.exp %201 : vector<8x128xf32>
    %cst_64 = arith.constant 1.000000e+00 : f32
    %203 = vector.broadcast %cst_64 : f32 to vector<8x128xf32>
    %204 = arith.addf %203, %202 : vector<8x128xf32>
    %205 = arith.divf %203, %204 : vector<8x128xf32>
    %206 = vector.extract_strided_slice %191 {offsets = [0, 128], sizes = [8, 128], strides = [1, 1]} : vector<8x384xf32> to vector<8x128xf32>
    %207 = vector.extract_strided_slice %197 {offsets = [0, 128], sizes = [8, 128], strides = [1, 1]} : vector<8x256xf32> to vector<8x128xf32>
    %208 = arith.addf %206, %207 : vector<8x128xf32>
    %209 = arith.negf %208 : vector<8x128xf32>
    %210 = math.exp %209 : vector<8x128xf32>
    %cst_65 = arith.constant 1.000000e+00 : f32
    %211 = vector.broadcast %cst_65 : f32 to vector<8x128xf32>
    %212 = arith.addf %211, %210 : vector<8x128xf32>
    %213 = arith.divf %211, %212 : vector<8x128xf32>
    %214 = vector.extract_strided_slice %191 {offsets = [0, 256], sizes = [8, 128], strides = [1, 1]} : vector<8x384xf32> to vector<8x128xf32>
    %215 = arith.mulf %205, %181 : vector<8x128xf32>
    %cst_66 = arith.constant dense<0.000000e+00> : vector<8x128xf32>
    %216 = tpu.matmul %215, %10, %cst_66 {dimension_numbers = #tpu.dot_dimension_numbers<[1], [0], [0], [1], [0, 0, 1, 1], [], []>} : vector<8x128xf32>, vector<128x128xf32>, vector<8x128xf32> -> vector<8x128xf32>
    %217 = arith.addf %214, %216 : vector<8x128xf32>
    %218 = math.tanh %217 : vector<8x128xf32>
    %219 = vector.broadcast %195 : vector<8x1xf32> to vector<8x128xf32>
    %220 = arith.mulf %219, %213 : vector<8x128xf32>
    %cst_67 = arith.constant 1.000000e+00 : f32
    %221 = vector.broadcast %cst_67 : f32 to vector<8x128xf32>
    %222 = arith.subf %221, %220 : vector<8x128xf32>
    %223 = arith.mulf %222, %181 : vector<8x128xf32>
    %224 = arith.mulf %220, %218 : vector<8x128xf32>
    %225 = arith.addf %223, %224 : vector<8x128xf32>
    %cst_68 = arith.constant 0.000000e+00 : f32
    %226 = vector.broadcast %cst_68 : f32 to vector<8x1xf32>
    %227 = arith.cmpf one, %196, %226 : vector<8x1xf32>
    %cst_69 = arith.constant 0.000000e+00 : f32
    %228 = vector.shape_cast %227 : vector<8x1xi1> to vector<8x1xi1>
    %229 = vector.broadcast %228 : vector<8x1xi1> to vector<8x128xi1>
    %230 = vector.broadcast %cst_69 : f32 to vector<8x128xf32>
    %231 = arith.select %229, %225, %230 : vector<8x128xi1>, vector<8x128xf32>
    %232 = arith.maximumf %188, %231 : vector<8x128xf32>
    %c5_i32 = arith.constant 5 : i32
    %c0_70 = arith.constant 0 : index
    %233 = arith.index_cast %c5_i32 : i32 to index
    %c0_71 = arith.constant 0 : index
    %234 = vector.load %arg10[%c0_70, %233, %c0_71] : memref<8x8x384xf32, #tpu.memory_space<vmem>>, vector<8x1x384xf32>
    %235 = vector.shape_cast %234 : vector<8x1x384xf32> to vector<8x384xf32>
    %c0_72 = arith.constant 0 : index
    %236 = arith.index_cast %c5_i32 : i32 to index
    %c0_73 = arith.constant 0 : index
    %237 = vector.load %arg2[%c0_72, %236, %c0_73] : memref<8x8x2xf32, #tpu.memory_space<vmem>>, vector<8x1x2xf32>
    %238 = vector.shape_cast %237 : vector<8x1x2xf32> to vector<8x2xf32>
    %239 = vector.extract_strided_slice %238 {offsets = [0, 0], sizes = [8, 1], strides = [1, 1]} : vector<8x2xf32> to vector<8x1xf32>
    %240 = vector.extract_strided_slice %238 {offsets = [0, 1], sizes = [8, 1], strides = [1, 1]} : vector<8x2xf32> to vector<8x1xf32>
    %cst_74 = arith.constant dense<0.000000e+00> : vector<8x256xf32>
    %241 = tpu.matmul %225, %9, %cst_74 {dimension_numbers = #tpu.dot_dimension_numbers<[1], [0], [0], [1], [0, 0, 1, 1], [], []>} : vector<8x128xf32>, vector<128x256xf32>, vector<8x256xf32> -> vector<8x256xf32>
    %242 = vector.extract_strided_slice %235 {offsets = [0, 0], sizes = [8, 128], strides = [1, 1]} : vector<8x384xf32> to vector<8x128xf32>
    %243 = vector.extract_strided_slice %241 {offsets = [0, 0], sizes = [8, 128], strides = [1, 1]} : vector<8x256xf32> to vector<8x128xf32>
    %244 = arith.addf %242, %243 : vector<8x128xf32>
    %245 = arith.negf %244 : vector<8x128xf32>
    %246 = math.exp %245 : vector<8x128xf32>
    %cst_75 = arith.constant 1.000000e+00 : f32
    %247 = vector.broadcast %cst_75 : f32 to vector<8x128xf32>
    %248 = arith.addf %247, %246 : vector<8x128xf32>
    %249 = arith.divf %247, %248 : vector<8x128xf32>
    %250 = vector.extract_strided_slice %235 {offsets = [0, 128], sizes = [8, 128], strides = [1, 1]} : vector<8x384xf32> to vector<8x128xf32>
    %251 = vector.extract_strided_slice %241 {offsets = [0, 128], sizes = [8, 128], strides = [1, 1]} : vector<8x256xf32> to vector<8x128xf32>
    %252 = arith.addf %250, %251 : vector<8x128xf32>
    %253 = arith.negf %252 : vector<8x128xf32>
    %254 = math.exp %253 : vector<8x128xf32>
    %cst_76 = arith.constant 1.000000e+00 : f32
    %255 = vector.broadcast %cst_76 : f32 to vector<8x128xf32>
    %256 = arith.addf %255, %254 : vector<8x128xf32>
    %257 = arith.divf %255, %256 : vector<8x128xf32>
    %258 = vector.extract_strided_slice %235 {offsets = [0, 256], sizes = [8, 128], strides = [1, 1]} : vector<8x384xf32> to vector<8x128xf32>
    %259 = arith.mulf %249, %225 : vector<8x128xf32>
    %cst_77 = arith.constant dense<0.000000e+00> : vector<8x128xf32>
    %260 = tpu.matmul %259, %10, %cst_77 {dimension_numbers = #tpu.dot_dimension_numbers<[1], [0], [0], [1], [0, 0, 1, 1], [], []>} : vector<8x128xf32>, vector<128x128xf32>, vector<8x128xf32> -> vector<8x128xf32>
    %261 = arith.addf %258, %260 : vector<8x128xf32>
    %262 = math.tanh %261 : vector<8x128xf32>
    %263 = vector.broadcast %239 : vector<8x1xf32> to vector<8x128xf32>
    %264 = arith.mulf %263, %257 : vector<8x128xf32>
    %cst_78 = arith.constant 1.000000e+00 : f32
    %265 = vector.broadcast %cst_78 : f32 to vector<8x128xf32>
    %266 = arith.subf %265, %264 : vector<8x128xf32>
    %267 = arith.mulf %266, %225 : vector<8x128xf32>
    %268 = arith.mulf %264, %262 : vector<8x128xf32>
    %269 = arith.addf %267, %268 : vector<8x128xf32>
    %cst_79 = arith.constant 0.000000e+00 : f32
    %270 = vector.broadcast %cst_79 : f32 to vector<8x1xf32>
    %271 = arith.cmpf one, %240, %270 : vector<8x1xf32>
    %cst_80 = arith.constant 0.000000e+00 : f32
    %272 = vector.shape_cast %271 : vector<8x1xi1> to vector<8x1xi1>
    %273 = vector.broadcast %272 : vector<8x1xi1> to vector<8x128xi1>
    %274 = vector.broadcast %cst_80 : f32 to vector<8x128xf32>
    %275 = arith.select %273, %269, %274 : vector<8x128xi1>, vector<8x128xf32>
    %276 = arith.maximumf %232, %275 : vector<8x128xf32>
    %c6_i32 = arith.constant 6 : i32
    %c0_81 = arith.constant 0 : index
    %277 = arith.index_cast %c6_i32 : i32 to index
    %c0_82 = arith.constant 0 : index
    %278 = vector.load %arg10[%c0_81, %277, %c0_82] : memref<8x8x384xf32, #tpu.memory_space<vmem>>, vector<8x1x384xf32>
    %279 = vector.shape_cast %278 : vector<8x1x384xf32> to vector<8x384xf32>
    %c0_83 = arith.constant 0 : index
    %280 = arith.index_cast %c6_i32 : i32 to index
    %c0_84 = arith.constant 0 : index
    %281 = vector.load %arg2[%c0_83, %280, %c0_84] : memref<8x8x2xf32, #tpu.memory_space<vmem>>, vector<8x1x2xf32>
    %282 = vector.shape_cast %281 : vector<8x1x2xf32> to vector<8x2xf32>
    %283 = vector.extract_strided_slice %282 {offsets = [0, 0], sizes = [8, 1], strides = [1, 1]} : vector<8x2xf32> to vector<8x1xf32>
    %284 = vector.extract_strided_slice %282 {offsets = [0, 1], sizes = [8, 1], strides = [1, 1]} : vector<8x2xf32> to vector<8x1xf32>
    %cst_85 = arith.constant dense<0.000000e+00> : vector<8x256xf32>
    %285 = tpu.matmul %269, %9, %cst_85 {dimension_numbers = #tpu.dot_dimension_numbers<[1], [0], [0], [1], [0, 0, 1, 1], [], []>} : vector<8x128xf32>, vector<128x256xf32>, vector<8x256xf32> -> vector<8x256xf32>
    %286 = vector.extract_strided_slice %279 {offsets = [0, 0], sizes = [8, 128], strides = [1, 1]} : vector<8x384xf32> to vector<8x128xf32>
    %287 = vector.extract_strided_slice %285 {offsets = [0, 0], sizes = [8, 128], strides = [1, 1]} : vector<8x256xf32> to vector<8x128xf32>
    %288 = arith.addf %286, %287 : vector<8x128xf32>
    %289 = arith.negf %288 : vector<8x128xf32>
    %290 = math.exp %289 : vector<8x128xf32>
    %cst_86 = arith.constant 1.000000e+00 : f32
    %291 = vector.broadcast %cst_86 : f32 to vector<8x128xf32>
    %292 = arith.addf %291, %290 : vector<8x128xf32>
    %293 = arith.divf %291, %292 : vector<8x128xf32>
    %294 = vector.extract_strided_slice %279 {offsets = [0, 128], sizes = [8, 128], strides = [1, 1]} : vector<8x384xf32> to vector<8x128xf32>
    %295 = vector.extract_strided_slice %285 {offsets = [0, 128], sizes = [8, 128], strides = [1, 1]} : vector<8x256xf32> to vector<8x128xf32>
    %296 = arith.addf %294, %295 : vector<8x128xf32>
    %297 = arith.negf %296 : vector<8x128xf32>
    %298 = math.exp %297 : vector<8x128xf32>
    %cst_87 = arith.constant 1.000000e+00 : f32
    %299 = vector.broadcast %cst_87 : f32 to vector<8x128xf32>
    %300 = arith.addf %299, %298 : vector<8x128xf32>
    %301 = arith.divf %299, %300 : vector<8x128xf32>
    %302 = vector.extract_strided_slice %279 {offsets = [0, 256], sizes = [8, 128], strides = [1, 1]} : vector<8x384xf32> to vector<8x128xf32>
    %303 = arith.mulf %293, %269 : vector<8x128xf32>
    %cst_88 = arith.constant dense<0.000000e+00> : vector<8x128xf32>
    %304 = tpu.matmul %303, %10, %cst_88 {dimension_numbers = #tpu.dot_dimension_numbers<[1], [0], [0], [1], [0, 0, 1, 1], [], []>} : vector<8x128xf32>, vector<128x128xf32>, vector<8x128xf32> -> vector<8x128xf32>
    %305 = arith.addf %302, %304 : vector<8x128xf32>
    %306 = math.tanh %305 : vector<8x128xf32>
    %307 = vector.broadcast %283 : vector<8x1xf32> to vector<8x128xf32>
    %308 = arith.mulf %307, %301 : vector<8x128xf32>
    %cst_89 = arith.constant 1.000000e+00 : f32
    %309 = vector.broadcast %cst_89 : f32 to vector<8x128xf32>
    %310 = arith.subf %309, %308 : vector<8x128xf32>
    %311 = arith.mulf %310, %269 : vector<8x128xf32>
    %312 = arith.mulf %308, %306 : vector<8x128xf32>
    %313 = arith.addf %311, %312 : vector<8x128xf32>
    %cst_90 = arith.constant 0.000000e+00 : f32
    %314 = vector.broadcast %cst_90 : f32 to vector<8x1xf32>
    %315 = arith.cmpf one, %284, %314 : vector<8x1xf32>
    %cst_91 = arith.constant 0.000000e+00 : f32
    %316 = vector.shape_cast %315 : vector<8x1xi1> to vector<8x1xi1>
    %317 = vector.broadcast %316 : vector<8x1xi1> to vector<8x128xi1>
    %318 = vector.broadcast %cst_91 : f32 to vector<8x128xf32>
    %319 = arith.select %317, %313, %318 : vector<8x128xi1>, vector<8x128xf32>
    %320 = arith.maximumf %276, %319 : vector<8x128xf32>
    %c7_i32 = arith.constant 7 : i32
    %c0_92 = arith.constant 0 : index
    %321 = arith.index_cast %c7_i32 : i32 to index
    %c0_93 = arith.constant 0 : index
    %322 = vector.load %arg10[%c0_92, %321, %c0_93] : memref<8x8x384xf32, #tpu.memory_space<vmem>>, vector<8x1x384xf32>
    %323 = vector.shape_cast %322 : vector<8x1x384xf32> to vector<8x384xf32>
    %c0_94 = arith.constant 0 : index
    %324 = arith.index_cast %c7_i32 : i32 to index
    %c0_95 = arith.constant 0 : index
    %325 = vector.load %arg2[%c0_94, %324, %c0_95] : memref<8x8x2xf32, #tpu.memory_space<vmem>>, vector<8x1x2xf32>
    %326 = vector.shape_cast %325 : vector<8x1x2xf32> to vector<8x2xf32>
    %327 = vector.extract_strided_slice %326 {offsets = [0, 0], sizes = [8, 1], strides = [1, 1]} : vector<8x2xf32> to vector<8x1xf32>
    %328 = vector.extract_strided_slice %326 {offsets = [0, 1], sizes = [8, 1], strides = [1, 1]} : vector<8x2xf32> to vector<8x1xf32>
    %cst_96 = arith.constant dense<0.000000e+00> : vector<8x256xf32>
    %329 = tpu.matmul %313, %9, %cst_96 {dimension_numbers = #tpu.dot_dimension_numbers<[1], [0], [0], [1], [0, 0, 1, 1], [], []>} : vector<8x128xf32>, vector<128x256xf32>, vector<8x256xf32> -> vector<8x256xf32>
    %330 = vector.extract_strided_slice %323 {offsets = [0, 0], sizes = [8, 128], strides = [1, 1]} : vector<8x384xf32> to vector<8x128xf32>
    %331 = vector.extract_strided_slice %329 {offsets = [0, 0], sizes = [8, 128], strides = [1, 1]} : vector<8x256xf32> to vector<8x128xf32>
    %332 = arith.addf %330, %331 : vector<8x128xf32>
    %333 = arith.negf %332 : vector<8x128xf32>
    %334 = math.exp %333 : vector<8x128xf32>
    %cst_97 = arith.constant 1.000000e+00 : f32
    %335 = vector.broadcast %cst_97 : f32 to vector<8x128xf32>
    %336 = arith.addf %335, %334 : vector<8x128xf32>
    %337 = arith.divf %335, %336 : vector<8x128xf32>
    %338 = vector.extract_strided_slice %323 {offsets = [0, 128], sizes = [8, 128], strides = [1, 1]} : vector<8x384xf32> to vector<8x128xf32>
    %339 = vector.extract_strided_slice %329 {offsets = [0, 128], sizes = [8, 128], strides = [1, 1]} : vector<8x256xf32> to vector<8x128xf32>
    %340 = arith.addf %338, %339 : vector<8x128xf32>
    %341 = arith.negf %340 : vector<8x128xf32>
    %342 = math.exp %341 : vector<8x128xf32>
    %cst_98 = arith.constant 1.000000e+00 : f32
    %343 = vector.broadcast %cst_98 : f32 to vector<8x128xf32>
    %344 = arith.addf %343, %342 : vector<8x128xf32>
    %345 = arith.divf %343, %344 : vector<8x128xf32>
    %346 = vector.extract_strided_slice %323 {offsets = [0, 256], sizes = [8, 128], strides = [1, 1]} : vector<8x384xf32> to vector<8x128xf32>
    %347 = arith.mulf %337, %313 : vector<8x128xf32>
    %cst_99 = arith.constant dense<0.000000e+00> : vector<8x128xf32>
    %348 = tpu.matmul %347, %10, %cst_99 {dimension_numbers = #tpu.dot_dimension_numbers<[1], [0], [0], [1], [0, 0, 1, 1], [], []>} : vector<8x128xf32>, vector<128x128xf32>, vector<8x128xf32> -> vector<8x128xf32>
    %349 = arith.addf %346, %348 : vector<8x128xf32>
    %350 = math.tanh %349 : vector<8x128xf32>
    %351 = vector.broadcast %327 : vector<8x1xf32> to vector<8x128xf32>
    %352 = arith.mulf %351, %345 : vector<8x128xf32>
    %cst_100 = arith.constant 1.000000e+00 : f32
    %353 = vector.broadcast %cst_100 : f32 to vector<8x128xf32>
    %354 = arith.subf %353, %352 : vector<8x128xf32>
    %355 = arith.mulf %354, %313 : vector<8x128xf32>
    %356 = arith.mulf %352, %350 : vector<8x128xf32>
    %357 = arith.addf %355, %356 : vector<8x128xf32>
    %cst_101 = arith.constant 0.000000e+00 : f32
    %358 = vector.broadcast %cst_101 : f32 to vector<8x1xf32>
    %359 = arith.cmpf one, %328, %358 : vector<8x1xf32>
    %cst_102 = arith.constant 0.000000e+00 : f32
    %360 = vector.shape_cast %359 : vector<8x1xi1> to vector<8x1xi1>
    %361 = vector.broadcast %360 : vector<8x1xi1> to vector<8x128xi1>
    %362 = vector.broadcast %cst_102 : f32 to vector<8x128xf32>
    %363 = arith.select %361, %357, %362 : vector<8x128xi1>, vector<8x128xf32>
    %364 = arith.maximumf %320, %363 : vector<8x128xf32>
    %c8_i32 = arith.constant 8 : i32
    %c0_103 = arith.constant 0 : index
    %c0_104 = arith.constant 0 : index
    %365 = vector.load %arg7[%c0_103, %c0_104] : memref<128x128xf32, #tpu.memory_space<vmem>>, vector<128x128xf32>
    %cst_105 = arith.constant dense<0.000000e+00> : vector<8x128xf32>
    %366 = tpu.matmul %364, %365, %cst_105 {dimension_numbers = #tpu.dot_dimension_numbers<[1], [0], [0], [1], [0, 0, 1, 1], [], []>} : vector<8x128xf32>, vector<128x128xf32>, vector<8x128xf32> -> vector<8x128xf32>
    %c0_106 = arith.constant 0 : index
    %c0_107 = arith.constant 0 : index
    %367 = vector.load %arg8[%c0_106, %c0_107] : memref<1x128xf32, #tpu.memory_space<vmem>>, vector<1x128xf32>
    %368 = vector.broadcast %367 : vector<1x128xf32> to vector<8x128xf32>
    %369 = arith.addf %366, %368 : vector<8x128xf32>
    %c0_108 = arith.constant 0 : index
    %c0_109 = arith.constant 0 : index
    %370 = vector.load %arg9[%c0_108, %c0_109] : memref<8x256xf32, #tpu.memory_space<vmem>>, vector<8x128xf32>
    tpu.vector_store %arg9[%c0_108, %c0_109], %357 {strides = array<i32>} : memref<8x256xf32, #tpu.memory_space<vmem>>, vector<8x128xf32>,
    %c0_110 = arith.constant 0 : index
    %c128 = arith.constant 128 : index
    %371 = vector.load %arg9[%c0_110, %c128] : memref<8x256xf32, #tpu.memory_space<vmem>>, vector<8x128xf32>
    tpu.vector_store %arg9[%c0_110, %c128], %369 {strides = array<i32>} : memref<8x256xf32, #tpu.memory_space<vmem>>, vector<8x128xf32>,
    return
  }
  func.func @transform_0(%arg0: i32) -> (i32, i32, i32) {
    %c0_i32 = arith.constant 0 : i32
    %c0_i32_0 = arith.constant 0 : i32
    %c0_i32_1 = arith.constant 0 : i32
    return %arg0, %c0_i32, %c0_i32_0 : i32, i32, i32
  }
  func.func @transform_1(%arg0: i32) -> (i32, i32, i32) {
    %c0_i32 = arith.constant 0 : i32
    %c0_i32_0 = arith.constant 0 : i32
    %c0_i32_1 = arith.constant 0 : i32
    return %arg0, %c0_i32, %c0_i32_0 : i32, i32, i32
  }
  func.func @transform_2(%arg0: i32) -> (i32, i32) {
    %c0_i32 = arith.constant 0 : i32
    %c0_i32_0 = arith.constant 0 : i32
    %c0_i32_1 = arith.constant 0 : i32
    return %c0_i32, %c0_i32_0 : i32, i32
  }
  func.func @transform_3(%arg0: i32) -> (i32, i32) {
    %c0_i32 = arith.constant 0 : i32
    %c0_i32_0 = arith.constant 0 : i32
    %c0_i32_1 = arith.constant 0 : i32
    return %c0_i32, %c0_i32_0 : i32, i32
  }
  func.func @transform_4(%arg0: i32) -> (i32, i32) {
    %c0_i32 = arith.constant 0 : i32
    %c0_i32_0 = arith.constant 0 : i32
    %c0_i32_1 = arith.constant 0 : i32
    return %c0_i32, %c0_i32_0 : i32, i32
  }
  func.func @transform_5(%arg0: i32) -> (i32, i32) {
    %c0_i32 = arith.constant 0 : i32
    %c0_i32_0 = arith.constant 0 : i32
    %c0_i32_1 = arith.constant 0 : i32
    return %c0_i32, %c0_i32_0 : i32, i32
  }
  func.func @transform_6(%arg0: i32) -> (i32, i32) {
    %c0_i32 = arith.constant 0 : i32
    %c0_i32_0 = arith.constant 0 : i32
    %c0_i32_1 = arith.constant 0 : i32
    return %c0_i32, %c0_i32_0 : i32, i32
  }
  func.func @transform_7(%arg0: i32) -> (i32, i32) {
    %c0_i32 = arith.constant 0 : i32
    %c0_i32_0 = arith.constant 0 : i32
    %c0_i32_1 = arith.constant 0 : i32
    return %c0_i32, %c0_i32_0 : i32, i32
  }
  func.func @transform_8(%arg0: i32) -> (i32, i32) {
    %c0_i32 = arith.constant 0 : i32
    %c0_i32_0 = arith.constant 0 : i32
    return %arg0, %c0_i32 : i32, i32
  }
}

</mosaic_0001>

<llo_original>
// kernel: tpu_custom_call.1
$region0: #{tpu_custom_call.1}
  #allocation0 [shape = 'u32[]', space=smem, size = 0x4, offset = 0x4, fixed_abs, tag = 'smem constant byte address 0x4 - core index']
  #allocation1 [shape = 'u32[72,128]{1,0:T(1,128)}', space=vmem, size = 0x9000, scoped, tag = 'internal scratch']
  #allocation2 [shape = 'f32[8,8,384]{2,1,0:T(8,128)}', space=vmem, size = 0x18000, scoped, tag = 'scratch operand']
  %s0 = inlined_call_operand.vmem [shape: f32[16,8,128], index: 0, kind: input, shape index: {}]
  %s1 = inlined_call_operand.vmem [shape: f32[16,8,2], index: 1, kind: input, shape index: {}]
  %s2 = inlined_call_operand.hbm [shape: f32[128,384], index: 2, kind: input, shape index: {}]
  %s3 = inlined_call_operand.vmem [shape: f32[1,384], index: 3, kind: input, shape index: {}]
  %s4 = inlined_call_operand.hbm [shape: f32[128,256], index: 4, kind: input, shape index: {}]
  %s5 = inlined_call_operand.hbm [shape: f32[128,128], index: 5, kind: input, shape index: {}]
  %s6 = inlined_call_operand.hbm [shape: f32[128,128], index: 6, kind: input, shape index: {}]
  %s7 = inlined_call_operand.vmem [shape: f32[1,128], index: 7, kind: input, shape index: {}]
  %s8 = inlined_call_operand.hbm [shape: f32[16,256], index: 8, kind: output, shape index: {}]
  %s9 = sld [smem:[#allocation0]]
  $region81: #{tpu_custom_call.1} parent=0
    _
  %s11 = ssub.s32 1, %s9
  %s12 = scalar_select 0, %s11, %s9
  $region1: #{tpu_custom_call.1} parent=0
    #allocation3 [shape = 'u8[196608]{0}', space=vmem, size = 0x30000, scoped, tag = 'input window, operand 2, single buffered']
    #allocation4 [shape = 's32[2]{0}', space=sflag, size = 0x8, scoped, tag = 'scoped memory for tpu_custom_call.1']
    #allocation5 [shape = 's32[2]{0}', space=sflag, size = 0x8, scoped, tag = 'scoped memory for tpu_custom_call.1']
    #allocation6 [shape = 'u8[131072]{0}', space=vmem, size = 0x20000, scoped, tag = 'input window, operand 4, single buffered']
    #allocation7 [shape = 's32[1]{0}', space=sflag, size = 0x4, scoped, tag = 'scoped memory for tpu_custom_call.1']
    #allocation8 [shape = 'u8[65536]{0}', space=vmem, size = 0x10000, scoped, tag = 'input window, operand 5, single buffered']
    #allocation9 [shape = 'u8[65536]{0}', space=vmem, size = 0x10000, scoped, tag = 'input window, operand 6, single buffered']
    #allocation10 [shape = 's32[1]{0}', space=sflag, size = 0x4, scoped, tag = 'scoped memory for tpu_custom_call.1']
    #allocation11 [shape = 'u8[16384]{0}', space=vmem, size = 0x4000, scoped, tag = 'output window, operand 0']
    %13 = vsyncpa [#allocation4], 0
    %14 = vsyncpa [#allocation7], 0
    %15 = vsyncpa [#allocation10], 0
    %16 = vsyncpa [#allocation5], 0
    %s17 = scalar_lea.sflag [#allocation5], 1
    %18 = vsyncpa %s17, 0
    loop: start=0, step=1, limit=4
    $region2: #{tpu_custom_call.1} parent=1 // loop_pre_header
      _
    $region3: #{tpu_custom_call.1} parent=1 // loop_header
      %s20 = sphi 0, %s24
      %p21 = scmp.ge.s32.totalorder %s20, 4
      %s30 = sphi 0, %s32
      %s33 = sphi 0, %s30
      %s34 = sphi 0, %s33
      %s50 = sphi 0, %s34
      %s56 = sphi 0, %s58
      %s59 = sphi 0, %s56
      %s60 = sphi 0, %s59
      %s76 = sphi 0, %s60
      %s80 = sphi 0, %s80
      %s82 = sphi 0, %s80
      %s83 = sphi 0, %s82
      %s97 = sphi 0, %s83
      %s101 = sphi 0, %s101
      %s103 = sphi 0, %s101
      %s104 = sphi 0, %s103
      %s118 = sphi 0, %s104
      %s122 = sphi 0, %s122
      %s124 = sphi 0, %s122
      %s125 = sphi 0, %s124
      %s139 = sphi 0, %s125
      %s143 = sphi 0, %s143
      %s145 = sphi 0, %s143
      %s146 = sphi 0, %s145
      %s160 = sphi 0, %s146
      %s164 = sphi 0, %s164
      %s166 = sphi 0, %s164
      %s167 = sphi 0, %s166
      %s181 = sphi 0, %s167
      %s185 = sphi 0, %s185
      %s187 = sphi 0, %s185
      %s188 = sphi 0, %s187
      %s202 = sphi 0, %s188
      %s208 = sphi 0, %s210
      %s211 = sphi 0, %s208
      %s212 = sphi 0, %s211
      %s228 = sphi 0, %s212
    $region4: #{tpu_custom_call.1} parent=1 // loop_header_branch
      %23 = sbr.rel (%p21) target = $region8
    $region5: #{tpu_custom_call.1} parent=1 // loop_body
      %s25 = ssub.s32 %s20, 1
      %s26 = ssub.s32 %s20, 2
      %s27 = sadd.s32 %s20, 1
      %s28 = ssub.s32 %s20, %s27
      %p29 = scmp.eq.s32.totalorder %s28, 0
      %s31 = sadd.s32 %s30, 1
      %s32 = scalar_select %p29, %s30, %s31
      %p35 = pneg %p29
      %p36 = scmp.eq.s32.totalorder %s20, 1
      %p37 = por %p35, %p36
      %p38 = scmp.ne.s32.totalorder %s30, %s33
      %p39 = scmp.eq.s32.totalorder %s20, 0
      %p40 = por %p38, %p39
      %p41 = scmp.ne.s32.totalorder %s30, %s33
      %p42 = scmp.eq.s32.totalorder %s25, 1
      %p43 = por %p41, %p42
      %p44 = scmp.ne.s32.totalorder %s33, %s34
      %p45 = scmp.eq.s32.totalorder %s25, 0
      %p46 = por %p44, %p45
      %p47 = scmp.ne.s32.totalorder %s33, %s34
      %p48 = scmp.eq.s32.totalorder %s26, 1
      %p49 = por %p47, %p48
      %p51 = scmp.ne.s32.totalorder %s34, %s50
      %p52 = scmp.eq.s32.totalorder %s26, 0
      %p53 = por %p51, %p52
      %s54 = ssub.s32 %s20, %s27
      %p55 = scmp.eq.s32.totalorder %s54, 0
      %s57 = sadd.s32 %s56, 1
      %s58 = scalar_select %p55, %s56, %s57
      %p61 = pneg %p55
      %p62 = scmp.eq.s32.totalorder %s20, 1
      %p63 = por %p61, %p62
      %p64 = scmp.ne.s32.totalorder %s56, %s59
      %p65 = scmp.eq.s32.totalorder %s20, 0
      %p66 = por %p64, %p65
      %p67 = scmp.ne.s32.totalorder %s56, %s59
      %p68 = scmp.eq.s32.totalorder %s25, 1
      %p69 = por %p67, %p68
      %p70 = scmp.ne.s32.totalorder %s59, %s60
      %p71 = scmp.eq.s32.totalorder %s25, 0
      %p72 = por %p70, %p71
      %p73 = scmp.ne.s32.totalorder %s59, %s60
      %p74 = scmp.eq.s32.totalorder %s26, 1
      %p75 = por %p73, %p74
      %p77 = scmp.ne.s32.totalorder %s60, %s76
      %p78 = scmp.eq.s32.totalorder %s26, 0
      %p79 = por %p77, %p78
      %s81 = sadd.s32 %s80, 1
      %p84 = scmp.eq.s32.totalorder %s20, 1
      %p85 = scmp.ne.s32.totalorder %s80, %s82
      %p86 = scmp.eq.s32.totalorder %s20, 0
      %p87 = por %p85, %p86
      %p88 = scmp.ne.s32.totalorder %s80, %s82
      %p89 = scmp.eq.s32.totalorder %s25, 1
      %p90 = por %p88, %p89
      %p91 = scmp.ne.s32.totalorder %s82, %s83
      %p92 = scmp.eq.s32.totalorder %s25, 0
      %p93 = por %p91, %p92
      %p94 = scmp.ne.s32.totalorder %s82, %s83
      %p95 = scmp.eq.s32.totalorder %s26, 1
      %p96 = por %p94, %p95
      %p98 = scmp.ne.s32.totalorder %s83, %s97
      %p99 = scmp.eq.s32.totalorder %s26, 0
      %p100 = por %p98, %p99
      %s102 = sadd.s32 %s101, 1
      %p105 = scmp.eq.s32.totalorder %s20, 1
      %p106 = scmp.ne.s32.totalorder %s101, %s103
      %p107 = scmp.eq.s32.totalorder %s20, 0
      %p108 = por %p106, %p107
      %p109 = scmp.ne.s32.totalorder %s101, %s103
      %p110 = scmp.eq.s32.totalorder %s25, 1
      %p111 = por %p109, %p110
      %p112 = scmp.ne.s32.totalorder %s103, %s104
      %p113 = scmp.eq.s32.totalorder %s25, 0
      %p114 = por %p112, %p113
      %p115 = scmp.ne.s32.totalorder %s103, %s104
      %p116 = scmp.eq.s32.totalorder %s26, 1
      %p117 = por %p115, %p116
      %p119 = scmp.ne.s32.totalorder %s104, %s118
      %p120 = scmp.eq.s32.totalorder %s26, 0
      %p121 = por %p119, %p120
      %s123 = sadd.s32 %s122, 1
      %p126 = scmp.eq.s32.totalorder %s20, 1
      %p127 = scmp.ne.s32.totalorder %s122, %s124
      %p128 = scmp.eq.s32.totalorder %s20, 0
      %p129 = por %p127, %p128
      %p130 = scmp.ne.s32.totalorder %s122, %s124
      %p131 = scmp.eq.s32.totalorder %s25, 1
      %p132 = por %p130, %p131
      %p133 = scmp.ne.s32.totalorder %s124, %s125
      %p134 = scmp.eq.s32.totalorder %s25, 0
      %p135 = por %p133, %p134
      %p136 = scmp.ne.s32.totalorder %s124, %s125
      %p137 = scmp.eq.s32.totalorder %s26, 1
      %p138 = por %p136, %p137
      %p140 = scmp.ne.s32.totalorder %s125, %s139
      %p141 = scmp.eq.s32.totalorder %s26, 0
      %p142 = por %p140, %p141
      %s144 = sadd.s32 %s143, 1
      %p147 = scmp.eq.s32.totalorder %s20, 1
      %p148 = scmp.ne.s32.totalorder %s143, %s145
      %p149 = scmp.eq.s32.totalorder %s20, 0
      %p150 = por %p148, %p149
      %p151 = scmp.ne.s32.totalorder %s143, %s145
      %p152 = scmp.eq.s32.totalorder %s25, 1
      %p153 = por %p151, %p152
      %p154 = scmp.ne.s32.totalorder %s145, %s146
      %p155 = scmp.eq.s32.totalorder %s25, 0
      %p156 = por %p154, %p155
      %p157 = scmp.ne.s32.totalorder %s145, %s146
      %p158 = scmp.eq.s32.totalorder %s26, 1
      %p159 = por %p157, %p158
      %p161 = scmp.ne.s32.totalorder %s146, %s160
      %p162 = scmp.eq.s32.totalorder %s26, 0
      %p163 = por %p161, %p162
      %s165 = sadd.s32 %s164, 1
      %p168 = scmp.eq.s32.totalorder %s20, 1
      %p169 = scmp.ne.s32.totalorder %s164, %s166
      %p170 = scmp.eq.s32.totalorder %s20, 0
      %p171 = por %p169, %p170
      %p172 = scmp.ne.s32.totalorder %s164, %s166
      %p173 = scmp.eq.s32.totalorder %s25, 1
      %p174 = por %p172, %p173
      %p175 = scmp.ne.s32.totalorder %s166, %s167
      %p176 = scmp.eq.s32.totalorder %s25, 0
      %p177 = por %p175, %p176
      %p178 = scmp.ne.s32.totalorder %s166, %s167
      %p179 = scmp.eq.s32.totalorder %s26, 1
      %p180 = por %p178, %p179
      %p182 = scmp.ne.s32.totalorder %s167, %s181
      %p183 = scmp.eq.s32.totalorder %s26, 0
      %p184 = por %p182, %p183
      %s186 = sadd.s32 %s185, 1
      %p189 = scmp.eq.s32.totalorder %s20, 1
      %p190 = scmp.ne.s32.totalorder %s185, %s187
      %p191 = scmp.eq.s32.totalorder %s20, 0
      %p192 = por %p190, %p191
      %p193 = scmp.ne.s32.totalorder %s185, %s187
      %p194 = scmp.eq.s32.totalorder %s25, 1
      %p195 = por %p193, %p194
      %p196 = scmp.ne.s32.totalorder %s187, %s188
      %p197 = scmp.eq.s32.totalorder %s25, 0
      %p198 = por %p196, %p197
      %p199 = scmp.ne.s32.totalorder %s187, %s188
      %p200 = scmp.eq.s32.totalorder %s26, 1
      %p201 = por %p199, %p200
      %p203 = scmp.ne.s32.totalorder %s188, %s202
      %p204 = scmp.eq.s32.totalorder %s26, 0
      %p205 = por %p203, %p204
      %s206 = ssub.s32 %s20, %s27
      %p207 = scmp.eq.s32.totalorder %s206, 0
      %s209 = sadd.s32 %s208, 1
      %s210 = scalar_select %p207, %s208, %s209
      %p213 = pneg %p207
      %p214 = scmp.eq.s32.totalorder %s20, 1
      %p215 = por %p213, %p214
      %p216 = scmp.ne.s32.totalorder %s208, %s211
      %p217 = scmp.eq.s32.totalorder %s20, 0
      %p218 = por %p216, %p217
      %p219 = scmp.ne.s32.totalorder %s208, %s211
      %p220 = scmp.eq.s32.totalorder %s25, 1
      %p221 = por %p219, %p220
      %p222 = scmp.ne.s32.totalorder %s211, %s212
      %p223 = scmp.eq.s32.totalorder %s25, 0
      %p224 = por %p222, %p223
      %p225 = scmp.ne.s32.totalorder %s211, %s212
      %p226 = scmp.eq.s32.totalorder %s26, 1
      %p227 = por %p225, %p226
      %p229 = scmp.ne.s32.totalorder %s212, %s228
      %p230 = scmp.eq.s32.totalorder %s26, 0
      %p231 = por %p229, %p230
      %p232 = scmp.le.s32.totalorder 1, %s20
      %p233 = scmp.lt.s32.totalorder %s20, 3
      %p234 = pnand %p232, %p233
      %p235 = pneg %p234
      // Predicated region
      $region9: #{tpu_custom_call.1} parent=5 // pred_check
        _
      $region10: #{tpu_custom_call.1} parent=5 // pred_check_branch
        %237 = sbr.rel (%p234) target = $region12
      $region11: #{tpu_custom_call.1} parent=5 // pred_region
        %s238 = ssub.s32 %s20, 1
        // Predicated region
        $region13: #{tpu_custom_call.1} parent=11 // pred_check
          %p239 = pneg %p93
        $region14: #{tpu_custom_call.1} parent=11 // pred_check_branch
          %241 = sbr.rel (%p239) target = $region16
        $region15: #{tpu_custom_call.1} parent=11 // pred_region
          %243 = vsyncadd [#allocation4], 0
          %s244 = sshll.u32 %s2, 4
          %s245 = int_to_ptr.hbm [resolvable:$true] %s244
          %s246 = sshll.u32 [#allocation3], 4
          %s247 = int_to_ptr.vmem [resolvable:$true] %s246
          %252 = dma.hbm_to_vmem [thread:$0]  %s245, 6144, %s247, [#allocation4], 384, 384, 24
        $region16: #{tpu_custom_call.1} parent=11 // pred_fallthru
          _
        // Predicated region
        $region17: #{tpu_custom_call.1} parent=11 // pred_check
          %p253 = pneg %p114
        $region18: #{tpu_custom_call.1} parent=11 // pred_check_branch
          %255 = sbr.rel (%p253) target = $region20
        $region19: #{tpu_custom_call.1} parent=11 // pred_region
          _
        $region20: #{tpu_custom_call.1} parent=11 // pred_fallthru
          _
        // Predicated region
        $region21: #{tpu_custom_call.1} parent=11 // pred_check
          %p256 = pneg %p135
        $region22: #{tpu_custom_call.1} parent=11 // pred_check_branch
          %258 = sbr.rel (%p256) target = $region24
        $region23: #{tpu_custom_call.1} parent=11 // pred_region
          %260 = vsyncadd [#allocation7], 0
          %s261 = sshll.u32 %s4, 4
          %s262 = int_to_ptr.hbm [resolvable:$true] %s261
          %s263 = sshll.u32 [#allocation6], 4
          %s264 = int_to_ptr.vmem [resolvable:$true] %s263
          %269 = dma.hbm_to_vmem [thread:$0]  %s262, 4096, %s264, [#allocation7], 256, 256, 16
        $region24: #{tpu_custom_call.1} parent=11 // pred_fallthru
          _
        // Predicated region
        $region25: #{tpu_custom_call.1} parent=11 // pred_check
          %p270 = pneg %p156
        $region26: #{tpu_custom_call.1} parent=11 // pred_check_branch
          %272 = sbr.rel (%p270) target = $region28
        $region27: #{tpu_custom_call.1} parent=11 // pred_region
          %274 = vsyncadd [#allocation7], 0
          %s275 = sshll.u32 %s5, 4
          %s276 = int_to_ptr.hbm [resolvable:$true] %s275
          %s277 = sshll.u32 [#allocation8], 4
          %s278 = int_to_ptr.vmem [resolvable:$true] %s277
          %283 = dma.hbm_to_vmem [thread:$0]  %s276, 2048, %s278, [#allocation7], 128, 128, 8
        $region28: #{tpu_custom_call.1} parent=11 // pred_fallthru
          _
        // Predicated region
        $region29: #{tpu_custom_call.1} parent=11 // pred_check
          %p284 = pneg %p177
        $region30: #{tpu_custom_call.1} parent=11 // pred_check_branch
          %286 = sbr.rel (%p284) target = $region32
        $region31: #{tpu_custom_call.1} parent=11 // pred_region
          %288 = vsyncadd [#allocation10], 0
          %s289 = sshll.u32 %s6, 4
          %s290 = int_to_ptr.hbm [resolvable:$true] %s289
          %s291 = sshll.u32 [#allocation9], 4
          %s292 = int_to_ptr.vmem [resolvable:$true] %s291
          %297 = dma.hbm_to_vmem [thread:$0]  %s290, 2048, %s292, [#allocation10], 128, 128, 8
        $region32: #{tpu_custom_call.1} parent=11 // pred_fallthru
          _
        // Predicated region
        $region33: #{tpu_custom_call.1} parent=11 // pred_check
          %p298 = pneg %p198
        $region34: #{tpu_custom_call.1} parent=11 // pred_check_branch
          %300 = sbr.rel (%p298) target = $region36
        $region35: #{tpu_custom_call.1} parent=11 // pred_region
          _
        $region36: #{tpu_custom_call.1} parent=11 // pred_fallthru
          _
      $region12: #{tpu_custom_call.1} parent=5 // pred_fallthru
        _
      %p301 = scmp.lt.s32.totalorder %s20, 2
      // Predicated region
      $region37: #{tpu_custom_call.1} parent=5 // pred_check
        %p302 = pneg %p301
      $region38: #{tpu_custom_call.1} parent=5 // pred_check_branch
        %304 = sbr.rel (%p302) target = $region40
      $region39: #{tpu_custom_call.1} parent=5 // pred_region
        // Predicated region
        $region41: #{tpu_custom_call.1} parent=39 // pred_check
          %p305 = pneg %p40
        $region42: #{tpu_custom_call.1} parent=39 // pred_check_branch
          %307 = sbr.rel (%p305) target = $region44
        $region43: #{tpu_custom_call.1} parent=39 // pred_region
          %s308 = smul.u32 8, %s20
          %p309 = scmp.lt.s32.totalorder %s308, 15
          %s310 = scalar_select %p309, %s308, 15
          %s311 = smul.addr %s310, 8
          %s312 = scalar_lea.vmem %s0, %s311
          %s313 = smul.u32 8, %s20
        $region44: #{tpu_custom_call.1} parent=39 // pred_fallthru
          _
        // Predicated region
        $region45: #{tpu_custom_call.1} parent=39 // pred_check
          %p314 = pneg %p66
        $region46: #{tpu_custom_call.1} parent=39 // pred_check_branch
          %316 = sbr.rel (%p314) target = $region48
        $region47: #{tpu_custom_call.1} parent=39 // pred_region
          %s317 = smul.u32 8, %s20
          %p318 = scmp.lt.s32.totalorder %s317, 15
          %s319 = scalar_select %p318, %s317, 15
          %s320 = smul.addr %s319, 8
          %s321 = scalar_lea.vmem %s1, %s320
          %s322 = smul.u32 8, %s20
        $region48: #{tpu_custom_call.1} parent=39 // pred_fallthru
          _
      $region40: #{tpu_custom_call.1} parent=5 // pred_fallthru
        _
      %p323 = scmp.le.s32.totalorder 1, %s20
      %p324 = scmp.lt.s32.totalorder %s20, 3
      %p325 = pnand %p323, %p324
      %p326 = pneg %p325
      // Predicated region
      $region49: #{tpu_custom_call.1} parent=5 // pred_check
        _
      $region50: #{tpu_custom_call.1} parent=5 // pred_check_branch
        %328 = sbr.rel (%p325) target = $region52
      $region51: #{tpu_custom_call.1} parent=5 // pred_region
        %s329 = ssub.s32 %s20, 1
        // Predicated region
        $region53: #{tpu_custom_call.1} parent=51 // pred_check
          %p330 = pneg %p93
        $region54: #{tpu_custom_call.1} parent=51 // pred_check_branch
          %332 = sbr.rel (%p330) target = $region56
        $region55: #{tpu_custom_call.1} parent=51 // pred_region
          %334 = dma.done [#allocation4], 6144
        $region56: #{tpu_custom_call.1} parent=51 // pred_fallthru
          _
        // Predicated region
        $region57: #{tpu_custom_call.1} parent=51 // pred_check
          %p335 = pneg %p135
        $region58: #{tpu_custom_call.1} parent=51 // pred_check_branch
          %337 = sbr.rel (%p335) target = $region60
        $region59: #{tpu_custom_call.1} parent=51 // pred_region
          %339 = dma.done [#allocation7], 4096
        $region60: #{tpu_custom_call.1} parent=51 // pred_fallthru
          _
        // Predicated region
        $region61: #{tpu_custom_call.1} parent=51 // pred_check
          %p340 = pneg %p156
        $region62: #{tpu_custom_call.1} parent=51 // pred_check_branch
          %342 = sbr.rel (%p340) target = $region64
        $region63: #{tpu_custom_call.1} parent=51 // pred_region
          %344 = dma.done [#allocation7], 2048
        $region64: #{tpu_custom_call.1} parent=51 // pred_fallthru
          _
        // Predicated region
        $region65: #{tpu_custom_call.1} parent=51 // pred_check
          %p345 = pneg %p177
        $region66: #{tpu_custom_call.1} parent=51 // pred_check_branch
          %347 = sbr.rel (%p345) target = $region68
        $region67: #{tpu_custom_call.1} parent=51 // pred_region
          %349 = dma.done [#allocation10], 2048
        $region68: #{tpu_custom_call.1} parent=51 // pred_fallthru
          _
        %s350 = smul.u32 8, %s25
        %p351 = scmp.lt.s32.totalorder %s350, 15
        %s352 = scalar_select %p351, %s350, 15
        %s353 = smul.addr %s352, 8
        %s354 = scalar_lea.vmem %s0, %s353
        %p355 = pneg %p46
        %p356 = pneg %p43
        %s357 = smul.u32 8, %s25
        %p358 = scmp.lt.s32.totalorder %s357, 15
        %s359 = scalar_select %p358, %s357, 15
        %s360 = smul.addr %s359, 8
        %s361 = scalar_lea.vmem %s1, %s360
        %p362 = pneg %p72
        %p363 = pneg %p69
        %p364 = pneg %p93
        %p365 = pneg %p90
        %p366 = pneg %p114
        %p367 = pneg %p111
        %p368 = pneg %p135
        %p369 = pneg %p132
        %p370 = pneg %p156
        %p371 = pneg %p153
        %p372 = pneg %p177
        %p373 = pneg %p174
        %p374 = pneg %p198
        %p375 = pneg %p195
        %p376 = pneg %p224
        %p377 = pneg %p221
        %s378 = sand.u32 %s211, 1
        %s379 = scalar_lea.sflag [#allocation5], %s378
        %s380 = sand.u32 %s211, 1
        %s381 = smul.addr %s380, 16
        %s382 = scalar_lea.vmem [#allocation11], %s381
        %s383 = smul.u32 8, %s25
        %p384 = scmp.lt.s32.totalorder %s383, 15
        %s385 = scalar_select %p384, %s383, 15
        %s386 = smul.addr %s385, 8
        %s387 = scalar_lea.vmem %s0, %s386
        %s388 = smul.u32 8, %s25
        %s389 = smul.u32 8, %s25
        %p390 = scmp.lt.s32.totalorder %s389, 15
        %s391 = scalar_select %p390, %s389, 15
        %s392 = smul.addr %s391, 8
        %s393 = scalar_lea.vmem %s1, %s392
        %s394 = smul.u32 8, %s25
        %v395 = vld [vmem:[%s387] sm:$0xff]
        %v396 = vld [vmem:[%s387 + $0x8] sm:$0xff]
        %v397 = vld [vmem:[%s387 + $0x10] sm:$0xff]
        %v398 = vld [vmem:[%s387 + $0x18] sm:$0xff]
        %v399 = vld [vmem:[%s387 + $0x20] sm:$0xff]
        %v400 = vld [vmem:[%s387 + $0x28] sm:$0xff]
        %v401 = vld [vmem:[%s387 + $0x30] sm:$0xff]
        %v402 = vld [vmem:[%s387 + $0x38] sm:$0xff]
        %v403 = vld [vmem:[#allocation3] sm:$0xff]
        %v404 = vld [vmem:[#allocation3 + $0x8] sm:$0xff]
        %v405 = vld [vmem:[#allocation3 + $0x10] sm:$0xff]
        %v406 = vld [vmem:[#allocation3 + $0x18] sm:$0xff]
        %v407 = vld [vmem:[#allocation3 + $0x20] sm:$0xff]
        %v408 = vld [vmem:[#allocation3 + $0x28] sm:$0xff]
        %v409 = vld [vmem:[#allocation3 + $0x30] sm:$0xff]
        %v410 = vld [vmem:[#allocation3 + $0x38] sm:$0xff]
        %v411 = vld [vmem:[#allocation3 + $0x40] sm:$0xff]
        %v412 = vld [vmem:[#allocation3 + $0x48] sm:$0xff]
        %v413 = vld [vmem:[#allocation3 + $0x50] sm:$0xff]
        %v414 = vld [vmem:[#allocation3 + $0x58] sm:$0xff]
        %v415 = vld [vmem:[#allocation3 + $0x60] sm:$0xff]
        %v416 = vld [vmem:[#allocation3 + $0x68] sm:$0xff]
        %v417 = vld [vmem:[#allocation3 + $0x70] sm:$0xff]
        %v418 = vld [vmem:[#allocation3 + $0x78] sm:$0xff]
        %v419 = vld [vmem:[#allocation3 + $0x80] sm:$0xff]
        %v420 = vld [vmem:[#allocation3 + $0x88] sm:$0xff]
        %v421 = vld [vmem:[#allocation3 + $0x90] sm:$0xff]
        %v422 = vld [vmem:[#allocation3 + $0x98] sm:$0xff]
        %v423 = vld [vmem:[#allocation3 + $0xa0] sm:$0xff]
        %v424 = vld [vmem:[#allocation3 + $0xa8] sm:$0xff]
        %v425 = vld [vmem:[#allocation3 + $0xb0] sm:$0xff]
        %v426 = vld [vmem:[#allocation3 + $0xb8] sm:$0xff]
        %v427 = vld [vmem:[#allocation3 + $0xc0] sm:$0xff]
        %v428 = vld [vmem:[#allocation3 + $0xc8] sm:$0xff]
        %v429 = vld [vmem:[#allocation3 + $0xd0] sm:$0xff]
        %v430 = vld [vmem:[#allocation3 + $0xd8] sm:$0xff]
        %v431 = vld [vmem:[#allocation3 + $0xe0] sm:$0xff]
        %v432 = vld [vmem:[#allocation3 + $0xe8] sm:$0xff]
        %v433 = vld [vmem:[#allocation3 + $0xf0] sm:$0xff]
        %v434 = vld [vmem:[#allocation3 + $0xf8] sm:$0xff]
        %v435 = vld [vmem:[#allocation3 + $0x100] sm:$0xff]
        %v436 = vld [vmem:[#allocation3 + $0x108] sm:$0xff]
        %v437 = vld [vmem:[#allocation3 + $0x110] sm:$0xff]
        %v438 = vld [vmem:[#allocation3 + $0x118] sm:$0xff]
        %v439 = vld [vmem:[#allocation3 + $0x120] sm:$0xff]
        %v440 = vld [vmem:[#allocation3 + $0x128] sm:$0xff]
        %v441 = vld [vmem:[#allocation3 + $0x130] sm:$0xff]
        %v442 = vld [vmem:[#allocation3 + $0x138] sm:$0xff]
        %v443 = vld [vmem:[#allocation3 + $0x140] sm:$0xff]
        %v444 = vld [vmem:[#allocation3 + $0x148] sm:$0xff]
        %v445 = vld [vmem:[#allocation3 + $0x150] sm:$0xff]
        %v446 = vld [vmem:[#allocation3 + $0x158] sm:$0xff]
        %v447 = vld [vmem:[#allocation3 + $0x160] sm:$0xff]
        %v448 = vld [vmem:[#allocation3 + $0x168] sm:$0xff]
        %v449 = vld [vmem:[#allocation3 + $0x170] sm:$0xff]
        %v450 = vld [vmem:[#allocation3 + $0x178] sm:$0xff]
        %v451 = vld [vmem:[%s3] sm:$0x7]
        %v453 = vperm.slane %v451, 0
        %v454 = vperm.slane %v451, 1
        %v455 = vperm.slane %v451, 2
        %459 = vmatpush.msra.mxu0 %v448
        %460 = vmatpush.msra.mxu0 %v445
        %461 = vmatpush.msra.mxu0 %v442
        %462 = vmatpush.msra.mxu0 %v439
        %463 = vmatpush.msra.mxu0 %v436
        %464 = vmatpush.msra.mxu0 %v433
        %465 = vmatpush.msra.mxu0 %v430
        %466 = vmatpush.msra.mxu0 %v427
        %467 = vmatpush.msra.mxu0 %v424
        %468 = vmatpush.msra.mxu0 %v421
        %469 = vmatpush.msra.mxu0 %v418
        %470 = vmatpush.msra.mxu0 %v415
        %471 = vmatpush.msra.mxu0 %v412
        %472 = vmatpush.msra.mxu0 %v409
        %473 = vmatpush.msra.mxu0 %v406
        %474 = vmatpush.msra.mxu0 %v403
        %475 = vmatmul.f32.gmra.mxu0 %v395
        %v476 = vpop.f32.mrf.mxu0
        %v477 = vadd.f32 %v453, %v476
        %478 = vmatmul.f32.gmra.mxu0 %v396
        %v479 = vpop.f32.mrf.mxu0
        %v480 = vadd.f32 %v453, %v479
        %481 = vmatmul.f32.gmra.mxu0 %v397
        %v482 = vpop.f32.mrf.mxu0
        %v483 = vadd.f32 %v453, %v482
        %484 = vmatmul.f32.gmra.mxu0 %v398
        %v485 = vpop.f32.mrf.mxu0
        %v486 = vadd.f32 %v453, %v485
        %487 = vmatmul.f32.gmra.mxu0 %v399
        %v488 = vpop.f32.mrf.mxu0
        %v489 = vadd.f32 %v453, %v488
        %490 = vmatmul.f32.gmra.mxu0 %v400
        %v491 = vpop.f32.mrf.mxu0
        %v492 = vadd.f32 %v453, %v491
        %493 = vmatmul.f32.gmra.mxu0 %v401
        %v494 = vpop.f32.mrf.mxu0
        %v495 = vadd.f32 %v453, %v494
        %496 = vmatmul.f32.gmra.mxu0 %v402
        %v497 = vpop.f32.mrf.mxu0
        %v498 = vadd.f32 %v453, %v497
        %499 = vdwg.mxu0
        %500 = vmatpush.msra.mxu0 %v449
        %501 = vmatpush.msra.mxu0 %v446
        %502 = vmatpush.msra.mxu0 %v443
        %503 = vmatpush.msra.mxu0 %v440
        %504 = vmatpush.msra.mxu0 %v437
        %505 = vmatpush.msra.mxu0 %v434
        %506 = vmatpush.msra.mxu0 %v431
        %507 = vmatpush.msra.mxu0 %v428
        %508 = vmatpush.msra.mxu0 %v425
        %509 = vmatpush.msra.mxu0 %v422
        %510 = vmatpush.msra.mxu0 %v419
        %511 = vmatpush.msra.mxu0 %v416
        %512 = vmatpush.msra.mxu0 %v413
        %513 = vmatpush.msra.mxu0 %v410
        %514 = vmatpush.msra.mxu0 %v407
        %515 = vmatpush.msra.mxu0 %v404
        %516 = vmatmul.f32.gmra.mxu0 %v395
        %v517 = vpop.f32.mrf.mxu0
        %v518 = vadd.f32 %v454, %v517
        %519 = vmatmul.f32.gmra.mxu0 %v396
        %v520 = vpop.f32.mrf.mxu0
        %v521 = vadd.f32 %v454, %v520
        %522 = vmatmul.f32.gmra.mxu0 %v397
        %v523 = vpop.f32.mrf.mxu0
        %v524 = vadd.f32 %v454, %v523
        %525 = vmatmul.f32.gmra.mxu0 %v398
        %v526 = vpop.f32.mrf.mxu0
        %v527 = vadd.f32 %v454, %v526
        %528 = vmatmul.f32.gmra.mxu0 %v399
        %v529 = vpop.f32.mrf.mxu0
        %v530 = vadd.f32 %v454, %v529
        %531 = vmatmul.f32.gmra.mxu0 %v400
        %v532 = vpop.f32.mrf.mxu0
        %v533 = vadd.f32 %v454, %v532
        %534 = vmatmul.f32.gmra.mxu0 %v401
        %v535 = vpop.f32.mrf.mxu0
        %v536 = vadd.f32 %v454, %v535
        %537 = vmatmul.f32.gmra.mxu0 %v402
        %v538 = vpop.f32.mrf.mxu0
        %v539 = vadd.f32 %v454, %v538
        %540 = vdwg.mxu0
        %541 = vmatpush.msra.mxu0 %v450
        %542 = vmatpush.msra.mxu0 %v447
        %543 = vmatpush.msra.mxu0 %v444
        %544 = vmatpush.msra.mxu0 %v441
        %545 = vmatpush.msra.mxu0 %v438
        %546 = vmatpush.msra.mxu0 %v435
        %547 = vmatpush.msra.mxu0 %v432
        %548 = vmatpush.msra.mxu0 %v429
        %549 = vmatpush.msra.mxu0 %v426
        %550 = vmatpush.msra.mxu0 %v423
        %551 = vmatpush.msra.mxu0 %v420
        %552 = vmatpush.msra.mxu0 %v417
        %553 = vmatpush.msra.mxu0 %v414
        %554 = vmatpush.msra.mxu0 %v411
        %555 = vmatpush.msra.mxu0 %v408
        %556 = vmatpush.msra.mxu0 %v405
        %557 = vmatmul.f32.gmra.mxu0 %v395
        %v558 = vpop.f32.mrf.mxu0
        %v559 = vadd.f32 %v455, %v558
        %560 = vmatmul.f32.gmra.mxu0 %v396
        %v561 = vpop.f32.mrf.mxu0
        %v562 = vadd.f32 %v455, %v561
        %563 = vmatmul.f32.gmra.mxu0 %v397
        %v564 = vpop.f32.mrf.mxu0
        %v565 = vadd.f32 %v455, %v564
        %566 = vmatmul.f32.gmra.mxu0 %v398
        %v567 = vpop.f32.mrf.mxu0
        %v568 = vadd.f32 %v455, %v567
        %569 = vmatmul.f32.gmra.mxu0 %v399
        %v570 = vpop.f32.mrf.mxu0
        %v571 = vadd.f32 %v455, %v570
        %572 = vmatmul.f32.gmra.mxu0 %v400
        %v573 = vpop.f32.mrf.mxu0
        %v574 = vadd.f32 %v455, %v573
        %575 = vmatmul.f32.gmra.mxu0 %v401
        %v576 = vpop.f32.mrf.mxu0
        %v577 = vadd.f32 %v455, %v576
        %578 = vmatmul.f32.gmra.mxu0 %v402
        %v579 = vpop.f32.mrf.mxu0
        %v580 = vadd.f32 %v455, %v579
        %581 = vdwg.mxu0
        %582 = vst [vmem:[#allocation2] sm:$0xff] %v477
        %583 = vst [vmem:[#allocation2 + $0x8] sm:$0xff] %v518
        %584 = vst [vmem:[#allocation2 + $0x10] sm:$0xff] %v559
        %585 = vst [vmem:[#allocation2 + $0x18] sm:$0xff] %v480
        %586 = vst [vmem:[#allocation2 + $0x20] sm:$0xff] %v521
        %587 = vst [vmem:[#allocation2 + $0x28] sm:$0xff] %v562
        %588 = vst [vmem:[#allocation2 + $0x30] sm:$0xff] %v483
        %589 = vst [vmem:[#allocation2 + $0x38] sm:$0xff] %v524
        %590 = vst [vmem:[#allocation2 + $0x40] sm:$0xff] %v565
        %591 = vst [vmem:[#allocation2 + $0x48] sm:$0xff] %v486
        %592 = vst [vmem:[#allocation2 + $0x50] sm:$0xff] %v527
        %593 = vst [vmem:[#allocation2 + $0x58] sm:$0xff] %v568
        %594 = vst [vmem:[#allocation2 + $0x60] sm:$0xff] %v489
        %595 = vst [vmem:[#allocation2 + $0x68] sm:$0xff] %v530
        %596 = vst [vmem:[#allocation2 + $0x70] sm:$0xff] %v571
        %597 = vst [vmem:[#allocation2 + $0x78] sm:$0xff] %v492
        %598 = vst [vmem:[#allocation2 + $0x80] sm:$0xff] %v533
        %599 = vst [vmem:[#allocation2 + $0x88] sm:$0xff] %v574
        %600 = vst [vmem:[#allocation2 + $0x90] sm:$0xff] %v495
        %601 = vst [vmem:[#allocation2 + $0x98] sm:$0xff] %v536
        %602 = vst [vmem:[#allocation2 + $0xa0] sm:$0xff] %v577
        %603 = vst [vmem:[#allocation2 + $0xa8] sm:$0xff] %v498
        %604 = vst [vmem:[#allocation2 + $0xb0] sm:$0xff] %v539
        %605 = vst [vmem:[#allocation2 + $0xb8] sm:$0xff] %v580
        %v606 = vld [vmem:[#allocation6] sm:$0xff]
        %v607 = vld [vmem:[#allocation6 + $0x8] sm:$0xff]
        %v608 = vld [vmem:[#allocation6 + $0x10] sm:$0xff]
        %v609 = vld [vmem:[#allocation6 + $0x18] sm:$0xff]
        %v610 = vld [vmem:[#allocation6 + $0x20] sm:$0xff]
        %v611 = vld [vmem:[#allocation6 + $0x28] sm:$0xff]
        %v612 = vld [vmem:[#allocation6 + $0x30] sm:$0xff]
        %v613 = vld [vmem:[#allocation6 + $0x38] sm:$0xff]
        %v614 = vld [vmem:[#allocation6 + $0x40] sm:$0xff]
        %v615 = vld [vmem:[#allocation6 + $0x48] sm:$0xff]
        %v616 = vld [vmem:[#allocation6 + $0x50] sm:$0xff]
        %v617 = vld [vmem:[#allocation6 + $0x58] sm:$0xff]
        %v618 = vld [vmem:[#allocation6 + $0x60] sm:$0xff]
        %v619 = vld [vmem:[#allocation6 + $0x68] sm:$0xff]
        %v620 = vld [vmem:[#allocation6 + $0x70] sm:$0xff]
        %v621 = vld [vmem:[#allocation6 + $0x78] sm:$0xff]
        %v622 = vld [vmem:[#allocation6 + $0x80] sm:$0xff]
        %v623 = vld [vmem:[#allocation6 + $0x88] sm:$0xff]
        %v624 = vld [vmem:[#allocation6 + $0x90] sm:$0xff]
        %v625 = vld [vmem:[#allocation6 + $0x98] sm:$0xff]
        %v626 = vld [vmem:[#allocation6 + $0xa0] sm:$0xff]
        %v627 = vld [vmem:[#allocation6 + $0xa8] sm:$0xff]
        %v628 = vld [vmem:[#allocation6 + $0xb0] sm:$0xff]
        %v629 = vld [vmem:[#allocation6 + $0xb8] sm:$0xff]
        %v630 = vld [vmem:[#allocation6 + $0xc0] sm:$0xff]
        %v631 = vld [vmem:[#allocation6 + $0xc8] sm:$0xff]
        %v632 = vld [vmem:[#allocation6 + $0xd0] sm:$0xff]
        %v633 = vld [vmem:[#allocation6 + $0xd8] sm:$0xff]
        %v634 = vld [vmem:[#allocation6 + $0xe0] sm:$0xff]
        %v635 = vld [vmem:[#allocation6 + $0xe8] sm:$0xff]
        %v636 = vld [vmem:[#allocation6 + $0xf0] sm:$0xff]
        %v637 = vld [vmem:[#allocation6 + $0xf8] sm:$0xff]
        %v638 = vld [vmem:[#allocation8] sm:$0xff]
        %v639 = vld [vmem:[#allocation8 + $0x8] sm:$0xff]
        %v640 = vld [vmem:[#allocation8 + $0x10] sm:$0xff]
        %v641 = vld [vmem:[#allocation8 + $0x18] sm:$0xff]
        %v642 = vld [vmem:[#allocation8 + $0x20] sm:$0xff]
        %v643 = vld [vmem:[#allocation8 + $0x28] sm:$0xff]
        %v644 = vld [vmem:[#allocation8 + $0x30] sm:$0xff]
        %v645 = vld [vmem:[#allocation8 + $0x38] sm:$0xff]
        %v646 = vld [vmem:[#allocation8 + $0x40] sm:$0xff]
        %v647 = vld [vmem:[#allocation8 + $0x48] sm:$0xff]
        %v648 = vld [vmem:[#allocation8 + $0x50] sm:$0xff]
        %v649 = vld [vmem:[#allocation8 + $0x58] sm:$0xff]
        %v650 = vld [vmem:[#allocation8 + $0x60] sm:$0xff]
        %v651 = vld [vmem:[#allocation8 + $0x68] sm:$0xff]
        %v652 = vld [vmem:[#allocation8 + $0x70] sm:$0xff]
        %v653 = vld [vmem:[#allocation8 + $0x78] sm:$0xff]
        %v654 = vld [vmem:[#allocation2] ss:$8 sm:$0x7]
        %s655 = scalar_lea.vmem [#allocation2], 24
        %v656 = vld [vmem:[%s655] ss:$8 sm:$0x7]
        %s657 = scalar_lea.vmem [#allocation2], 48
        %v658 = vld [vmem:[%s657] ss:$8 sm:$0x7]
        %s659 = scalar_lea.vmem [#allocation2], 72
        %v660 = vld [vmem:[%s659] ss:$8 sm:$0x7]
        %s661 = scalar_lea.vmem [#allocation2], 96
        %v662 = vld [vmem:[%s661] ss:$8 sm:$0x7]
        %s663 = scalar_lea.vmem [#allocation2], 120
        %v664 = vld [vmem:[%s663] ss:$8 sm:$0x7]
        %s665 = scalar_lea.vmem [#allocation2], 144
        %v666 = vld [vmem:[%s665] ss:$8 sm:$0x7]
        %s667 = scalar_lea.vmem [#allocation2], 168
        %v668 = vld [vmem:[%s667] ss:$8 sm:$0x7]
        %v669 = vld [vmem:[%s393] sm:$0x1]
        %v670 = vld [vmem:[%s393 + $0x8] sm:$0x1]
        %v671 = vld [vmem:[%s393 + $0x10] sm:$0x1]
        %v672 = vld [vmem:[%s393 + $0x18] sm:$0x1]
        %v673 = vld [vmem:[%s393 + $0x20] sm:$0x1]
        %v674 = vld [vmem:[%s393 + $0x28] sm:$0x1]
        %v675 = vld [vmem:[%s393 + $0x30] sm:$0x1]
        %v676 = vld [vmem:[%s393 + $0x38] sm:$0x1]
        %677 = vmatpush.msra.mxu0 %v636
        %678 = vmatpush.msra.mxu0 %v634
        %679 = vmatpush.msra.mxu0 %v632
        %680 = vmatpush.msra.mxu0 %v630
        %681 = vmatpush.msra.mxu0 %v628
        %682 = vmatpush.msra.mxu0 %v626
        %683 = vmatpush.msra.mxu0 %v624
        %684 = vmatpush.msra.mxu0 %v622
        %685 = vmatpush.msra.mxu0 %v620
        %686 = vmatpush.msra.mxu0 %v618
        %687 = vmatpush.msra.mxu0 %v616
        %688 = vmatpush.msra.mxu0 %v614
        %689 = vmatpush.msra.mxu0 %v612
        %690 = vmatpush.msra.mxu0 %v610
        %691 = vmatpush.msra.mxu0 %v608
        %692 = vmatpush.msra.mxu0 %v606
        %693 = vmatmul.f32.gmra.mxu0 0.0
        %v694 = vpop.f32.mrf.mxu0
        %v695 = vadd.f32 0.0, %v694
        %696 = vdwg.mxu0
        %697 = vmatpush.msra.mxu0 %v637
        %698 = vmatpush.msra.mxu0 %v635
        %699 = vmatpush.msra.mxu0 %v633
        %700 = vmatpush.msra.mxu0 %v631
        %701 = vmatpush.msra.mxu0 %v629
        %702 = vmatpush.msra.mxu0 %v627
        %703 = vmatpush.msra.mxu0 %v625
        %704 = vmatpush.msra.mxu0 %v623
        %705 = vmatpush.msra.mxu0 %v621
        %706 = vmatpush.msra.mxu0 %v619
        %707 = vmatpush.msra.mxu0 %v617
        %708 = vmatpush.msra.mxu0 %v615
        %709 = vmatpush.msra.mxu0 %v613
        %710 = vmatpush.msra.mxu0 %v611
        %711 = vmatpush.msra.mxu0 %v609
        %712 = vmatpush.msra.mxu0 %v607
        %713 = vmatmul.f32.gmra.mxu0 0.0
        %v714 = vpop.f32.mrf.mxu0
        %v715 = vadd.f32 0.0, %v714
        %716 = vdwg.mxu0
        %v718 = vrot.slane %v695, 1
        %v719 = vrot.slane %v695, 2
        %v720 = vrot.slane %v695, 3
        %v721 = vrot.slane %v695, 4
        %v722 = vrot.slane %v695, 5
        %v723 = vrot.slane %v695, 6
        %v724 = vrot.slane %v695, 7
        %v732 = vadd.f32 %v654, %v695
        %v733 = vadd.f32 %v656, %v718
        %v734 = vadd.f32 %v658, %v719
        %v735 = vadd.f32 %v660, %v720
        %v736 = vadd.f32 %v662, %v721
        %v737 = vadd.f32 %v664, %v722
        %v738 = vadd.f32 %v666, %v723
        %v739 = vadd.f32 %v668, %v724
        %v740 = vxor.u32 %v732, 2147483648
        %v741 = vxor.u32 %v733, 2147483648
        %v742 = vxor.u32 %v734, 2147483648
        %v743 = vxor.u32 %v735, 2147483648
        %v744 = vxor.u32 %v736, 2147483648
        %v745 = vxor.u32 %v737, 2147483648
        %v746 = vxor.u32 %v738, 2147483648
        %v747 = vxor.u32 %v739, 2147483648
        %v748 = vmul.f32 %v740, 1.442695
        %v749 = vpow.pop %v748
        %v750 = vmul.f32 %v741, 1.442695
        %v751 = vpow.pop %v750
        %v752 = vmul.f32 %v742, 1.442695
        %v753 = vpow.pop %v752
        %v754 = vmul.f32 %v743, 1.442695
        %v755 = vpow.pop %v754
        %v756 = vmul.f32 %v744, 1.442695
        %v757 = vpow.pop %v756
        %v758 = vmul.f32 %v745, 1.442695
        %v759 = vpow.pop %v758
        %v760 = vmul.f32 %v746, 1.442695
        %v761 = vpow.pop %v760
        %v762 = vmul.f32 %v747, 1.442695
        %v763 = vpow.pop %v762
        %v764 = vadd.f32 %v749, 1.0
        %v765 = vadd.f32 %v751, 1.0
        %v766 = vadd.f32 %v753, 1.0
        %v767 = vadd.f32 %v755, 1.0
        %v768 = vadd.f32 %v757, 1.0
        %v769 = vadd.f32 %v759, 1.0
        %v770 = vadd.f32 %v761, 1.0
        %v771 = vadd.f32 %v763, 1.0
        %v772 = vrcp.pop %v764
        %v773 = vmul.f32 %v764, %v772
        %v774 = vsub.f32 1.0, %v773
        %v775 = vmul.f32 %v772, %v774
        %v776 = vadd.f32 %v772, %v775
        %vm777 = vweird.f32 %v764
        %vm778 = vweird.f32 %v772
        %vm779 = vmor %vm777, %vm778
        %v780 = vsel %vm779, %v772, %v776
        %v781 = vand.u32 2147483647, %v764
        %vm782 = vcmp.eq.f32.partialorder %v781, 8.507059e+37
        %v783 = vand.u32 %v764, 2147483648
        %v784 = vor.u32 1.1754944e-38, %v783
        %v785 = vsel %vm782, %v784, %v780
        %v786 = vmul.f32 1.0, %v785
        %v787 = vrcp.pop %v765
        %v788 = vmul.f32 %v765, %v787
        %v789 = vsub.f32 1.0, %v788
        %v790 = vmul.f32 %v787, %v789
        %v791 = vadd.f32 %v787, %v790
        %vm792 = vweird.f32 %v765
        %vm793 = vweird.f32 %v787
        %vm794 = vmor %vm792, %vm793
        %v795 = vsel %vm794, %v787, %v791
        %v796 = vand.u32 2147483647, %v765
        %vm797 = vcmp.eq.f32.partialorder %v796, 8.507059e+37
        %v798 = vand.u32 %v765, 2147483648
        %v799 = vor.u32 1.1754944e-38, %v798
        %v800 = vsel %vm797, %v799, %v795
        %v801 = vmul.f32 1.0, %v800
        %v802 = vrcp.pop %v766
        %v803 = vmul.f32 %v766, %v802
        %v804 = vsub.f32 1.0, %v803
        %v805 = vmul.f32 %v802, %v804
        %v806 = vadd.f32 %v802, %v805
        %vm807 = vweird.f32 %v766
        %vm808 = vweird.f32 %v802
        %vm809 = vmor %vm807, %vm808
        %v810 = vsel %vm809, %v802, %v806
        %v811 = vand.u32 2147483647, %v766
        %vm812 = vcmp.eq.f32.partialorder %v811, 8.507059e+37
        %v813 = vand.u32 %v766, 2147483648
        %v814 = vor.u32 1.1754944e-38, %v813
        %v815 = vsel %vm812, %v814, %v810
        %v816 = vmul.f32 1.0, %v815
        %v817 = vrcp.pop %v767
        %v818 = vmul.f32 %v767, %v817
        %v819 = vsub.f32 1.0, %v818
        %v820 = vmul.f32 %v817, %v819
        %v821 = vadd.f32 %v817, %v820
        %vm822 = vweird.f32 %v767
        %vm823 = vweird.f32 %v817
        %vm824 = vmor %vm822, %vm823
        %v825 = vsel %vm824, %v817, %v821
        %v826 = vand.u32 2147483647, %v767
        %vm827 = vcmp.eq.f32.partialorder %v826, 8.507059e+37
        %v828 = vand.u32 %v767, 2147483648
        %v829 = vor.u32 1.1754944e-38, %v828
        %v830 = vsel %vm827, %v829, %v825
        %v831 = vmul.f32 1.0, %v830
        %v832 = vrcp.pop %v768
        %v833 = vmul.f32 %v768, %v832
        %v834 = vsub.f32 1.0, %v833
        %v835 = vmul.f32 %v832, %v834
        %v836 = vadd.f32 %v832, %v835
        %vm837 = vweird.f32 %v768
        %vm838 = vweird.f32 %v832
        %vm839 = vmor %vm837, %vm838
        %v840 = vsel %vm839, %v832, %v836
        %v841 = vand.u32 2147483647, %v768
        %vm842 = vcmp.eq.f32.partialorder %v841, 8.507059e+37
        %v843 = vand.u32 %v768, 2147483648
        %v844 = vor.u32 1.1754944e-38, %v843
        %v845 = vsel %vm842, %v844, %v840
        %v846 = vmul.f32 1.0, %v845
        %v847 = vrcp.pop %v769
        %v848 = vmul.f32 %v769, %v847
        %v849 = vsub.f32 1.0, %v848
        %v850 = vmul.f32 %v847, %v849
        %v851 = vadd.f32 %v847, %v850
        %vm852 = vweird.f32 %v769
        %vm853 = vweird.f32 %v847
        %vm854 = vmor %vm852, %vm853
        %v855 = vsel %vm854, %v847, %v851
        %v856 = vand.u32 2147483647, %v769
        %vm857 = vcmp.eq.f32.partialorder %v856, 8.507059e+37
        %v858 = vand.u32 %v769, 2147483648
        %v859 = vor.u32 1.1754944e-38, %v858
        %v860 = vsel %vm857, %v859, %v855
        %v861 = vmul.f32 1.0, %v860
        %v862 = vrcp.pop %v770
        %v863 = vmul.f32 %v770, %v862
        %v864 = vsub.f32 1.0, %v863
        %v865 = vmul.f32 %v862, %v864
        %v866 = vadd.f32 %v862, %v865
        %vm867 = vweird.f32 %v770
        %vm868 = vweird.f32 %v862
        %vm869 = vmor %vm867, %vm868
        %v870 = vsel %vm869, %v862, %v866
        %v871 = vand.u32 2147483647, %v770
        %vm872 = vcmp.eq.f32.partialorder %v871, 8.507059e+37
        %v873 = vand.u32 %v770, 2147483648
        %v874 = vor.u32 1.1754944e-38, %v873
        %v875 = vsel %vm872, %v874, %v870
        %v876 = vmul.f32 1.0, %v875
        %v877 = vrcp.pop %v771
        %v878 = vmul.f32 %v771, %v877
        %v879 = vsub.f32 1.0, %v878
        %v880 = vmul.f32 %v877, %v879
        %v881 = vadd.f32 %v877, %v880
        %vm882 = vweird.f32 %v771
        %vm883 = vweird.f32 %v877
        %vm884 = vmor %vm882, %vm883
        %v885 = vsel %vm884, %v877, %v881
        %v886 = vand.u32 2147483647, %v771
        %vm887 = vcmp.eq.f32.partialorder %v886, 8.507059e+37
        %v888 = vand.u32 %v771, 2147483648
        %v889 = vor.u32 1.1754944e-38, %v888
        %v890 = vsel %vm887, %v889, %v885
        %v891 = vmul.f32 1.0, %v890
        %v900 = vrot.slane %v654, 1
        %v901 = vrot.slane %v656, 1
        %v902 = vrot.slane %v658, 1
        %v903 = vrot.slane %v660, 1
        %v904 = vrot.slane %v662, 1
        %v905 = vrot.slane %v664, 1
        %v906 = vrot.slane %v666, 1
        %v907 = vrot.slane %v668, 1
        %v917 = vrot.slane %v715, 1
        %v918 = vrot.slane %v715, 2
        %v919 = vrot.slane %v715, 3
        %v920 = vrot.slane %v715, 4
        %v921 = vrot.slane %v715, 5
        %v922 = vrot.slane %v715, 6
        %v923 = vrot.slane %v715, 7
        %v931 = vadd.f32 %v900, %v715
        %v932 = vadd.f32 %v901, %v917
        %v933 = vadd.f32 %v902, %v918
        %v934 = vadd.f32 %v903, %v919
        %v935 = vadd.f32 %v904, %v920
        %v936 = vadd.f32 %v905, %v921
        %v937 = vadd.f32 %v906, %v922
        %v938 = vadd.f32 %v907, %v923
        %v939 = vxor.u32 %v931, 2147483648
        %v940 = vxor.u32 %v932, 2147483648
        %v941 = vxor.u32 %v933, 2147483648
        %v942 = vxor.u32 %v934, 2147483648
        %v943 = vxor.u32 %v935, 2147483648
        %v944 = vxor.u32 %v936, 2147483648
        %v945 = vxor.u32 %v937, 2147483648
        %v946 = vxor.u32 %v938, 2147483648
        %v947 = vmul.f32 %v939, 1.442695
        %v948 = vpow.pop %v947
        %v949 = vmul.f32 %v940, 1.442695
        %v950 = vpow.pop %v949
        %v951 = vmul.f32 %v941, 1.442695
        %v952 = vpow.pop %v951
        %v953 = vmul.f32 %v942, 1.442695
        %v954 = vpow.pop %v953
        %v955 = vmul.f32 %v943, 1.442695
        %v956 = vpow.pop %v955
        %v957 = vmul.f32 %v944, 1.442695
        %v958 = vpow.pop %v957
        %v959 = vmul.f32 %v945, 1.442695
        %v960 = vpow.pop %v959
        %v961 = vmul.f32 %v946, 1.442695
        %v962 = vpow.pop %v961
        %v963 = vadd.f32 %v948, 1.0
        %v964 = vadd.f32 %v950, 1.0
        %v965 = vadd.f32 %v952, 1.0
        %v966 = vadd.f32 %v954, 1.0
        %v967 = vadd.f32 %v956, 1.0
        %v968 = vadd.f32 %v958, 1.0
        %v969 = vadd.f32 %v960, 1.0
        %v970 = vadd.f32 %v962, 1.0
        %v971 = vrcp.pop %v963
        %v972 = vmul.f32 %v963, %v971
        %v973 = vsub.f32 1.0, %v972
        %v974 = vmul.f32 %v971, %v973
        %v975 = vadd.f32 %v971, %v974
        %vm976 = vweird.f32 %v963
        %vm977 = vweird.f32 %v971
        %vm978 = vmor %vm976, %vm977
        %v979 = vsel %vm978, %v971, %v975
        %v980 = vand.u32 2147483647, %v963
        %vm981 = vcmp.eq.f32.partialorder %v980, 8.507059e+37
        %v982 = vand.u32 %v963, 2147483648
        %v983 = vor.u32 1.1754944e-38, %v982
        %v984 = vsel %vm981, %v983, %v979
        %v985 = vmul.f32 1.0, %v984
        %v986 = vrcp.pop %v964
        %v987 = vmul.f32 %v964, %v986
        %v988 = vsub.f32 1.0, %v987
        %v989 = vmul.f32 %v986, %v988
        %v990 = vadd.f32 %v986, %v989
        %vm991 = vweird.f32 %v964
        %vm992 = vweird.f32 %v986
        %vm993 = vmor %vm991, %vm992
        %v994 = vsel %vm993, %v986, %v990
        %v995 = vand.u32 2147483647, %v964
        %vm996 = vcmp.eq.f32.partialorder %v995, 8.507059e+37
        %v997 = vand.u32 %v964, 2147483648
        %v998 = vor.u32 1.1754944e-38, %v997
        %v999 = vsel %vm996, %v998, %v994
        %v1000 = vmul.f32 1.0, %v999
        %v1001 = vrcp.pop %v965
        %v1002 = vmul.f32 %v965, %v1001
        %v1003 = vsub.f32 1.0, %v1002
        %v1004 = vmul.f32 %v1001, %v1003
        %v1005 = vadd.f32 %v1001, %v1004
        %vm1006 = vweird.f32 %v965
        %vm1007 = vweird.f32 %v1001
        %vm1008 = vmor %vm1006, %vm1007
        %v1009 = vsel %vm1008, %v1001, %v1005
        %v1010 = vand.u32 2147483647, %v965
        %vm1011 = vcmp.eq.f32.partialorder %v1010, 8.507059e+37
        %v1012 = vand.u32 %v965, 2147483648
        %v1013 = vor.u32 1.1754944e-38, %v1012
        %v1014 = vsel %vm1011, %v1013, %v1009
        %v1015 = vmul.f32 1.0, %v1014
        %v1016 = vrcp.pop %v966
        %v1017 = vmul.f32 %v966, %v1016
        %v1018 = vsub.f32 1.0, %v1017
        %v1019 = vmul.f32 %v1016, %v1018
        %v1020 = vadd.f32 %v1016, %v1019
        %vm1021 = vweird.f32 %v966
        %vm1022 = vweird.f32 %v1016
        %vm1023 = vmor %vm1021, %vm1022
        %v1024 = vsel %vm1023, %v1016, %v1020
        %v1025 = vand.u32 2147483647, %v966
        %vm1026 = vcmp.eq.f32.partialorder %v1025, 8.507059e+37
        %v1027 = vand.u32 %v966, 2147483648
        %v1028 = vor.u32 1.1754944e-38, %v1027
        %v1029 = vsel %vm1026, %v1028, %v1024
        %v1030 = vmul.f32 1.0, %v1029
        %v1031 = vrcp.pop %v967
        %v1032 = vmul.f32 %v967, %v1031
        %v1033 = vsub.f32 1.0, %v1032
        %v1034 = vmul.f32 %v1031, %v1033
        %v1035 = vadd.f32 %v1031, %v1034
        %vm1036 = vweird.f32 %v967
        %vm1037 = vweird.f32 %v1031
        %vm1038 = vmor %vm1036, %vm1037
        %v1039 = vsel %vm1038, %v1031, %v1035
        %v1040 = vand.u32 2147483647, %v967
        %vm1041 = vcmp.eq.f32.partialorder %v1040, 8.507059e+37
        %v1042 = vand.u32 %v967, 2147483648
        %v1043 = vor.u32 1.1754944e-38, %v1042
        %v1044 = vsel %vm1041, %v1043, %v1039
        %v1045 = vmul.f32 1.0, %v1044
        %v1046 = vrcp.pop %v968
        %v1047 = vmul.f32 %v968, %v1046
        %v1048 = vsub.f32 1.0, %v1047
        %v1049 = vmul.f32 %v1046, %v1048
        %v1050 = vadd.f32 %v1046, %v1049
        %vm1051 = vweird.f32 %v968
        %vm1052 = vweird.f32 %v1046
        %vm1053 = vmor %vm1051, %vm1052
        %v1054 = vsel %vm1053, %v1046, %v1050
        %v1055 = vand.u32 2147483647, %v968
        %vm1056 = vcmp.eq.f32.partialorder %v1055, 8.507059e+37
        %v1057 = vand.u32 %v968, 2147483648
        %v1058 = vor.u32 1.1754944e-38, %v1057
        %v1059 = vsel %vm1056, %v1058, %v1054
        %v1060 = vmul.f32 1.0, %v1059
        %v1061 = vrcp.pop %v969
        %v1062 = vmul.f32 %v969, %v1061
        %v1063 = vsub.f32 1.0, %v1062
        %v1064 = vmul.f32 %v1061, %v1063
        %v1065 = vadd.f32 %v1061, %v1064
        %vm1066 = vweird.f32 %v969
        %vm1067 = vweird.f32 %v1061
        %vm1068 = vmor %vm1066, %vm1067
        %v1069 = vsel %vm1068, %v1061, %v1065
        %v1070 = vand.u32 2147483647, %v969
        %vm1071 = vcmp.eq.f32.partialorder %v1070, 8.507059e+37
        %v1072 = vand.u32 %v969, 2147483648
        %v1073 = vor.u32 1.1754944e-38, %v1072
        %v1074 = vsel %vm1071, %v1073, %v1069
        %v1075 = vmul.f32 1.0, %v1074
        %v1076 = vrcp.pop %v970
        %v1077 = vmul.f32 %v970, %v1076
        %v1078 = vsub.f32 1.0, %v1077
        %v1079 = vmul.f32 %v1076, %v1078
        %v1080 = vadd.f32 %v1076, %v1079
        %vm1081 = vweird.f32 %v970
        %vm1082 = vweird.f32 %v1076
        %vm1083 = vmor %vm1081, %vm1082
        %v1084 = vsel %vm1083, %v1076, %v1080
        %v1085 = vand.u32 2147483647, %v970
        %vm1086 = vcmp.eq.f32.partialorder %v1085, 8.507059e+37
        %v1087 = vand.u32 %v970, 2147483648
        %v1088 = vor.u32 1.1754944e-38, %v1087
        %v1089 = vsel %vm1086, %v1088, %v1084
        %v1090 = vmul.f32 1.0, %v1089
        %v1091 = vmul.f32 %v786, 0.0
        %v1092 = vmul.f32 %v801, 0.0
        %v1093 = vmul.f32 %v816, 0.0
        %v1094 = vmul.f32 %v831, 0.0
        %v1095 = vmul.f32 %v846, 0.0
        %v1096 = vmul.f32 %v861, 0.0
        %v1097 = vmul.f32 %v876, 0.0
        %v1098 = vmul.f32 %v891, 0.0
        %1107 = vst [vmem:[#allocation1] ss:$9 sm:$0xff] %v1091
        %s1108 = scalar_lea.vmem [#allocation1], 1
        %1109 = vst [vmem:[%s1108] ss:$9 sm:$0xff] %v1092
        %s1110 = scalar_lea.vmem [#allocation1], 2
        %1111 = vst [vmem:[%s1110] ss:$9 sm:$0xff] %v1093
        %s1112 = scalar_lea.vmem [#allocation1], 3
        %1113 = vst [vmem:[%s1112] ss:$9 sm:$0xff] %v1094
        %s1114 = scalar_lea.vmem [#allocation1], 4
        %1115 = vst [vmem:[%s1114] ss:$9 sm:$0xff] %v1095
        %s1116 = scalar_lea.vmem [#allocation1], 5
        %1117 = vst [vmem:[%s1116] ss:$9 sm:$0xff] %v1096
        %s1118 = scalar_lea.vmem [#allocation1], 6
        %1119 = vst [vmem:[%s1118] ss:$9 sm:$0xff] %v1097
        %s1120 = scalar_lea.vmem [#allocation1], 7
        %1121 = vst [vmem:[%s1120] ss:$9 sm:$0xff] %v1098
        %v1122 = vld [vmem:[#allocation1] sm:$0xff]
        %1124 = vmatpush.msra.mxu0 %v653
        %1125 = vmatpush.msra.mxu0 %v652
        %1126 = vmatpush.msra.mxu0 %v651
        %1127 = vmatpush.msra.mxu0 %v650
        %1128 = vmatpush.msra.mxu0 %v649
        %1129 = vmatpush.msra.mxu0 %v648
        %1130 = vmatpush.msra.mxu0 %v647
        %1131 = vmatpush.msra.mxu0 %v646
        %1132 = vmatpush.msra.mxu0 %v645
        %1133 = vmatpush.msra.mxu0 %v644
        %1134 = vmatpush.msra.mxu0 %v643
        %1135 = vmatpush.msra.mxu0 %v642
        %1136 = vmatpush.msra.mxu0 %v641
        %1137 = vmatpush.msra.mxu0 %v640
        %1138 = vmatpush.msra.mxu0 %v639
        %1139 = vmatpush.msra.mxu0 %v638
        %1140 = vmatmul.f32.gmra.mxu0 %v1122
        %v1141 = vpop.f32.mrf.mxu0
        %v1142 = vadd.f32 0.0, %v1141
        %1143 = vdwg.mxu0
        %v1144 = vrot.slane %v654, 2
        %v1145 = vrot.slane %v656, 2
        %v1146 = vrot.slane %v658, 2
        %v1147 = vrot.slane %v660, 2
        %v1148 = vrot.slane %v662, 2
        %v1149 = vrot.slane %v664, 2
        %v1150 = vrot.slane %v666, 2
        %v1151 = vrot.slane %v668, 2
        %v1161 = vrot.slane %v1142, 1
        %v1162 = vrot.slane %v1142, 2
        %v1163 = vrot.slane %v1142, 3
        %v1164 = vrot.slane %v1142, 4
        %v1165 = vrot.slane %v1142, 5
        %v1166 = vrot.slane %v1142, 6
        %v1167 = vrot.slane %v1142, 7
        %v1175 = vadd.f32 %v1144, %v1142
        %v1176 = vadd.f32 %v1145, %v1161
        %v1177 = vadd.f32 %v1146, %v1162
        %v1178 = vadd.f32 %v1147, %v1163
        %v1179 = vadd.f32 %v1148, %v1164
        %v1180 = vadd.f32 %v1149, %v1165
        %v1181 = vadd.f32 %v1150, %v1166
        %v1182 = vadd.f32 %v1151, %v1167
        %v1183 = vtanh.pop %v1175
        %v1184 = vtanh.pop %v1176
        %v1185 = vtanh.pop %v1177
        %v1186 = vtanh.pop %v1178
        %v1187 = vtanh.pop %v1179
        %v1188 = vtanh.pop %v1180
        %v1189 = vtanh.pop %v1181
        %v1190 = vtanh.pop %v1182
        %1192 = vset.pattern.permute.xlu0 0
        %1193 = vperm.xlu0 %1192, %v669
        %v1194 = vpop.permute.xlu0 %1193
        %1197 = vset.pattern.permute.xlu0 0
        %1198 = vperm.xlu0 %1197, %v670
        %v1199 = vpop.permute.xlu0 %1198
        %1202 = vset.pattern.permute.xlu0 0
        %1203 = vperm.xlu0 %1202, %v671
        %v1204 = vpop.permute.xlu0 %1203
        %1207 = vset.pattern.permute.xlu0 0
        %1208 = vperm.xlu0 %1207, %v672
        %v1209 = vpop.permute.xlu0 %1208
        %1212 = vset.pattern.permute.xlu0 0
        %1213 = vperm.xlu0 %1212, %v673
        %v1214 = vpop.permute.xlu0 %1213
        %1217 = vset.pattern.permute.xlu0 0
        %1218 = vperm.xlu0 %1217, %v674
        %v1219 = vpop.permute.xlu0 %1218
        %1222 = vset.pattern.permute.xlu0 0
        %1223 = vperm.xlu0 %1222, %v675
        %v1224 = vpop.permute.xlu0 %1223
        %1227 = vset.pattern.permute.xlu0 0
        %1228 = vperm.xlu0 %1227, %v676
        %v1229 = vpop.permute.xlu0 %1228
        %v1231 = vmul.f32 %v1194, %v985
        %v1232 = vmul.f32 %v1199, %v1000
        %v1233 = vmul.f32 %v1204, %v1015
        %v1234 = vmul.f32 %v1209, %v1030
        %v1235 = vmul.f32 %v1214, %v1045
        %v1236 = vmul.f32 %v1219, %v1060
        %v1237 = vmul.f32 %v1224, %v1075
        %v1238 = vmul.f32 %v1229, %v1090
        %v1239 = vsub.f32 1.0, %v1231
        %v1240 = vsub.f32 1.0, %v1232
        %v1241 = vsub.f32 1.0, %v1233
        %v1242 = vsub.f32 1.0, %v1234
        %v1243 = vsub.f32 1.0, %v1235
        %v1244 = vsub.f32 1.0, %v1236
        %v1245 = vsub.f32 1.0, %v1237
        %v1246 = vsub.f32 1.0, %v1238
        %v1247 = vmul.f32 %v1239, 0.0
        %v1248 = vmul.f32 %v1240, 0.0
        %v1249 = vmul.f32 %v1241, 0.0
        %v1250 = vmul.f32 %v1242, 0.0
        %v1251 = vmul.f32 %v1243, 0.0
        %v1252 = vmul.f32 %v1244, 0.0
        %v1253 = vmul.f32 %v1245, 0.0
        %v1254 = vmul.f32 %v1246, 0.0
        %v1255 = vmul.f32 %v1231, %v1183
        %v1256 = vmul.f32 %v1232, %v1184
        %v1257 = vmul.f32 %v1233, %v1185
        %v1258 = vmul.f32 %v1234, %v1186
        %v1259 = vmul.f32 %v1235, %v1187
        %v1260 = vmul.f32 %v1236, %v1188
        %v1261 = vmul.f32 %v1237, %v1189
        %v1262 = vmul.f32 %v1238, %v1190
        %v1263 = vadd.f32 %v1247, %v1255
        %v1264 = vadd.f32 %v1248, %v1256
        %v1265 = vadd.f32 %v1249, %v1257
        %v1266 = vadd.f32 %v1250, %v1258
        %v1267 = vadd.f32 %v1251, %v1259
        %v1268 = vadd.f32 %v1252, %v1260
        %v1269 = vadd.f32 %v1253, %v1261
        %v1270 = vadd.f32 %v1254, %v1262
        %vm1271 = vcmp.ne.f32.partialorder %v669, 0.0
        %vm1272 = vcmp.ne.f32.partialorder %v670, 0.0
        %vm1273 = vcmp.ne.f32.partialorder %v671, 0.0
        %vm1274 = vcmp.ne.f32.partialorder %v672, 0.0
        %vm1275 = vcmp.ne.f32.partialorder %v673, 0.0
        %vm1276 = vcmp.ne.f32.partialorder %v674, 0.0
        %vm1277 = vcmp.ne.f32.partialorder %v675, 0.0
        %vm1278 = vcmp.ne.f32.partialorder %v676, 0.0
        %v1279 = vsel %vm1271, 1, 0
        %v1280 = vsel %vm1272, 1, 0
        %v1281 = vsel %vm1273, 1, 0
        %v1282 = vsel %vm1274, 1, 0
        %v1283 = vsel %vm1275, 1, 0
        %v1284 = vsel %vm1276, 1, 0
        %v1285 = vsel %vm1277, 1, 0
        %v1286 = vsel %vm1278, 1, 0
        %1287 = vset.pattern.permute.xlu0 1
        %1288 = vperm.xlu0 %1287, %v1279
        %v1289 = vpop.permute.xlu0 %1288
        %1290 = vset.pattern.permute.xlu0 1
        %1291 = vperm.xlu0 %1290, %v1280
        %v1292 = vpop.permute.xlu0 %1291
        %1293 = vset.pattern.permute.xlu0 1
        %1294 = vperm.xlu0 %1293, %v1281
        %v1295 = vpop.permute.xlu0 %1294
        %1296 = vset.pattern.permute.xlu0 1
        %1297 = vperm.xlu0 %1296, %v1282
        %v1298 = vpop.permute.xlu0 %1297
        %1299 = vset.pattern.permute.xlu0 1
        %1300 = vperm.xlu0 %1299, %v1283
        %v1301 = vpop.permute.xlu0 %1300
        %1302 = vset.pattern.permute.xlu0 1
        %1303 = vperm.xlu0 %1302, %v1284
        %v1304 = vpop.permute.xlu0 %1303
        %1305 = vset.pattern.permute.xlu0 1
        %1306 = vperm.xlu0 %1305, %v1285
        %v1307 = vpop.permute.xlu0 %1306
        %1308 = vset.pattern.permute.xlu0 1
        %1309 = vperm.xlu0 %1308, %v1286
        %v1310 = vpop.permute.xlu0 %1309
        %vm1311 = vcmp.eq.s32.totalorder %v1289, 1
        %vm1312 = vcmp.eq.s32.totalorder %v1292, 1
        %vm1313 = vcmp.eq.s32.totalorder %v1295, 1
        %vm1314 = vcmp.eq.s32.totalorder %v1298, 1
        %vm1315 = vcmp.eq.s32.totalorder %v1301, 1
        %vm1316 = vcmp.eq.s32.totalorder %v1304, 1
        %vm1317 = vcmp.eq.s32.totalorder %v1307, 1
        %vm1318 = vcmp.eq.s32.totalorder %v1310, 1
        %v1319 = vsel %vm1311, %v1263, 0.0
        %v1320 = vsel %vm1312, %v1264, 0.0
        %v1321 = vsel %vm1313, %v1265, 0.0
        %v1322 = vsel %vm1314, %v1266, 0.0
        %v1323 = vsel %vm1315, %v1267, 0.0
        %v1324 = vsel %vm1316, %v1268, 0.0
        %v1325 = vsel %vm1317, %v1269, 0.0
        %v1326 = vsel %vm1318, %v1270, 0.0
        %s1327 = scalar_lea.vmem [#allocation2], 1
        %v1328 = vld [vmem:[%s1327] ss:$8 sm:$0x7]
        %s1329 = scalar_lea.vmem [#allocation2], 25
        %v1330 = vld [vmem:[%s1329] ss:$8 sm:$0x7]
        %s1331 = scalar_lea.vmem [#allocation2], 49
        %v1332 = vld [vmem:[%s1331] ss:$8 sm:$0x7]
        %s1333 = scalar_lea.vmem [#allocation2], 73
        %v1334 = vld [vmem:[%s1333] ss:$8 sm:$0x7]
        %s1335 = scalar_lea.vmem [#allocation2], 97
        %v1336 = vld [vmem:[%s1335] ss:$8 sm:$0x7]
        %s1337 = scalar_lea.vmem [#allocation2], 121
        %v1338 = vld [vmem:[%s1337] ss:$8 sm:$0x7]
        %s1339 = scalar_lea.vmem [#allocation2], 145
        %v1340 = vld [vmem:[%s1339] ss:$8 sm:$0x7]
        %s1341 = scalar_lea.vmem [#allocation2], 169
        %v1342 = vld [vmem:[%s1341] ss:$8 sm:$0x7]
        %v1343 = vld [vmem:[%s393 + $0x1] sm:$0x1]
        %v1344 = vld [vmem:[%s393 + $0x9] sm:$0x1]
        %v1345 = vld [vmem:[%s393 + $0x11] sm:$0x1]
        %v1346 = vld [vmem:[%s393 + $0x19] sm:$0x1]
        %v1347 = vld [vmem:[%s393 + $0x21] sm:$0x1]
        %v1348 = vld [vmem:[%s393 + $0x29] sm:$0x1]
        %v1349 = vld [vmem:[%s393 + $0x31] sm:$0x1]
        %v1350 = vld [vmem:[%s393 + $0x39] sm:$0x1]
        %v1359 = vrot.slane %v1264, 7
        %vm1360 = vcmask 1041409
        %v1361 = vsel %vm1360, %v1359, %v1263
        %v1362 = vrot.slane %v1265, 6
        %vm1363 = vcmask 1042434
        %v1364 = vsel %vm1363, %v1362, %v1361
        %v1365 = vrot.slane %v1266, 5
        %vm1366 = vcmask 1043459
        %v1367 = vsel %vm1366, %v1365, %v1364
        %v1368 = vrot.slane %v1267, 4
        %vm1369 = vcmask 1044484
        %v1370 = vsel %vm1369, %v1368, %v1367
        %v1371 = vrot.slane %v1268, 3
        %vm1372 = vcmask 1045509
        %v1373 = vsel %vm1372, %v1371, %v1370
        %v1374 = vrot.slane %v1269, 2
        %vm1375 = vcmask 1046534
        %v1376 = vsel %vm1375, %v1374, %v1373
        %v1377 = vrot.slane %v1270, 1
        %vm1378 = vcmask 1047559
        %v1379 = vsel %vm1378, %v1377, %v1376
        %1381 = vmatpush.msra.mxu0 %v636
        %1382 = vmatpush.msra.mxu0 %v634
        %1383 = vmatpush.msra.mxu0 %v632
        %1384 = vmatpush.msra.mxu0 %v630
        %1385 = vmatpush.msra.mxu0 %v628
        %1386 = vmatpush.msra.mxu0 %v626
        %1387 = vmatpush.msra.mxu0 %v624
        %1388 = vmatpush.msra.mxu0 %v622
        %1389 = vmatpush.msra.mxu0 %v620
        %1390 = vmatpush.msra.mxu0 %v618
        %1391 = vmatpush.msra.mxu0 %v616
        %1392 = vmatpush.msra.mxu0 %v614
        %1393 = vmatpush.msra.mxu0 %v612
        %1394 = vmatpush.msra.mxu0 %v610
        %1395 = vmatpush.msra.mxu0 %v608
        %1396 = vmatpush.msra.mxu0 %v606
        %1397 = vmatmul.f32.gmra.mxu0 %v1379
        %v1398 = vpop.f32.mrf.mxu0
        %v1399 = vadd.f32 0.0, %v1398
        %1400 = vdwg.mxu0
        %1401 = vmatpush.msra.mxu0 %v637
        %1402 = vmatpush.msra.mxu0 %v635
        %1403 = vmatpush.msra.mxu0 %v633
        %1404 = vmatpush.msra.mxu0 %v631
        %1405 = vmatpush.msra.mxu0 %v629
        %1406 = vmatpush.msra.mxu0 %v627
        %1407 = vmatpush.msra.mxu0 %v625
        %1408 = vmatpush.msra.mxu0 %v623
        %1409 = vmatpush.msra.mxu0 %v621
        %1410 = vmatpush.msra.mxu0 %v619
        %1411 = vmatpush.msra.mxu0 %v617
        %1412 = vmatpush.msra.mxu0 %v615
        %1413 = vmatpush.msra.mxu0 %v613
        %1414 = vmatpush.msra.mxu0 %v611
        %1415 = vmatpush.msra.mxu0 %v609
        %1416 = vmatpush.msra.mxu0 %v607
        %1417 = vmatmul.f32.gmra.mxu0 %v1379
        %v1418 = vpop.f32.mrf.mxu0
        %v1419 = vadd.f32 0.0, %v1418
        %1420 = vdwg.mxu0
        %v1422 = vrot.slane %v1399, 1
        %v1423 = vrot.slane %v1399, 2
        %v1424 = vrot.slane %v1399, 3
        %v1425 = vrot.slane %v1399, 4
        %v1426 = vrot.slane %v1399, 5
        %v1427 = vrot.slane %v1399, 6
        %v1428 = vrot.slane %v1399, 7
        %v1436 = vadd.f32 %v1328, %v1399
        %v1437 = vadd.f32 %v1330, %v1422
        %v1438 = vadd.f32 %v1332, %v1423
        %v1439 = vadd.f32 %v1334, %v1424
        %v1440 = vadd.f32 %v1336, %v1425
        %v1441 = vadd.f32 %v1338, %v1426
        %v1442 = vadd.f32 %v1340, %v1427
        %v1443 = vadd.f32 %v1342, %v1428
        %v1444 = vxor.u32 %v1436, 2147483648
        %v1445 = vxor.u32 %v1437, 2147483648
        %v1446 = vxor.u32 %v1438, 2147483648
        %v1447 = vxor.u32 %v1439, 2147483648
        %v1448 = vxor.u32 %v1440, 2147483648
        %v1449 = vxor.u32 %v1441, 2147483648
        %v1450 = vxor.u32 %v1442, 2147483648
        %v1451 = vxor.u32 %v1443, 2147483648
        %v1452 = vmul.f32 %v1444, 1.442695
        %v1453 = vpow.pop %v1452
        %v1454 = vmul.f32 %v1445, 1.442695
        %v1455 = vpow.pop %v1454
        %v1456 = vmul.f32 %v1446, 1.442695
        %v1457 = vpow.pop %v1456
        %v1458 = vmul.f32 %v1447, 1.442695
        %v1459 = vpow.pop %v1458
        %v1460 = vmul.f32 %v1448, 1.442695
        %v1461 = vpow.pop %v1460
        %v1462 = vmul.f32 %v1449, 1.442695
        %v1463 = vpow.pop %v1462
        %v1464 = vmul.f32 %v1450, 1.442695
        %v1465 = vpow.pop %v1464
        %v1466 = vmul.f32 %v1451, 1.442695
        %v1467 = vpow.pop %v1466
        %v1468 = vadd.f32 %v1453, 1.0
        %v1469 = vadd.f32 %v1455, 1.0
        %v1470 = vadd.f32 %v1457, 1.0
        %v1471 = vadd.f32 %v1459, 1.0
        %v1472 = vadd.f32 %v1461, 1.0
        %v1473 = vadd.f32 %v1463, 1.0
        %v1474 = vadd.f32 %v1465, 1.0
        %v1475 = vadd.f32 %v1467, 1.0
        %v1476 = vrcp.pop %v1468
        %v1477 = vmul.f32 %v1468, %v1476
        %v1478 = vsub.f32 1.0, %v1477
        %v1479 = vmul.f32 %v1476, %v1478
        %v1480 = vadd.f32 %v1476, %v1479
        %vm1481 = vweird.f32 %v1468
        %vm1482 = vweird.f32 %v1476
        %vm1483 = vmor %vm1481, %vm1482
        %v1484 = vsel %vm1483, %v1476, %v1480
        %v1485 = vand.u32 2147483647, %v1468
        %vm1486 = vcmp.eq.f32.partialorder %v1485, 8.507059e+37
        %v1487 = vand.u32 %v1468, 2147483648
        %v1488 = vor.u32 1.1754944e-38, %v1487
        %v1489 = vsel %vm1486, %v1488, %v1484
        %v1490 = vmul.f32 1.0, %v1489
        %v1491 = vrcp.pop %v1469
        %v1492 = vmul.f32 %v1469, %v1491
        %v1493 = vsub.f32 1.0, %v1492
        %v1494 = vmul.f32 %v1491, %v1493
        %v1495 = vadd.f32 %v1491, %v1494
        %vm1496 = vweird.f32 %v1469
        %vm1497 = vweird.f32 %v1491
        %vm1498 = vmor %vm1496, %vm1497
        %v1499 = vsel %vm1498, %v1491, %v1495
        %v1500 = vand.u32 2147483647, %v1469
        %vm1501 = vcmp.eq.f32.partialorder %v1500, 8.507059e+37
        %v1502 = vand.u32 %v1469, 2147483648
        %v1503 = vor.u32 1.1754944e-38, %v1502
        %v1504 = vsel %vm1501, %v1503, %v1499
        %v1505 = vmul.f32 1.0, %v1504
        %v1506 = vrcp.pop %v1470
        %v1507 = vmul.f32 %v1470, %v1506
        %v1508 = vsub.f32 1.0, %v1507
        %v1509 = vmul.f32 %v1506, %v1508
        %v1510 = vadd.f32 %v1506, %v1509
        %vm1511 = vweird.f32 %v1470
        %vm1512 = vweird.f32 %v1506
        %vm1513 = vmor %vm1511, %vm1512
        %v1514 = vsel %vm1513, %v1506, %v1510
        %v1515 = vand.u32 2147483647, %v1470
        %vm1516 = vcmp.eq.f32.partialorder %v1515, 8.507059e+37
        %v1517 = vand.u32 %v1470, 2147483648
        %v1518 = vor.u32 1.1754944e-38, %v1517
        %v1519 = vsel %vm1516, %v1518, %v1514
        %v1520 = vmul.f32 1.0, %v1519
        %v1521 = vrcp.pop %v1471
        %v1522 = vmul.f32 %v1471, %v1521
        %v1523 = vsub.f32 1.0, %v1522
        %v1524 = vmul.f32 %v1521, %v1523
        %v1525 = vadd.f32 %v1521, %v1524
        %vm1526 = vweird.f32 %v1471
        %vm1527 = vweird.f32 %v1521
        %vm1528 = vmor %vm1526, %vm1527
        %v1529 = vsel %vm1528, %v1521, %v1525
        %v1530 = vand.u32 2147483647, %v1471
        %vm1531 = vcmp.eq.f32.partialorder %v1530, 8.507059e+37
        %v1532 = vand.u32 %v1471, 2147483648
        %v1533 = vor.u32 1.1754944e-38, %v1532
        %v1534 = vsel %vm1531, %v1533, %v1529
        %v1535 = vmul.f32 1.0, %v1534
        %v1536 = vrcp.pop %v1472
        %v1537 = vmul.f32 %v1472, %v1536
        %v1538 = vsub.f32 1.0, %v1537
        %v1539 = vmul.f32 %v1536, %v1538
        %v1540 = vadd.f32 %v1536, %v1539
        %vm1541 = vweird.f32 %v1472
        %vm1542 = vweird.f32 %v1536
        %vm1543 = vmor %vm1541, %vm1542
        %v1544 = vsel %vm1543, %v1536, %v1540
        %v1545 = vand.u32 2147483647, %v1472
        %vm1546 = vcmp.eq.f32.partialorder %v1545, 8.507059e+37
        %v1547 = vand.u32 %v1472, 2147483648
        %v1548 = vor.u32 1.1754944e-38, %v1547
        %v1549 = vsel %vm1546, %v1548, %v1544
        %v1550 = vmul.f32 1.0, %v1549
        %v1551 = vrcp.pop %v1473
        %v1552 = vmul.f32 %v1473, %v1551
        %v1553 = vsub.f32 1.0, %v1552
        %v1554 = vmul.f32 %v1551, %v1553
        %v1555 = vadd.f32 %v1551, %v1554
        %vm1556 = vweird.f32 %v1473
        %vm1557 = vweird.f32 %v1551
        %vm1558 = vmor %vm1556, %vm1557
        %v1559 = vsel %vm1558, %v1551, %v1555
        %v1560 = vand.u32 2147483647, %v1473
        %vm1561 = vcmp.eq.f32.partialorder %v1560, 8.507059e+37
        %v1562 = vand.u32 %v1473, 2147483648
        %v1563 = vor.u32 1.1754944e-38, %v1562
        %v1564 = vsel %vm1561, %v1563, %v1559
        %v1565 = vmul.f32 1.0, %v1564
        %v1566 = vrcp.pop %v1474
        %v1567 = vmul.f32 %v1474, %v1566
        %v1568 = vsub.f32 1.0, %v1567
        %v1569 = vmul.f32 %v1566, %v1568
        %v1570 = vadd.f32 %v1566, %v1569
        %vm1571 = vweird.f32 %v1474
        %vm1572 = vweird.f32 %v1566
        %vm1573 = vmor %vm1571, %vm1572
        %v1574 = vsel %vm1573, %v1566, %v1570
        %v1575 = vand.u32 2147483647, %v1474
        %vm1576 = vcmp.eq.f32.partialorder %v1575, 8.507059e+37
        %v1577 = vand.u32 %v1474, 2147483648
        %v1578 = vor.u32 1.1754944e-38, %v1577
        %v1579 = vsel %vm1576, %v1578, %v1574
        %v1580 = vmul.f32 1.0, %v1579
        %v1581 = vrcp.pop %v1475
        %v1582 = vmul.f32 %v1475, %v1581
        %v1583 = vsub.f32 1.0, %v1582
        %v1584 = vmul.f32 %v1581, %v1583
        %v1585 = vadd.f32 %v1581, %v1584
        %vm1586 = vweird.f32 %v1475
        %vm1587 = vweird.f32 %v1581
        %vm1588 = vmor %vm1586, %vm1587
        %v1589 = vsel %vm1588, %v1581, %v1585
        %v1590 = vand.u32 2147483647, %v1475
        %vm1591 = vcmp.eq.f32.partialorder %v1590, 8.507059e+37
        %v1592 = vand.u32 %v1475, 2147483648
        %v1593 = vor.u32 1.1754944e-38, %v1592
        %v1594 = vsel %vm1591, %v1593, %v1589
        %v1595 = vmul.f32 1.0, %v1594
        %v1604 = vrot.slane %v1328, 1
        %v1605 = vrot.slane %v1330, 1
        %v1606 = vrot.slane %v1332, 1
        %v1607 = vrot.slane %v1334, 1
        %v1608 = vrot.slane %v1336, 1
        %v1609 = vrot.slane %v1338, 1
        %v1610 = vrot.slane %v1340, 1
        %v1611 = vrot.slane %v1342, 1
        %v1621 = vrot.slane %v1419, 1
        %v1622 = vrot.slane %v1419, 2
        %v1623 = vrot.slane %v1419, 3
        %v1624 = vrot.slane %v1419, 4
        %v1625 = vrot.slane %v1419, 5
        %v1626 = vrot.slane %v1419, 6
        %v1627 = vrot.slane %v1419, 7
        %v1635 = vadd.f32 %v1604, %v1419
        %v1636 = vadd.f32 %v1605, %v1621
        %v1637 = vadd.f32 %v1606, %v1622
        %v1638 = vadd.f32 %v1607, %v1623
        %v1639 = vadd.f32 %v1608, %v1624
        %v1640 = vadd.f32 %v1609, %v1625
        %v1641 = vadd.f32 %v1610, %v1626
        %v1642 = vadd.f32 %v1611, %v1627
        %v1643 = vxor.u32 %v1635, 2147483648
        %v1644 = vxor.u32 %v1636, 2147483648
        %v1645 = vxor.u32 %v1637, 2147483648
        %v1646 = vxor.u32 %v1638, 2147483648
        %v1647 = vxor.u32 %v1639, 2147483648
        %v1648 = vxor.u32 %v1640, 2147483648
        %v1649 = vxor.u32 %v1641, 2147483648
        %v1650 = vxor.u32 %v1642, 2147483648
        %v1651 = vmul.f32 %v1643, 1.442695
        %v1652 = vpow.pop %v1651
        %v1653 = vmul.f32 %v1644, 1.442695
        %v1654 = vpow.pop %v1653
        %v1655 = vmul.f32 %v1645, 1.442695
        %v1656 = vpow.pop %v1655
        %v1657 = vmul.f32 %v1646, 1.442695
        %v1658 = vpow.pop %v1657
        %v1659 = vmul.f32 %v1647, 1.442695
        %v1660 = vpow.pop %v1659
        %v1661 = vmul.f32 %v1648, 1.442695
        %v1662 = vpow.pop %v1661
        %v1663 = vmul.f32 %v1649, 1.442695
        %v1664 = vpow.pop %v1663
        %v1665 = vmul.f32 %v1650, 1.442695
        %v1666 = vpow.pop %v1665
        %v1667 = vadd.f32 %v1652, 1.0
        %v1668 = vadd.f32 %v1654, 1.0
        %v1669 = vadd.f32 %v1656, 1.0
        %v1670 = vadd.f32 %v1658, 1.0
        %v1671 = vadd.f32 %v1660, 1.0
        %v1672 = vadd.f32 %v1662, 1.0
        %v1673 = vadd.f32 %v1664, 1.0
        %v1674 = vadd.f32 %v1666, 1.0
        %v1675 = vrcp.pop %v1667
        %v1676 = vmul.f32 %v1667, %v1675
        %v1677 = vsub.f32 1.0, %v1676
        %v1678 = vmul.f32 %v1675, %v1677
        %v1679 = vadd.f32 %v1675, %v1678
        %vm1680 = vweird.f32 %v1667
        %vm1681 = vweird.f32 %v1675
        %vm1682 = vmor %vm1680, %vm1681
        %v1683 = vsel %vm1682, %v1675, %v1679
        %v1684 = vand.u32 2147483647, %v1667
        %vm1685 = vcmp.eq.f32.partialorder %v1684, 8.507059e+37
        %v1686 = vand.u32 %v1667, 2147483648
        %v1687 = vor.u32 1.1754944e-38, %v1686
        %v1688 = vsel %vm1685, %v1687, %v1683
        %v1689 = vmul.f32 1.0, %v1688
        %v1690 = vrcp.pop %v1668
        %v1691 = vmul.f32 %v1668, %v1690
        %v1692 = vsub.f32 1.0, %v1691
        %v1693 = vmul.f32 %v1690, %v1692
        %v1694 = vadd.f32 %v1690, %v1693
        %vm1695 = vweird.f32 %v1668
        %vm1696 = vweird.f32 %v1690
        %vm1697 = vmor %vm1695, %vm1696
        %v1698 = vsel %vm1697, %v1690, %v1694
        %v1699 = vand.u32 2147483647, %v1668
        %vm1700 = vcmp.eq.f32.partialorder %v1699, 8.507059e+37
        %v1701 = vand.u32 %v1668, 2147483648
        %v1702 = vor.u32 1.1754944e-38, %v1701
        %v1703 = vsel %vm1700, %v1702, %v1698
        %v1704 = vmul.f32 1.0, %v1703
        %v1705 = vrcp.pop %v1669
        %v1706 = vmul.f32 %v1669, %v1705
        %v1707 = vsub.f32 1.0, %v1706
        %v1708 = vmul.f32 %v1705, %v1707
        %v1709 = vadd.f32 %v1705, %v1708
        %vm1710 = vweird.f32 %v1669
        %vm1711 = vweird.f32 %v1705
        %vm1712 = vmor %vm1710, %vm1711
        %v1713 = vsel %vm1712, %v1705, %v1709
        %v1714 = vand.u32 2147483647, %v1669
        %vm1715 = vcmp.eq.f32.partialorder %v1714, 8.507059e+37
        %v1716 = vand.u32 %v1669, 2147483648
        %v1717 = vor.u32 1.1754944e-38, %v1716
        %v1718 = vsel %vm1715, %v1717, %v1713
        %v1719 = vmul.f32 1.0, %v1718
        %v1720 = vrcp.pop %v1670
        %v1721 = vmul.f32 %v1670, %v1720
        %v1722 = vsub.f32 1.0, %v1721
        %v1723 = vmul.f32 %v1720, %v1722
        %v1724 = vadd.f32 %v1720, %v1723
        %vm1725 = vweird.f32 %v1670
        %vm1726 = vweird.f32 %v1720
        %vm1727 = vmor %vm1725, %vm1726
        %v1728 = vsel %vm1727, %v1720, %v1724
        %v1729 = vand.u32 2147483647, %v1670
        %vm1730 = vcmp.eq.f32.partialorder %v1729, 8.507059e+37
        %v1731 = vand.u32 %v1670, 2147483648
        %v1732 = vor.u32 1.1754944e-38, %v1731
        %v1733 = vsel %vm1730, %v1732, %v1728
        %v1734 = vmul.f32 1.0, %v1733
        %v1735 = vrcp.pop %v1671
        %v1736 = vmul.f32 %v1671, %v1735
        %v1737 = vsub.f32 1.0, %v1736
        %v1738 = vmul.f32 %v1735, %v1737
        %v1739 = vadd.f32 %v1735, %v1738
        %vm1740 = vweird.f32 %v1671
        %vm1741 = vweird.f32 %v1735
        %vm1742 = vmor %vm1740, %vm1741
        %v1743 = vsel %vm1742, %v1735, %v1739
        %v1744 = vand.u32 2147483647, %v1671
        %vm1745 = vcmp.eq.f32.partialorder %v1744, 8.507059e+37
        %v1746 = vand.u32 %v1671, 2147483648
        %v1747 = vor.u32 1.1754944e-38, %v1746
        %v1748 = vsel %vm1745, %v1747, %v1743
        %v1749 = vmul.f32 1.0, %v1748
        %v1750 = vrcp.pop %v1672
        %v1751 = vmul.f32 %v1672, %v1750
        %v1752 = vsub.f32 1.0, %v1751
        %v1753 = vmul.f32 %v1750, %v1752
        %v1754 = vadd.f32 %v1750, %v1753
        %vm1755 = vweird.f32 %v1672
        %vm1756 = vweird.f32 %v1750
        %vm1757 = vmor %vm1755, %vm1756
        %v1758 = vsel %vm1757, %v1750, %v1754
        %v1759 = vand.u32 2147483647, %v1672
        %vm1760 = vcmp.eq.f32.partialorder %v1759, 8.507059e+37
        %v1761 = vand.u32 %v1672, 2147483648
        %v1762 = vor.u32 1.1754944e-38, %v1761
        %v1763 = vsel %vm1760, %v1762, %v1758
        %v1764 = vmul.f32 1.0, %v1763
        %v1765 = vrcp.pop %v1673
        %v1766 = vmul.f32 %v1673, %v1765
        %v1767 = vsub.f32 1.0, %v1766
        %v1768 = vmul.f32 %v1765, %v1767
        %v1769 = vadd.f32 %v1765, %v1768
        %vm1770 = vweird.f32 %v1673
        %vm1771 = vweird.f32 %v1765
        %vm1772 = vmor %vm1770, %vm1771
        %v1773 = vsel %vm1772, %v1765, %v1769
        %v1774 = vand.u32 2147483647, %v1673
        %vm1775 = vcmp.eq.f32.partialorder %v1774, 8.507059e+37
        %v1776 = vand.u32 %v1673, 2147483648
        %v1777 = vor.u32 1.1754944e-38, %v1776
        %v1778 = vsel %vm1775, %v1777, %v1773
        %v1779 = vmul.f32 1.0, %v1778
        %v1780 = vrcp.pop %v1674
        %v1781 = vmul.f32 %v1674, %v1780
        %v1782 = vsub.f32 1.0, %v1781
        %v1783 = vmul.f32 %v1780, %v1782
        %v1784 = vadd.f32 %v1780, %v1783
        %vm1785 = vweird.f32 %v1674
        %vm1786 = vweird.f32 %v1780
        %vm1787 = vmor %vm1785, %vm1786
        %v1788 = vsel %vm1787, %v1780, %v1784
        %v1789 = vand.u32 2147483647, %v1674
        %vm1790 = vcmp.eq.f32.partialorder %v1789, 8.507059e+37
        %v1791 = vand.u32 %v1674, 2147483648
        %v1792 = vor.u32 1.1754944e-38, %v1791
        %v1793 = vsel %vm1790, %v1792, %v1788
        %v1794 = vmul.f32 1.0, %v1793
        %v1795 = vmul.f32 %v1490, %v1263
        %v1796 = vmul.f32 %v1505, %v1264
        %v1797 = vmul.f32 %v1520, %v1265
        %v1798 = vmul.f32 %v1535, %v1266
        %v1799 = vmul.f32 %v1550, %v1267
        %v1800 = vmul.f32 %v1565, %v1268
        %v1801 = vmul.f32 %v1580, %v1269
        %v1802 = vmul.f32 %v1595, %v1270
        %1811 = vst [vmem:[#allocation1] ss:$9 sm:$0xff] %v1795
        %s1812 = scalar_lea.vmem [#allocation1], 1
        %1813 = vst [vmem:[%s1812] ss:$9 sm:$0xff] %v1796
        %s1814 = scalar_lea.vmem [#allocation1], 2
        %1815 = vst [vmem:[%s1814] ss:$9 sm:$0xff] %v1797
        %s1816 = scalar_lea.vmem [#allocation1], 3
        %1817 = vst [vmem:[%s1816] ss:$9 sm:$0xff] %v1798
        %s1818 = scalar_lea.vmem [#allocation1], 4
        %1819 = vst [vmem:[%s1818] ss:$9 sm:$0xff] %v1799
        %s1820 = scalar_lea.vmem [#allocation1], 5
        %1821 = vst [vmem:[%s1820] ss:$9 sm:$0xff] %v1800
        %s1822 = scalar_lea.vmem [#allocation1], 6
        %1823 = vst [vmem:[%s1822] ss:$9 sm:$0xff] %v1801
        %s1824 = scalar_lea.vmem [#allocation1], 7
        %1825 = vst [vmem:[%s1824] ss:$9 sm:$0xff] %v1802
        %v1826 = vld [vmem:[#allocation1] sm:$0xff]
        %1828 = vmatpush.msra.mxu0 %v653
        %1829 = vmatpush.msra.mxu0 %v652
        %1830 = vmatpush.msra.mxu0 %v651
        %1831 = vmatpush.msra.mxu0 %v650
        %1832 = vmatpush.msra.mxu0 %v649
        %1833 = vmatpush.msra.mxu0 %v648
        %1834 = vmatpush.msra.mxu0 %v647
        %1835 = vmatpush.msra.mxu0 %v646
        %1836 = vmatpush.msra.mxu0 %v645
        %1837 = vmatpush.msra.mxu0 %v644
        %1838 = vmatpush.msra.mxu0 %v643
        %1839 = vmatpush.msra.mxu0 %v642
        %1840 = vmatpush.msra.mxu0 %v641
        %1841 = vmatpush.msra.mxu0 %v640
        %1842 = vmatpush.msra.mxu0 %v639
        %1843 = vmatpush.msra.mxu0 %v638
        %1844 = vmatmul.f32.gmra.mxu0 %v1826
        %v1845 = vpop.f32.mrf.mxu0
        %v1846 = vadd.f32 0.0, %v1845
        %1847 = vdwg.mxu0
        %v1848 = vrot.slane %v1328, 2
        %v1849 = vrot.slane %v1330, 2
        %v1850 = vrot.slane %v1332, 2
        %v1851 = vrot.slane %v1334, 2
        %v1852 = vrot.slane %v1336, 2
        %v1853 = vrot.slane %v1338, 2
        %v1854 = vrot.slane %v1340, 2
        %v1855 = vrot.slane %v1342, 2
        %v1865 = vrot.slane %v1846, 1
        %v1866 = vrot.slane %v1846, 2
        %v1867 = vrot.slane %v1846, 3
        %v1868 = vrot.slane %v1846, 4
        %v1869 = vrot.slane %v1846, 5
        %v1870 = vrot.slane %v1846, 6
        %v1871 = vrot.slane %v1846, 7
        %v1879 = vadd.f32 %v1848, %v1846
        %v1880 = vadd.f32 %v1849, %v1865
        %v1881 = vadd.f32 %v1850, %v1866
        %v1882 = vadd.f32 %v1851, %v1867
        %v1883 = vadd.f32 %v1852, %v1868
        %v1884 = vadd.f32 %v1853, %v1869
        %v1885 = vadd.f32 %v1854, %v1870
        %v1886 = vadd.f32 %v1855, %v1871
        %v1887 = vtanh.pop %v1879
        %v1888 = vtanh.pop %v1880
        %v1889 = vtanh.pop %v1881
        %v1890 = vtanh.pop %v1882
        %v1891 = vtanh.pop %v1883
        %v1892 = vtanh.pop %v1884
        %v1893 = vtanh.pop %v1885
        %v1894 = vtanh.pop %v1886
        %1896 = vset.pattern.permute.xlu0 0
        %1897 = vperm.xlu0 %1896, %v1343
        %v1898 = vpop.permute.xlu0 %1897
        %1901 = vset.pattern.permute.xlu0 0
        %1902 = vperm.xlu0 %1901, %v1344
        %v1903 = vpop.permute.xlu0 %1902
        %1906 = vset.pattern.permute.xlu0 0
        %1907 = vperm.xlu0 %1906, %v1345
        %v1908 = vpop.permute.xlu0 %1907
        %1911 = vset.pattern.permute.xlu0 0
        %1912 = vperm.xlu0 %1911, %v1346
        %v1913 = vpop.permute.xlu0 %1912
        %1916 = vset.pattern.permute.xlu0 0
        %1917 = vperm.xlu0 %1916, %v1347
        %v1918 = vpop.permute.xlu0 %1917
        %1921 = vset.pattern.permute.xlu0 0
        %1922 = vperm.xlu0 %1921, %v1348
        %v1923 = vpop.permute.xlu0 %1922
        %1926 = vset.pattern.permute.xlu0 0
        %1927 = vperm.xlu0 %1926, %v1349
        %v1928 = vpop.permute.xlu0 %1927
        %1931 = vset.pattern.permute.xlu0 0
        %1932 = vperm.xlu0 %1931, %v1350
        %v1933 = vpop.permute.xlu0 %1932
        %v1935 = vmul.f32 %v1898, %v1689
        %v1936 = vmul.f32 %v1903, %v1704
        %v1937 = vmul.f32 %v1908, %v1719
        %v1938 = vmul.f32 %v1913, %v1734
        %v1939 = vmul.f32 %v1918, %v1749
        %v1940 = vmul.f32 %v1923, %v1764
        %v1941 = vmul.f32 %v1928, %v1779
        %v1942 = vmul.f32 %v1933, %v1794
        %v1943 = vsub.f32 1.0, %v1935
        %v1944 = vsub.f32 1.0, %v1936
        %v1945 = vsub.f32 1.0, %v1937
        %v1946 = vsub.f32 1.0, %v1938
        %v1947 = vsub.f32 1.0, %v1939
        %v1948 = vsub.f32 1.0, %v1940
        %v1949 = vsub.f32 1.0, %v1941
        %v1950 = vsub.f32 1.0, %v1942
        %v1951 = vmul.f32 %v1943, %v1263
        %v1952 = vmul.f32 %v1944, %v1264
        %v1953 = vmul.f32 %v1945, %v1265
        %v1954 = vmul.f32 %v1946, %v1266
        %v1955 = vmul.f32 %v1947, %v1267
        %v1956 = vmul.f32 %v1948, %v1268
        %v1957 = vmul.f32 %v1949, %v1269
        %v1958 = vmul.f32 %v1950, %v1270
        %v1959 = vmul.f32 %v1935, %v1887
        %v1960 = vmul.f32 %v1936, %v1888
        %v1961 = vmul.f32 %v1937, %v1889
        %v1962 = vmul.f32 %v1938, %v1890
        %v1963 = vmul.f32 %v1939, %v1891
        %v1964 = vmul.f32 %v1940, %v1892
        %v1965 = vmul.f32 %v1941, %v1893
        %v1966 = vmul.f32 %v1942, %v1894
        %v1967 = vadd.f32 %v1951, %v1959
        %v1968 = vadd.f32 %v1952, %v1960
        %v1969 = vadd.f32 %v1953, %v1961
        %v1970 = vadd.f32 %v1954, %v1962
        %v1971 = vadd.f32 %v1955, %v1963
        %v1972 = vadd.f32 %v1956, %v1964
        %v1973 = vadd.f32 %v1957, %v1965
        %v1974 = vadd.f32 %v1958, %v1966
        %vm1975 = vcmp.ne.f32.partialorder %v1343, 0.0
        %vm1976 = vcmp.ne.f32.partialorder %v1344, 0.0
        %vm1977 = vcmp.ne.f32.partialorder %v1345, 0.0
        %vm1978 = vcmp.ne.f32.partialorder %v1346, 0.0
        %vm1979 = vcmp.ne.f32.partialorder %v1347, 0.0
        %vm1980 = vcmp.ne.f32.partialorder %v1348, 0.0
        %vm1981 = vcmp.ne.f32.partialorder %v1349, 0.0
        %vm1982 = vcmp.ne.f32.partialorder %v1350, 0.0
        %v1983 = vsel %vm1975, 1, 0
        %v1984 = vsel %vm1976, 1, 0
        %v1985 = vsel %vm1977, 1, 0
        %v1986 = vsel %vm1978, 1, 0
        %v1987 = vsel %vm1979, 1, 0
        %v1988 = vsel %vm1980, 1, 0
        %v1989 = vsel %vm1981, 1, 0
        %v1990 = vsel %vm1982, 1, 0
        %1991 = vset.pattern.permute.xlu0 1
        %1992 = vperm.xlu0 %1991, %v1983
        %v1993 = vpop.permute.xlu0 %1992
        %1994 = vset.pattern.permute.xlu0 1
        %1995 = vperm.xlu0 %1994, %v1984
        %v1996 = vpop.permute.xlu0 %1995
        %1997 = vset.pattern.permute.xlu0 1
        %1998 = vperm.xlu0 %1997, %v1985
        %v1999 = vpop.permute.xlu0 %1998
        %2000 = vset.pattern.permute.xlu0 1
        %2001 = vperm.xlu0 %2000, %v1986
        %v2002 = vpop.permute.xlu0 %2001
        %2003 = vset.pattern.permute.xlu0 1
        %2004 = vperm.xlu0 %2003, %v1987
        %v2005 = vpop.permute.xlu0 %2004
        %2006 = vset.pattern.permute.xlu0 1
        %2007 = vperm.xlu0 %2006, %v1988
        %v2008 = vpop.permute.xlu0 %2007
        %2009 = vset.pattern.permute.xlu0 1
        %2010 = vperm.xlu0 %2009, %v1989
        %v2011 = vpop.permute.xlu0 %2010
        %2012 = vset.pattern.permute.xlu0 1
        %2013 = vperm.xlu0 %2012, %v1990
        %v2014 = vpop.permute.xlu0 %2013
        %vm2015 = vcmp.eq.s32.totalorder %v1993, 1
        %vm2016 = vcmp.eq.s32.totalorder %v1996, 1
        %vm2017 = vcmp.eq.s32.totalorder %v1999, 1
        %vm2018 = vcmp.eq.s32.totalorder %v2002, 1
        %vm2019 = vcmp.eq.s32.totalorder %v2005, 1
        %vm2020 = vcmp.eq.s32.totalorder %v2008, 1
        %vm2021 = vcmp.eq.s32.totalorder %v2011, 1
        %vm2022 = vcmp.eq.s32.totalorder %v2014, 1
        %v2023 = vsel %vm2015, %v1967, 0.0
        %v2024 = vsel %vm2016, %v1968, 0.0
        %v2025 = vsel %vm2017, %v1969, 0.0
        %v2026 = vsel %vm2018, %v1970, 0.0
        %v2027 = vsel %vm2019, %v1971, 0.0
        %v2028 = vsel %vm2020, %v1972, 0.0
        %v2029 = vsel %vm2021, %v1973, 0.0
        %v2030 = vsel %vm2022, %v1974, 0.0
        %v2031 = vmax.f32 %v1319, %v2023
        %v2032 = vmax.f32 %v1320, %v2024
        %v2033 = vmax.f32 %v1321, %v2025
        %v2034 = vmax.f32 %v1322, %v2026
        %v2035 = vmax.f32 %v1323, %v2027
        %v2036 = vmax.f32 %v1324, %v2028
        %v2037 = vmax.f32 %v1325, %v2029
        %v2038 = vmax.f32 %v1326, %v2030
        %s2039 = scalar_lea.vmem [#allocation2], 2
        %v2040 = vld [vmem:[%s2039] ss:$8 sm:$0x7]
        %s2041 = scalar_lea.vmem [#allocation2], 26
        %v2042 = vld [vmem:[%s2041] ss:$8 sm:$0x7]
        %s2043 = scalar_lea.vmem [#allocation2], 50
        %v2044 = vld [vmem:[%s2043] ss:$8 sm:$0x7]
        %s2045 = scalar_lea.vmem [#allocation2], 74
        %v2046 = vld [vmem:[%s2045] ss:$8 sm:$0x7]
        %s2047 = scalar_lea.vmem [#allocation2], 98
        %v2048 = vld [vmem:[%s2047] ss:$8 sm:$0x7]
        %s2049 = scalar_lea.vmem [#allocation2], 122
        %v2050 = vld [vmem:[%s2049] ss:$8 sm:$0x7]
        %s2051 = scalar_lea.vmem [#allocation2], 146
        %v2052 = vld [vmem:[%s2051] ss:$8 sm:$0x7]
        %s2053 = scalar_lea.vmem [#allocation2], 170
        %v2054 = vld [vmem:[%s2053] ss:$8 sm:$0x7]
        %v2055 = vld [vmem:[%s393 + $0x2] sm:$0x1]
        %v2056 = vld [vmem:[%s393 + $0xa] sm:$0x1]
        %v2057 = vld [vmem:[%s393 + $0x12] sm:$0x1]
        %v2058 = vld [vmem:[%s393 + $0x1a] sm:$0x1]
        %v2059 = vld [vmem:[%s393 + $0x22] sm:$0x1]
        %v2060 = vld [vmem:[%s393 + $0x2a] sm:$0x1]
        %v2061 = vld [vmem:[%s393 + $0x32] sm:$0x1]
        %v2062 = vld [vmem:[%s393 + $0x3a] sm:$0x1]
        %v2071 = vrot.slane %v1968, 7
        %v2072 = vsel %vm1360, %v2071, %v1967
        %v2073 = vrot.slane %v1969, 6
        %v2074 = vsel %vm1363, %v2073, %v2072
        %v2075 = vrot.slane %v1970, 5
        %v2076 = vsel %vm1366, %v2075, %v2074
        %v2077 = vrot.slane %v1971, 4
        %v2078 = vsel %vm1369, %v2077, %v2076
        %v2079 = vrot.slane %v1972, 3
        %v2080 = vsel %vm1372, %v2079, %v2078
        %v2081 = vrot.slane %v1973, 2
        %v2082 = vsel %vm1375, %v2081, %v2080
        %v2083 = vrot.slane %v1974, 1
        %v2084 = vsel %vm1378, %v2083, %v2082
        %2086 = vmatpush.msra.mxu0 %v636
        %2087 = vmatpush.msra.mxu0 %v634
        %2088 = vmatpush.msra.mxu0 %v632
        %2089 = vmatpush.msra.mxu0 %v630
        %2090 = vmatpush.msra.mxu0 %v628
        %2091 = vmatpush.msra.mxu0 %v626
        %2092 = vmatpush.msra.mxu0 %v624
        %2093 = vmatpush.msra.mxu0 %v622
        %2094 = vmatpush.msra.mxu0 %v620
        %2095 = vmatpush.msra.mxu0 %v618
        %2096 = vmatpush.msra.mxu0 %v616
        %2097 = vmatpush.msra.mxu0 %v614
        %2098 = vmatpush.msra.mxu0 %v612
        %2099 = vmatpush.msra.mxu0 %v610
        %2100 = vmatpush.msra.mxu0 %v608
        %2101 = vmatpush.msra.mxu0 %v606
        %2102 = vmatmul.f32.gmra.mxu0 %v2084
        %v2103 = vpop.f32.mrf.mxu0
        %v2104 = vadd.f32 0.0, %v2103
        %2105 = vdwg.mxu0
        %2106 = vmatpush.msra.mxu0 %v637
        %2107 = vmatpush.msra.mxu0 %v635
        %2108 = vmatpush.msra.mxu0 %v633
        %2109 = vmatpush.msra.mxu0 %v631
        %2110 = vmatpush.msra.mxu0 %v629
        %2111 = vmatpush.msra.mxu0 %v627
        %2112 = vmatpush.msra.mxu0 %v625
        %2113 = vmatpush.msra.mxu0 %v623
        %2114 = vmatpush.msra.mxu0 %v621
        %2115 = vmatpush.msra.mxu0 %v619
        %2116 = vmatpush.msra.mxu0 %v617
        %2117 = vmatpush.msra.mxu0 %v615
        %2118 = vmatpush.msra.mxu0 %v613
        %2119 = vmatpush.msra.mxu0 %v611
        %2120 = vmatpush.msra.mxu0 %v609
        %2121 = vmatpush.msra.mxu0 %v607
        %2122 = vmatmul.f32.gmra.mxu0 %v2084
        %v2123 = vpop.f32.mrf.mxu0
        %v2124 = vadd.f32 0.0, %v2123
        %2125 = vdwg.mxu0
        %v2127 = vrot.slane %v2104, 1
        %v2128 = vrot.slane %v2104, 2
        %v2129 = vrot.slane %v2104, 3
        %v2130 = vrot.slane %v2104, 4
        %v2131 = vrot.slane %v2104, 5
        %v2132 = vrot.slane %v2104, 6
        %v2133 = vrot.slane %v2104, 7
        %v2141 = vadd.f32 %v2040, %v2104
        %v2142 = vadd.f32 %v2042, %v2127
        %v2143 = vadd.f32 %v2044, %v2128
        %v2144 = vadd.f32 %v2046, %v2129
        %v2145 = vadd.f32 %v2048, %v2130
        %v2146 = vadd.f32 %v2050, %v2131
        %v2147 = vadd.f32 %v2052, %v2132
        %v2148 = vadd.f32 %v2054, %v2133
        %v2149 = vxor.u32 %v2141, 2147483648
        %v2150 = vxor.u32 %v2142, 2147483648
        %v2151 = vxor.u32 %v2143, 2147483648
        %v2152 = vxor.u32 %v2144, 2147483648
        %v2153 = vxor.u32 %v2145, 2147483648
        %v2154 = vxor.u32 %v2146, 2147483648
        %v2155 = vxor.u32 %v2147, 2147483648
        %v2156 = vxor.u32 %v2148, 2147483648
        %v2157 = vmul.f32 %v2149, 1.442695
        %v2158 = vpow.pop %v2157
        %v2159 = vmul.f32 %v2150, 1.442695
        %v2160 = vpow.pop %v2159
        %v2161 = vmul.f32 %v2151, 1.442695
        %v2162 = vpow.pop %v2161
        %v2163 = vmul.f32 %v2152, 1.442695
        %v2164 = vpow.pop %v2163
        %v2165 = vmul.f32 %v2153, 1.442695
        %v2166 = vpow.pop %v2165
        %v2167 = vmul.f32 %v2154, 1.442695
        %v2168 = vpow.pop %v2167
        %v2169 = vmul.f32 %v2155, 1.442695
        %v2170 = vpow.pop %v2169
        %v2171 = vmul.f32 %v2156, 1.442695
        %v2172 = vpow.pop %v2171
        %v2173 = vadd.f32 %v2158, 1.0
        %v2174 = vadd.f32 %v2160, 1.0
        %v2175 = vadd.f32 %v2162, 1.0
        %v2176 = vadd.f32 %v2164, 1.0
        %v2177 = vadd.f32 %v2166, 1.0
        %v2178 = vadd.f32 %v2168, 1.0
        %v2179 = vadd.f32 %v2170, 1.0
        %v2180 = vadd.f32 %v2172, 1.0
        %v2181 = vrcp.pop %v2173
        %v2182 = vmul.f32 %v2173, %v2181
        %v2183 = vsub.f32 1.0, %v2182
        %v2184 = vmul.f32 %v2181, %v2183
        %v2185 = vadd.f32 %v2181, %v2184
        %vm2186 = vweird.f32 %v2173
        %vm2187 = vweird.f32 %v2181
        %vm2188 = vmor %vm2186, %vm2187
        %v2189 = vsel %vm2188, %v2181, %v2185
        %v2190 = vand.u32 2147483647, %v2173
        %vm2191 = vcmp.eq.f32.partialorder %v2190, 8.507059e+37
        %v2192 = vand.u32 %v2173, 2147483648
        %v2193 = vor.u32 1.1754944e-38, %v2192
        %v2194 = vsel %vm2191, %v2193, %v2189
        %v2195 = vmul.f32 1.0, %v2194
        %v2196 = vrcp.pop %v2174
        %v2197 = vmul.f32 %v2174, %v2196
        %v2198 = vsub.f32 1.0, %v2197
        %v2199 = vmul.f32 %v2196, %v2198
        %v2200 = vadd.f32 %v2196, %v2199
        %vm2201 = vweird.f32 %v2174
        %vm2202 = vweird.f32 %v2196
        %vm2203 = vmor %vm2201, %vm2202
        %v2204 = vsel %vm2203, %v2196, %v2200
        %v2205 = vand.u32 2147483647, %v2174
        %vm2206 = vcmp.eq.f32.partialorder %v2205, 8.507059e+37
        %v2207 = vand.u32 %v2174, 2147483648
        %v2208 = vor.u32 1.1754944e-38, %v2207
        %v2209 = vsel %vm2206, %v2208, %v2204
        %v2210 = vmul.f32 1.0, %v2209
        %v2211 = vrcp.pop %v2175
        %v2212 = vmul.f32 %v2175, %v2211
        %v2213 = vsub.f32 1.0, %v2212
        %v2214 = vmul.f32 %v2211, %v2213
        %v2215 = vadd.f32 %v2211, %v2214
        %vm2216 = vweird.f32 %v2175
        %vm2217 = vweird.f32 %v2211
        %vm2218 = vmor %vm2216, %vm2217
        %v2219 = vsel %vm2218, %v2211, %v2215
        %v2220 = vand.u32 2147483647, %v2175
        %vm2221 = vcmp.eq.f32.partialorder %v2220, 8.507059e+37
        %v2222 = vand.u32 %v2175, 2147483648
        %v2223 = vor.u32 1.1754944e-38, %v2222
        %v2224 = vsel %vm2221, %v2223, %v2219
        %v2225 = vmul.f32 1.0, %v2224
        %v2226 = vrcp.pop %v2176
        %v2227 = vmul.f32 %v2176, %v2226
        %v2228 = vsub.f32 1.0, %v2227
        %v2229 = vmul.f32 %v2226, %v2228
        %v2230 = vadd.f32 %v2226, %v2229
        %vm2231 = vweird.f32 %v2176
        %vm2232 = vweird.f32 %v2226
        %vm2233 = vmor %vm2231, %vm2232
        %v2234 = vsel %vm2233, %v2226, %v2230
        %v2235 = vand.u32 2147483647, %v2176
        %vm2236 = vcmp.eq.f32.partialorder %v2235, 8.507059e+37
        %v2237 = vand.u32 %v2176, 2147483648
        %v2238 = vor.u32 1.1754944e-38, %v2237
        %v2239 = vsel %vm2236, %v2238, %v2234
        %v2240 = vmul.f32 1.0, %v2239
        %v2241 = vrcp.pop %v2177
        %v2242 = vmul.f32 %v2177, %v2241
        %v2243 = vsub.f32 1.0, %v2242
        %v2244 = vmul.f32 %v2241, %v2243
        %v2245 = vadd.f32 %v2241, %v2244
        %vm2246 = vweird.f32 %v2177
        %vm2247 = vweird.f32 %v2241
        %vm2248 = vmor %vm2246, %vm2247
        %v2249 = vsel %vm2248, %v2241, %v2245
        %v2250 = vand.u32 2147483647, %v2177
        %vm2251 = vcmp.eq.f32.partialorder %v2250, 8.507059e+37
        %v2252 = vand.u32 %v2177, 2147483648
        %v2253 = vor.u32 1.1754944e-38, %v2252
        %v2254 = vsel %vm2251, %v2253, %v2249
        %v2255 = vmul.f32 1.0, %v2254
        %v2256 = vrcp.pop %v2178
        %v2257 = vmul.f32 %v2178, %v2256
        %v2258 = vsub.f32 1.0, %v2257
        %v2259 = vmul.f32 %v2256, %v2258
        %v2260 = vadd.f32 %v2256, %v2259
        %vm2261 = vweird.f32 %v2178
        %vm2262 = vweird.f32 %v2256
        %vm2263 = vmor %vm2261, %vm2262
        %v2264 = vsel %vm2263, %v2256, %v2260
        %v2265 = vand.u32 2147483647, %v2178
        %vm2266 = vcmp.eq.f32.partialorder %v2265, 8.507059e+37
        %v2267 = vand.u32 %v2178, 2147483648
        %v2268 = vor.u32 1.1754944e-38, %v2267
        %v2269 = vsel %vm2266, %v2268, %v2264
        %v2270 = vmul.f32 1.0, %v2269
        %v2271 = vrcp.pop %v2179
        %v2272 = vmul.f32 %v2179, %v2271
        %v2273 = vsub.f32 1.0, %v2272
        %v2274 = vmul.f32 %v2271, %v2273
        %v2275 = vadd.f32 %v2271, %v2274
        %vm2276 = vweird.f32 %v2179
        %vm2277 = vweird.f32 %v2271
        %vm2278 = vmor %vm2276, %vm2277
        %v2279 = vsel %vm2278, %v2271, %v2275
        %v2280 = vand.u32 2147483647, %v2179
        %vm2281 = vcmp.eq.f32.partialorder %v2280, 8.507059e+37
        %v2282 = vand.u32 %v2179, 2147483648
        %v2283 = vor.u32 1.1754944e-38, %v2282
        %v2284 = vsel %vm2281, %v2283, %v2279
        %v2285 = vmul.f32 1.0, %v2284
        %v2286 = vrcp.pop %v2180
        %v2287 = vmul.f32 %v2180, %v2286
        %v2288 = vsub.f32 1.0, %v2287
        %v2289 = vmul.f32 %v2286, %v2288
        %v2290 = vadd.f32 %v2286, %v2289
        %vm2291 = vweird.f32 %v2180
        %vm2292 = vweird.f32 %v2286
        %vm2293 = vmor %vm2291, %vm2292
        %v2294 = vsel %vm2293, %v2286, %v2290
        %v2295 = vand.u32 2147483647, %v2180
        %vm2296 = vcmp.eq.f32.partialorder %v2295, 8.507059e+37
        %v2297 = vand.u32 %v2180, 2147483648
        %v2298 = vor.u32 1.1754944e-38, %v2297
        %v2299 = vsel %vm2296, %v2298, %v2294
        %v2300 = vmul.f32 1.0, %v2299
        %v2309 = vrot.slane %v2040, 1
        %v2310 = vrot.slane %v2042, 1
        %v2311 = vrot.slane %v2044, 1
        %v2312 = vrot.slane %v2046, 1
        %v2313 = vrot.slane %v2048, 1
        %v2314 = vrot.slane %v2050, 1
        %v2315 = vrot.slane %v2052, 1
        %v2316 = vrot.slane %v2054, 1
        %v2326 = vrot.slane %v2124, 1
        %v2327 = vrot.slane %v2124, 2
        %v2328 = vrot.slane %v2124, 3
        %v2329 = vrot.slane %v2124, 4
        %v2330 = vrot.slane %v2124, 5
        %v2331 = vrot.slane %v2124, 6
        %v2332 = vrot.slane %v2124, 7
        %v2340 = vadd.f32 %v2309, %v2124
        %v2341 = vadd.f32 %v2310, %v2326
        %v2342 = vadd.f32 %v2311, %v2327
        %v2343 = vadd.f32 %v2312, %v2328
        %v2344 = vadd.f32 %v2313, %v2329
        %v2345 = vadd.f32 %v2314, %v2330
        %v2346 = vadd.f32 %v2315, %v2331
        %v2347 = vadd.f32 %v2316, %v2332
        %v2348 = vxor.u32 %v2340, 2147483648
        %v2349 = vxor.u32 %v2341, 2147483648
        %v2350 = vxor.u32 %v2342, 2147483648
        %v2351 = vxor.u32 %v2343, 2147483648
        %v2352 = vxor.u32 %v2344, 2147483648
        %v2353 = vxor.u32 %v2345, 2147483648
        %v2354 = vxor.u32 %v2346, 2147483648
        %v2355 = vxor.u32 %v2347, 2147483648
        %v2356 = vmul.f32 %v2348, 1.442695
        %v2357 = vpow.pop %v2356
        %v2358 = vmul.f32 %v2349, 1.442695
        %v2359 = vpow.pop %v2358
        %v2360 = vmul.f32 %v2350, 1.442695
        %v2361 = vpow.pop %v2360
        %v2362 = vmul.f32 %v2351, 1.442695
        %v2363 = vpow.pop %v2362
        %v2364 = vmul.f32 %v2352, 1.442695
        %v2365 = vpow.pop %v2364
        %v2366 = vmul.f32 %v2353, 1.442695
        %v2367 = vpow.pop %v2366
        %v2368 = vmul.f32 %v2354, 1.442695
        %v2369 = vpow.pop %v2368
        %v2370 = vmul.f32 %v2355, 1.442695
        %v2371 = vpow.pop %v2370
        %v2372 = vadd.f32 %v2357, 1.0
        %v2373 = vadd.f32 %v2359, 1.0
        %v2374 = vadd.f32 %v2361, 1.0
        %v2375 = vadd.f32 %v2363, 1.0
        %v2376 = vadd.f32 %v2365, 1.0
        %v2377 = vadd.f32 %v2367, 1.0
        %v2378 = vadd.f32 %v2369, 1.0
        %v2379 = vadd.f32 %v2371, 1.0
        %v2380 = vrcp.pop %v2372
        %v2381 = vmul.f32 %v2372, %v2380
        %v2382 = vsub.f32 1.0, %v2381
        %v2383 = vmul.f32 %v2380, %v2382
        %v2384 = vadd.f32 %v2380, %v2383
        %vm2385 = vweird.f32 %v2372
        %vm2386 = vweird.f32 %v2380
        %vm2387 = vmor %vm2385, %vm2386
        %v2388 = vsel %vm2387, %v2380, %v2384
        %v2389 = vand.u32 2147483647, %v2372
        %vm2390 = vcmp.eq.f32.partialorder %v2389, 8.507059e+37
        %v2391 = vand.u32 %v2372, 2147483648
        %v2392 = vor.u32 1.1754944e-38, %v2391
        %v2393 = vsel %vm2390, %v2392, %v2388
        %v2394 = vmul.f32 1.0, %v2393
        %v2395 = vrcp.pop %v2373
        %v2396 = vmul.f32 %v2373, %v2395
        %v2397 = vsub.f32 1.0, %v2396
        %v2398 = vmul.f32 %v2395, %v2397
        %v2399 = vadd.f32 %v2395, %v2398
        %vm2400 = vweird.f32 %v2373
        %vm2401 = vweird.f32 %v2395
        %vm2402 = vmor %vm2400, %vm2401
        %v2403 = vsel %vm2402, %v2395, %v2399
        %v2404 = vand.u32 2147483647, %v2373
        %vm2405 = vcmp.eq.f32.partialorder %v2404, 8.507059e+37
        %v2406 = vand.u32 %v2373, 2147483648
        %v2407 = vor.u32 1.1754944e-38, %v2406
        %v2408 = vsel %vm2405, %v2407, %v2403
        %v2409 = vmul.f32 1.0, %v2408
        %v2410 = vrcp.pop %v2374
        %v2411 = vmul.f32 %v2374, %v2410
        %v2412 = vsub.f32 1.0, %v2411
        %v2413 = vmul.f32 %v2410, %v2412
        %v2414 = vadd.f32 %v2410, %v2413
        %vm2415 = vweird.f32 %v2374
        %vm2416 = vweird.f32 %v2410
        %vm2417 = vmor %vm2415, %vm2416
        %v2418 = vsel %vm2417, %v2410, %v2414
        %v2419 = vand.u32 2147483647, %v2374
        %vm2420 = vcmp.eq.f32.partialorder %v2419, 8.507059e+37
        %v2421 = vand.u32 %v2374, 2147483648
        %v2422 = vor.u32 1.1754944e-38, %v2421
        %v2423 = vsel %vm2420, %v2422, %v2418
        %v2424 = vmul.f32 1.0, %v2423
        %v2425 = vrcp.pop %v2375
        %v2426 = vmul.f32 %v2375, %v2425
        %v2427 = vsub.f32 1.0, %v2426
        %v2428 = vmul.f32 %v2425, %v2427
        %v2429 = vadd.f32 %v2425, %v2428
        %vm2430 = vweird.f32 %v2375
        %vm2431 = vweird.f32 %v2425
        %vm2432 = vmor %vm2430, %vm2431
        %v2433 = vsel %vm2432, %v2425, %v2429
        %v2434 = vand.u32 2147483647, %v2375
        %vm2435 = vcmp.eq.f32.partialorder %v2434, 8.507059e+37
        %v2436 = vand.u32 %v2375, 2147483648
        %v2437 = vor.u32 1.1754944e-38, %v2436
        %v2438 = vsel %vm2435, %v2437, %v2433
        %v2439 = vmul.f32 1.0, %v2438
        %v2440 = vrcp.pop %v2376
        %v2441 = vmul.f32 %v2376, %v2440
        %v2442 = vsub.f32 1.0, %v2441
        %v2443 = vmul.f32 %v2440, %v2442
        %v2444 = vadd.f32 %v2440, %v2443
        %vm2445 = vweird.f32 %v2376
        %vm2446 = vweird.f32 %v2440
        %vm2447 = vmor %vm2445, %vm2446
        %v2448 = vsel %vm2447, %v2440, %v2444
        %v2449 = vand.u32 2147483647, %v2376
        %vm2450 = vcmp.eq.f32.partialorder %v2449, 8.507059e+37
        %v2451 = vand.u32 %v2376, 2147483648
        %v2452 = vor.u32 1.1754944e-38, %v2451
        %v2453 = vsel %vm2450, %v2452, %v2448
        %v2454 = vmul.f32 1.0, %v2453
        %v2455 = vrcp.pop %v2377
        %v2456 = vmul.f32 %v2377, %v2455
        %v2457 = vsub.f32 1.0, %v2456
        %v2458 = vmul.f32 %v2455, %v2457
        %v2459 = vadd.f32 %v2455, %v2458
        %vm2460 = vweird.f32 %v2377
        %vm2461 = vweird.f32 %v2455
        %vm2462 = vmor %vm2460, %vm2461
        %v2463 = vsel %vm2462, %v2455, %v2459
        %v2464 = vand.u32 2147483647, %v2377
        %vm2465 = vcmp.eq.f32.partialorder %v2464, 8.507059e+37
        %v2466 = vand.u32 %v2377, 2147483648
        %v2467 = vor.u32 1.1754944e-38, %v2466
        %v2468 = vsel %vm2465, %v2467, %v2463
        %v2469 = vmul.f32 1.0, %v2468
        %v2470 = vrcp.pop %v2378
        %v2471 = vmul.f32 %v2378, %v2470
        %v2472 = vsub.f32 1.0, %v2471
        %v2473 = vmul.f32 %v2470, %v2472
        %v2474 = vadd.f32 %v2470, %v2473
        %vm2475 = vweird.f32 %v2378
        %vm2476 = vweird.f32 %v2470
        %vm2477 = vmor %vm2475, %vm2476
        %v2478 = vsel %vm2477, %v2470, %v2474
        %v2479 = vand.u32 2147483647, %v2378
        %vm2480 = vcmp.eq.f32.partialorder %v2479, 8.507059e+37
        %v2481 = vand.u32 %v2378, 2147483648
        %v2482 = vor.u32 1.1754944e-38, %v2481
        %v2483 = vsel %vm2480, %v2482, %v2478
        %v2484 = vmul.f32 1.0, %v2483
        %v2485 = vrcp.pop %v2379
        %v2486 = vmul.f32 %v2379, %v2485
        %v2487 = vsub.f32 1.0, %v2486
        %v2488 = vmul.f32 %v2485, %v2487
        %v2489 = vadd.f32 %v2485, %v2488
        %vm2490 = vweird.f32 %v2379
        %vm2491 = vweird.f32 %v2485
        %vm2492 = vmor %vm2490, %vm2491
        %v2493 = vsel %vm2492, %v2485, %v2489
        %v2494 = vand.u32 2147483647, %v2379
        %vm2495 = vcmp.eq.f32.partialorder %v2494, 8.507059e+37
        %v2496 = vand.u32 %v2379, 2147483648
        %v2497 = vor.u32 1.1754944e-38, %v2496
        %v2498 = vsel %vm2495, %v2497, %v2493
        %v2499 = vmul.f32 1.0, %v2498
        %v2500 = vmul.f32 %v2195, %v1967
        %v2501 = vmul.f32 %v2210, %v1968
        %v2502 = vmul.f32 %v2225, %v1969
        %v2503 = vmul.f32 %v2240, %v1970
        %v2504 = vmul.f32 %v2255, %v1971
        %v2505 = vmul.f32 %v2270, %v1972
        %v2506 = vmul.f32 %v2285, %v1973
        %v2507 = vmul.f32 %v2300, %v1974
        %2516 = vst [vmem:[#allocation1] ss:$9 sm:$0xff] %v2500
        %s2517 = scalar_lea.vmem [#allocation1], 1
        %2518 = vst [vmem:[%s2517] ss:$9 sm:$0xff] %v2501
        %s2519 = scalar_lea.vmem [#allocation1], 2
        %2520 = vst [vmem:[%s2519] ss:$9 sm:$0xff] %v2502
        %s2521 = scalar_lea.vmem [#allocation1], 3
        %2522 = vst [vmem:[%s2521] ss:$9 sm:$0xff] %v2503
        %s2523 = scalar_lea.vmem [#allocation1], 4
        %2524 = vst [vmem:[%s2523] ss:$9 sm:$0xff] %v2504
        %s2525 = scalar_lea.vmem [#allocation1], 5
        %2526 = vst [vmem:[%s2525] ss:$9 sm:$0xff] %v2505
        %s2527 = scalar_lea.vmem [#allocation1], 6
        %2528 = vst [vmem:[%s2527] ss:$9 sm:$0xff] %v2506
        %s2529 = scalar_lea.vmem [#allocation1], 7
        %2530 = vst [vmem:[%s2529] ss:$9 sm:$0xff] %v2507
        %v2531 = vld [vmem:[#allocation1] sm:$0xff]
        %2533 = vmatpush.msra.mxu0 %v653
        %2534 = vmatpush.msra.mxu0 %v652
        %2535 = vmatpush.msra.mxu0 %v651
        %2536 = vmatpush.msra.mxu0 %v650
        %2537 = vmatpush.msra.mxu0 %v649
        %2538 = vmatpush.msra.mxu0 %v648
        %2539 = vmatpush.msra.mxu0 %v647
        %2540 = vmatpush.msra.mxu0 %v646
        %2541 = vmatpush.msra.mxu0 %v645
        %2542 = vmatpush.msra.mxu0 %v644
        %2543 = vmatpush.msra.mxu0 %v643
        %2544 = vmatpush.msra.mxu0 %v642
        %2545 = vmatpush.msra.mxu0 %v641
        %2546 = vmatpush.msra.mxu0 %v640
        %2547 = vmatpush.msra.mxu0 %v639
        %2548 = vmatpush.msra.mxu0 %v638
        %2549 = vmatmul.f32.gmra.mxu0 %v2531
        %v2550 = vpop.f32.mrf.mxu0
        %v2551 = vadd.f32 0.0, %v2550
        %2552 = vdwg.mxu0
        %v2553 = vrot.slane %v2040, 2
        %v2554 = vrot.slane %v2042, 2
        %v2555 = vrot.slane %v2044, 2
        %v2556 = vrot.slane %v2046, 2
        %v2557 = vrot.slane %v2048, 2
        %v2558 = vrot.slane %v2050, 2
        %v2559 = vrot.slane %v2052, 2
        %v2560 = vrot.slane %v2054, 2
        %v2570 = vrot.slane %v2551, 1
        %v2571 = vrot.slane %v2551, 2
        %v2572 = vrot.slane %v2551, 3
        %v2573 = vrot.slane %v2551, 4
        %v2574 = vrot.slane %v2551, 5
        %v2575 = vrot.slane %v2551, 6
        %v2576 = vrot.slane %v2551, 7
        %v2584 = vadd.f32 %v2553, %v2551
        %v2585 = vadd.f32 %v2554, %v2570
        %v2586 = vadd.f32 %v2555, %v2571
        %v2587 = vadd.f32 %v2556, %v2572
        %v2588 = vadd.f32 %v2557, %v2573
        %v2589 = vadd.f32 %v2558, %v2574
        %v2590 = vadd.f32 %v2559, %v2575
        %v2591 = vadd.f32 %v2560, %v2576
        %v2592 = vtanh.pop %v2584
        %v2593 = vtanh.pop %v2585
        %v2594 = vtanh.pop %v2586
        %v2595 = vtanh.pop %v2587
        %v2596 = vtanh.pop %v2588
        %v2597 = vtanh.pop %v2589
        %v2598 = vtanh.pop %v2590
        %v2599 = vtanh.pop %v2591
        %2601 = vset.pattern.permute.xlu0 0
        %2602 = vperm.xlu0 %2601, %v2055
        %v2603 = vpop.permute.xlu0 %2602
        %2606 = vset.pattern.permute.xlu0 0
        %2607 = vperm.xlu0 %2606, %v2056
        %v2608 = vpop.permute.xlu0 %2607
        %2611 = vset.pattern.permute.xlu0 0
        %2612 = vperm.xlu0 %2611, %v2057
        %v2613 = vpop.permute.xlu0 %2612
        %2616 = vset.pattern.permute.xlu0 0
        %2617 = vperm.xlu0 %2616, %v2058
        %v2618 = vpop.permute.xlu0 %2617
        %2621 = vset.pattern.permute.xlu0 0
        %2622 = vperm.xlu0 %2621, %v2059
        %v2623 = vpop.permute.xlu0 %2622
        %2626 = vset.pattern.permute.xlu0 0
        %2627 = vperm.xlu0 %2626, %v2060
        %v2628 = vpop.permute.xlu0 %2627
        %2631 = vset.pattern.permute.xlu0 0
        %2632 = vperm.xlu0 %2631, %v2061
        %v2633 = vpop.permute.xlu0 %2632
        %2636 = vset.pattern.permute.xlu0 0
        %2637 = vperm.xlu0 %2636, %v2062
        %v2638 = vpop.permute.xlu0 %2637
        %v2640 = vmul.f32 %v2603, %v2394
        %v2641 = vmul.f32 %v2608, %v2409
        %v2642 = vmul.f32 %v2613, %v2424
        %v2643 = vmul.f32 %v2618, %v2439
        %v2644 = vmul.f32 %v2623, %v2454
        %v2645 = vmul.f32 %v2628, %v2469
        %v2646 = vmul.f32 %v2633, %v2484
        %v2647 = vmul.f32 %v2638, %v2499
        %v2648 = vsub.f32 1.0, %v2640
        %v2649 = vsub.f32 1.0, %v2641
        %v2650 = vsub.f32 1.0, %v2642
        %v2651 = vsub.f32 1.0, %v2643
        %v2652 = vsub.f32 1.0, %v2644
        %v2653 = vsub.f32 1.0, %v2645
        %v2654 = vsub.f32 1.0, %v2646
        %v2655 = vsub.f32 1.0, %v2647
        %v2656 = vmul.f32 %v2648, %v1967
        %v2657 = vmul.f32 %v2649, %v1968
        %v2658 = vmul.f32 %v2650, %v1969
        %v2659 = vmul.f32 %v2651, %v1970
        %v2660 = vmul.f32 %v2652, %v1971
        %v2661 = vmul.f32 %v2653, %v1972
        %v2662 = vmul.f32 %v2654, %v1973
        %v2663 = vmul.f32 %v2655, %v1974
        %v2664 = vmul.f32 %v2640, %v2592
        %v2665 = vmul.f32 %v2641, %v2593
        %v2666 = vmul.f32 %v2642, %v2594
        %v2667 = vmul.f32 %v2643, %v2595
        %v2668 = vmul.f32 %v2644, %v2596
        %v2669 = vmul.f32 %v2645, %v2597
        %v2670 = vmul.f32 %v2646, %v2598
        %v2671 = vmul.f32 %v2647, %v2599
        %v2672 = vadd.f32 %v2656, %v2664
        %v2673 = vadd.f32 %v2657, %v2665
        %v2674 = vadd.f32 %v2658, %v2666
        %v2675 = vadd.f32 %v2659, %v2667
        %v2676 = vadd.f32 %v2660, %v2668
        %v2677 = vadd.f32 %v2661, %v2669
        %v2678 = vadd.f32 %v2662, %v2670
        %v2679 = vadd.f32 %v2663, %v2671
        %vm2680 = vcmp.ne.f32.partialorder %v2055, 0.0
        %vm2681 = vcmp.ne.f32.partialorder %v2056, 0.0
        %vm2682 = vcmp.ne.f32.partialorder %v2057, 0.0
        %vm2683 = vcmp.ne.f32.partialorder %v2058, 0.0
        %vm2684 = vcmp.ne.f32.partialorder %v2059, 0.0
        %vm2685 = vcmp.ne.f32.partialorder %v2060, 0.0
        %vm2686 = vcmp.ne.f32.partialorder %v2061, 0.0
        %vm2687 = vcmp.ne.f32.partialorder %v2062, 0.0
        %v2688 = vsel %vm2680, 1, 0
        %v2689 = vsel %vm2681, 1, 0
        %v2690 = vsel %vm2682, 1, 0
        %v2691 = vsel %vm2683, 1, 0
        %v2692 = vsel %vm2684, 1, 0
        %v2693 = vsel %vm2685, 1, 0
        %v2694 = vsel %vm2686, 1, 0
        %v2695 = vsel %vm2687, 1, 0
        %2696 = vset.pattern.permute.xlu0 1
        %2697 = vperm.xlu0 %2696, %v2688
        %v2698 = vpop.permute.xlu0 %2697
        %2699 = vset.pattern.permute.xlu0 1
        %2700 = vperm.xlu0 %2699, %v2689
        %v2701 = vpop.permute.xlu0 %2700
        %2702 = vset.pattern.permute.xlu0 1
        %2703 = vperm.xlu0 %2702, %v2690
        %v2704 = vpop.permute.xlu0 %2703
        %2705 = vset.pattern.permute.xlu0 1
        %2706 = vperm.xlu0 %2705, %v2691
        %v2707 = vpop.permute.xlu0 %2706
        %2708 = vset.pattern.permute.xlu0 1
        %2709 = vperm.xlu0 %2708, %v2692
        %v2710 = vpop.permute.xlu0 %2709
        %2711 = vset.pattern.permute.xlu0 1
        %2712 = vperm.xlu0 %2711, %v2693
        %v2713 = vpop.permute.xlu0 %2712
        %2714 = vset.pattern.permute.xlu0 1
        %2715 = vperm.xlu0 %2714, %v2694
        %v2716 = vpop.permute.xlu0 %2715
        %2717 = vset.pattern.permute.xlu0 1
        %2718 = vperm.xlu0 %2717, %v2695
        %v2719 = vpop.permute.xlu0 %2718
        %vm2720 = vcmp.eq.s32.totalorder %v2698, 1
        %vm2721 = vcmp.eq.s32.totalorder %v2701, 1
        %vm2722 = vcmp.eq.s32.totalorder %v2704, 1
        %vm2723 = vcmp.eq.s32.totalorder %v2707, 1
        %vm2724 = vcmp.eq.s32.totalorder %v2710, 1
        %vm2725 = vcmp.eq.s32.totalorder %v2713, 1
        %vm2726 = vcmp.eq.s32.totalorder %v2716, 1
        %vm2727 = vcmp.eq.s32.totalorder %v2719, 1
        %v2728 = vsel %vm2720, %v2672, 0.0
        %v2729 = vsel %vm2721, %v2673, 0.0
        %v2730 = vsel %vm2722, %v2674, 0.0
        %v2731 = vsel %vm2723, %v2675, 0.0
        %v2732 = vsel %vm2724, %v2676, 0.0
        %v2733 = vsel %vm2725, %v2677, 0.0
        %v2734 = vsel %vm2726, %v2678, 0.0
        %v2735 = vsel %vm2727, %v2679, 0.0
        %v2736 = vmax.f32 %v2031, %v2728
        %v2737 = vmax.f32 %v2032, %v2729
        %v2738 = vmax.f32 %v2033, %v2730
        %v2739 = vmax.f32 %v2034, %v2731
        %v2740 = vmax.f32 %v2035, %v2732
        %v2741 = vmax.f32 %v2036, %v2733
        %v2742 = vmax.f32 %v2037, %v2734
        %v2743 = vmax.f32 %v2038, %v2735
        %s2744 = scalar_lea.vmem [#allocation2], 3
        %v2745 = vld [vmem:[%s2744] ss:$8 sm:$0x7]
        %s2746 = scalar_lea.vmem [#allocation2], 27
        %v2747 = vld [vmem:[%s2746] ss:$8 sm:$0x7]
        %s2748 = scalar_lea.vmem [#allocation2], 51
        %v2749 = vld [vmem:[%s2748] ss:$8 sm:$0x7]
        %s2750 = scalar_lea.vmem [#allocation2], 75
        %v2751 = vld [vmem:[%s2750] ss:$8 sm:$0x7]
        %s2752 = scalar_lea.vmem [#allocation2], 99
        %v2753 = vld [vmem:[%s2752] ss:$8 sm:$0x7]
        %s2754 = scalar_lea.vmem [#allocation2], 123
        %v2755 = vld [vmem:[%s2754] ss:$8 sm:$0x7]
        %s2756 = scalar_lea.vmem [#allocation2], 147
        %v2757 = vld [vmem:[%s2756] ss:$8 sm:$0x7]
        %s2758 = scalar_lea.vmem [#allocation2], 171
        %v2759 = vld [vmem:[%s2758] ss:$8 sm:$0x7]
        %v2760 = vld [vmem:[%s393 + $0x3] sm:$0x1]
        %v2761 = vld [vmem:[%s393 + $0xb] sm:$0x1]
        %v2762 = vld [vmem:[%s393 + $0x13] sm:$0x1]
        %v2763 = vld [vmem:[%s393 + $0x1b] sm:$0x1]
        %v2764 = vld [vmem:[%s393 + $0x23] sm:$0x1]
        %v2765 = vld [vmem:[%s393 + $0x2b] sm:$0x1]
        %v2766 = vld [vmem:[%s393 + $0x33] sm:$0x1]
        %v2767 = vld [vmem:[%s393 + $0x3b] sm:$0x1]
        %v2776 = vrot.slane %v2673, 7
        %v2777 = vsel %vm1360, %v2776, %v2672
        %v2778 = vrot.slane %v2674, 6
        %v2779 = vsel %vm1363, %v2778, %v2777
        %v2780 = vrot.slane %v2675, 5
        %v2781 = vsel %vm1366, %v2780, %v2779
        %v2782 = vrot.slane %v2676, 4
        %v2783 = vsel %vm1369, %v2782, %v2781
        %v2784 = vrot.slane %v2677, 3
        %v2785 = vsel %vm1372, %v2784, %v2783
        %v2786 = vrot.slane %v2678, 2
        %v2787 = vsel %vm1375, %v2786, %v2785
        %v2788 = vrot.slane %v2679, 1
        %v2789 = vsel %vm1378, %v2788, %v2787
        %2791 = vmatpush.msra.mxu0 %v636
        %2792 = vmatpush.msra.mxu0 %v634
        %2793 = vmatpush.msra.mxu0 %v632
        %2794 = vmatpush.msra.mxu0 %v630
        %2795 = vmatpush.msra.mxu0 %v628
        %2796 = vmatpush.msra.mxu0 %v626
        %2797 = vmatpush.msra.mxu0 %v624
        %2798 = vmatpush.msra.mxu0 %v622
        %2799 = vmatpush.msra.mxu0 %v620
        %2800 = vmatpush.msra.mxu0 %v618
        %2801 = vmatpush.msra.mxu0 %v616
        %2802 = vmatpush.msra.mxu0 %v614
        %2803 = vmatpush.msra.mxu0 %v612
        %2804 = vmatpush.msra.mxu0 %v610
        %2805 = vmatpush.msra.mxu0 %v608
        %2806 = vmatpush.msra.mxu0 %v606
        %2807 = vmatmul.f32.gmra.mxu0 %v2789
        %v2808 = vpop.f32.mrf.mxu0
        %v2809 = vadd.f32 0.0, %v2808
        %2810 = vdwg.mxu0
        %2811 = vmatpush.msra.mxu0 %v637
        %2812 = vmatpush.msra.mxu0 %v635
        %2813 = vmatpush.msra.mxu0 %v633
        %2814 = vmatpush.msra.mxu0 %v631
        %2815 = vmatpush.msra.mxu0 %v629
        %2816 = vmatpush.msra.mxu0 %v627
        %2817 = vmatpush.msra.mxu0 %v625
        %2818 = vmatpush.msra.mxu0 %v623
        %2819 = vmatpush.msra.mxu0 %v621
        %2820 = vmatpush.msra.mxu0 %v619
        %2821 = vmatpush.msra.mxu0 %v617
        %2822 = vmatpush.msra.mxu0 %v615
        %2823 = vmatpush.msra.mxu0 %v613
        %2824 = vmatpush.msra.mxu0 %v611
        %2825 = vmatpush.msra.mxu0 %v609
        %2826 = vmatpush.msra.mxu0 %v607
        %2827 = vmatmul.f32.gmra.mxu0 %v2789
        %v2828 = vpop.f32.mrf.mxu0
        %v2829 = vadd.f32 0.0, %v2828
        %2830 = vdwg.mxu0
        %v2832 = vrot.slane %v2809, 1
        %v2833 = vrot.slane %v2809, 2
        %v2834 = vrot.slane %v2809, 3
        %v2835 = vrot.slane %v2809, 4
        %v2836 = vrot.slane %v2809, 5
        %v2837 = vrot.slane %v2809, 6
        %v2838 = vrot.slane %v2809, 7
        %v2846 = vadd.f32 %v2745, %v2809
        %v2847 = vadd.f32 %v2747, %v2832
        %v2848 = vadd.f32 %v2749, %v2833
        %v2849 = vadd.f32 %v2751, %v2834
        %v2850 = vadd.f32 %v2753, %v2835
        %v2851 = vadd.f32 %v2755, %v2836
        %v2852 = vadd.f32 %v2757, %v2837
        %v2853 = vadd.f32 %v2759, %v2838
        %v2854 = vxor.u32 %v2846, 2147483648
        %v2855 = vxor.u32 %v2847, 2147483648
        %v2856 = vxor.u32 %v2848, 2147483648
        %v2857 = vxor.u32 %v2849, 2147483648
        %v2858 = vxor.u32 %v2850, 2147483648
        %v2859 = vxor.u32 %v2851, 2147483648
        %v2860 = vxor.u32 %v2852, 2147483648
        %v2861 = vxor.u32 %v2853, 2147483648
        %v2862 = vmul.f32 %v2854, 1.442695
        %v2863 = vpow.pop %v2862
        %v2864 = vmul.f32 %v2855, 1.442695
        %v2865 = vpow.pop %v2864
        %v2866 = vmul.f32 %v2856, 1.442695
        %v2867 = vpow.pop %v2866
        %v2868 = vmul.f32 %v2857, 1.442695
        %v2869 = vpow.pop %v2868
        %v2870 = vmul.f32 %v2858, 1.442695
        %v2871 = vpow.pop %v2870
        %v2872 = vmul.f32 %v2859, 1.442695
        %v2873 = vpow.pop %v2872
        %v2874 = vmul.f32 %v2860, 1.442695
        %v2875 = vpow.pop %v2874
        %v2876 = vmul.f32 %v2861, 1.442695
        %v2877 = vpow.pop %v2876
        %v2878 = vadd.f32 %v2863, 1.0
        %v2879 = vadd.f32 %v2865, 1.0
        %v2880 = vadd.f32 %v2867, 1.0
        %v2881 = vadd.f32 %v2869, 1.0
        %v2882 = vadd.f32 %v2871, 1.0
        %v2883 = vadd.f32 %v2873, 1.0
        %v2884 = vadd.f32 %v2875, 1.0
        %v2885 = vadd.f32 %v2877, 1.0
        %v2886 = vrcp.pop %v2878
        %v2887 = vmul.f32 %v2878, %v2886
        %v2888 = vsub.f32 1.0, %v2887
        %v2889 = vmul.f32 %v2886, %v2888
        %v2890 = vadd.f32 %v2886, %v2889
        %vm2891 = vweird.f32 %v2878
        %vm2892 = vweird.f32 %v2886
        %vm2893 = vmor %vm2891, %vm2892
        %v2894 = vsel %vm2893, %v2886, %v2890
        %v2895 = vand.u32 2147483647, %v2878
        %vm2896 = vcmp.eq.f32.partialorder %v2895, 8.507059e+37
        %v2897 = vand.u32 %v2878, 2147483648
        %v2898 = vor.u32 1.1754944e-38, %v2897
        %v2899 = vsel %vm2896, %v2898, %v2894
        %v2900 = vmul.f32 1.0, %v2899
        %v2901 = vrcp.pop %v2879
        %v2902 = vmul.f32 %v2879, %v2901
        %v2903 = vsub.f32 1.0, %v2902
        %v2904 = vmul.f32 %v2901, %v2903
        %v2905 = vadd.f32 %v2901, %v2904
        %vm2906 = vweird.f32 %v2879
        %vm2907 = vweird.f32 %v2901
        %vm2908 = vmor %vm2906, %vm2907
        %v2909 = vsel %vm2908, %v2901, %v2905
        %v2910 = vand.u32 2147483647, %v2879
        %vm2911 = vcmp.eq.f32.partialorder %v2910, 8.507059e+37
        %v2912 = vand.u32 %v2879, 2147483648
        %v2913 = vor.u32 1.1754944e-38, %v2912
        %v2914 = vsel %vm2911, %v2913, %v2909
        %v2915 = vmul.f32 1.0, %v2914
        %v2916 = vrcp.pop %v2880
        %v2917 = vmul.f32 %v2880, %v2916
        %v2918 = vsub.f32 1.0, %v2917
        %v2919 = vmul.f32 %v2916, %v2918
        %v2920 = vadd.f32 %v2916, %v2919
        %vm2921 = vweird.f32 %v2880
        %vm2922 = vweird.f32 %v2916
        %vm2923 = vmor %vm2921, %vm2922
        %v2924 = vsel %vm2923, %v2916, %v2920
        %v2925 = vand.u32 2147483647, %v2880
        %vm2926 = vcmp.eq.f32.partialorder %v2925, 8.507059e+37
        %v2927 = vand.u32 %v2880, 2147483648
        %v2928 = vor.u32 1.1754944e-38, %v2927
        %v2929 = vsel %vm2926, %v2928, %v2924
        %v2930 = vmul.f32 1.0, %v2929
        %v2931 = vrcp.pop %v2881
        %v2932 = vmul.f32 %v2881, %v2931
        %v2933 = vsub.f32 1.0, %v2932
        %v2934 = vmul.f32 %v2931, %v2933
        %v2935 = vadd.f32 %v2931, %v2934
        %vm2936 = vweird.f32 %v2881
        %vm2937 = vweird.f32 %v2931
        %vm2938 = vmor %vm2936, %vm2937
        %v2939 = vsel %vm2938, %v2931, %v2935
        %v2940 = vand.u32 2147483647, %v2881
        %vm2941 = vcmp.eq.f32.partialorder %v2940, 8.507059e+37
        %v2942 = vand.u32 %v2881, 2147483648
        %v2943 = vor.u32 1.1754944e-38, %v2942
        %v2944 = vsel %vm2941, %v2943, %v2939
        %v2945 = vmul.f32 1.0, %v2944
        %v2946 = vrcp.pop %v2882
        %v2947 = vmul.f32 %v2882, %v2946
        %v2948 = vsub.f32 1.0, %v2947
        %v2949 = vmul.f32 %v2946, %v2948
        %v2950 = vadd.f32 %v2946, %v2949
        %vm2951 = vweird.f32 %v2882
        %vm2952 = vweird.f32 %v2946
        %vm2953 = vmor %vm2951, %vm2952
        %v2954 = vsel %vm2953, %v2946, %v2950
        %v2955 = vand.u32 2147483647, %v2882
        %vm2956 = vcmp.eq.f32.partialorder %v2955, 8.507059e+37
        %v2957 = vand.u32 %v2882, 2147483648
        %v2958 = vor.u32 1.1754944e-38, %v2957
        %v2959 = vsel %vm2956, %v2958, %v2954
        %v2960 = vmul.f32 1.0, %v2959
        %v2961 = vrcp.pop %v2883
        %v2962 = vmul.f32 %v2883, %v2961
        %v2963 = vsub.f32 1.0, %v2962
        %v2964 = vmul.f32 %v2961, %v2963
        %v2965 = vadd.f32 %v2961, %v2964
        %vm2966 = vweird.f32 %v2883
        %vm2967 = vweird.f32 %v2961
        %vm2968 = vmor %vm2966, %vm2967
        %v2969 = vsel %vm2968, %v2961, %v2965
        %v2970 = vand.u32 2147483647, %v2883
        %vm2971 = vcmp.eq.f32.partialorder %v2970, 8.507059e+37
        %v2972 = vand.u32 %v2883, 2147483648
        %v2973 = vor.u32 1.1754944e-38, %v2972
        %v2974 = vsel %vm2971, %v2973, %v2969
        %v2975 = vmul.f32 1.0, %v2974
        %v2976 = vrcp.pop %v2884
        %v2977 = vmul.f32 %v2884, %v2976
        %v2978 = vsub.f32 1.0, %v2977
        %v2979 = vmul.f32 %v2976, %v2978
        %v2980 = vadd.f32 %v2976, %v2979
        %vm2981 = vweird.f32 %v2884
        %vm2982 = vweird.f32 %v2976
        %vm2983 = vmor %vm2981, %vm2982
        %v2984 = vsel %vm2983, %v2976, %v2980
        %v2985 = vand.u32 2147483647, %v2884
        %vm2986 = vcmp.eq.f32.partialorder %v2985, 8.507059e+37
        %v2987 = vand.u32 %v2884, 2147483648
        %v2988 = vor.u32 1.1754944e-38, %v2987
        %v2989 = vsel %vm2986, %v2988, %v2984
        %v2990 = vmul.f32 1.0, %v2989
        %v2991 = vrcp.pop %v2885
        %v2992 = vmul.f32 %v2885, %v2991
        %v2993 = vsub.f32 1.0, %v2992
        %v2994 = vmul.f32 %v2991, %v2993
        %v2995 = vadd.f32 %v2991, %v2994
        %vm2996 = vweird.f32 %v2885
        %vm2997 = vweird.f32 %v2991
        %vm2998 = vmor %vm2996, %vm2997
        %v2999 = vsel %vm2998, %v2991, %v2995
        %v3000 = vand.u32 2147483647, %v2885
        %vm3001 = vcmp.eq.f32.partialorder %v3000, 8.507059e+37
        %v3002 = vand.u32 %v2885, 2147483648
        %v3003 = vor.u32 1.1754944e-38, %v3002
        %v3004 = vsel %vm3001, %v3003, %v2999
        %v3005 = vmul.f32 1.0, %v3004
        %v3014 = vrot.slane %v2745, 1
        %v3015 = vrot.slane %v2747, 1
        %v3016 = vrot.slane %v2749, 1
        %v3017 = vrot.slane %v2751, 1
        %v3018 = vrot.slane %v2753, 1
        %v3019 = vrot.slane %v2755, 1
        %v3020 = vrot.slane %v2757, 1
        %v3021 = vrot.slane %v2759, 1
        %v3031 = vrot.slane %v2829, 1
        %v3032 = vrot.slane %v2829, 2
        %v3033 = vrot.slane %v2829, 3
        %v3034 = vrot.slane %v2829, 4
        %v3035 = vrot.slane %v2829, 5
        %v3036 = vrot.slane %v2829, 6
        %v3037 = vrot.slane %v2829, 7
        %v3045 = vadd.f32 %v3014, %v2829
        %v3046 = vadd.f32 %v3015, %v3031
        %v3047 = vadd.f32 %v3016, %v3032
        %v3048 = vadd.f32 %v3017, %v3033
        %v3049 = vadd.f32 %v3018, %v3034
        %v3050 = vadd.f32 %v3019, %v3035
        %v3051 = vadd.f32 %v3020, %v3036
        %v3052 = vadd.f32 %v3021, %v3037
        %v3053 = vxor.u32 %v3045, 2147483648
        %v3054 = vxor.u32 %v3046, 2147483648
        %v3055 = vxor.u32 %v3047, 2147483648
        %v3056 = vxor.u32 %v3048, 2147483648
        %v3057 = vxor.u32 %v3049, 2147483648
        %v3058 = vxor.u32 %v3050, 2147483648
        %v3059 = vxor.u32 %v3051, 2147483648
        %v3060 = vxor.u32 %v3052, 2147483648
        %v3061 = vmul.f32 %v3053, 1.442695
        %v3062 = vpow.pop %v3061
        %v3063 = vmul.f32 %v3054, 1.442695
        %v3064 = vpow.pop %v3063
        %v3065 = vmul.f32 %v3055, 1.442695
        %v3066 = vpow.pop %v3065
        %v3067 = vmul.f32 %v3056, 1.442695
        %v3068 = vpow.pop %v3067
        %v3069 = vmul.f32 %v3057, 1.442695
        %v3070 = vpow.pop %v3069
        %v3071 = vmul.f32 %v3058, 1.442695
        %v3072 = vpow.pop %v3071
        %v3073 = vmul.f32 %v3059, 1.442695
        %v3074 = vpow.pop %v3073
        %v3075 = vmul.f32 %v3060, 1.442695
        %v3076 = vpow.pop %v3075
        %v3077 = vadd.f32 %v3062, 1.0
        %v3078 = vadd.f32 %v3064, 1.0
        %v3079 = vadd.f32 %v3066, 1.0
        %v3080 = vadd.f32 %v3068, 1.0
        %v3081 = vadd.f32 %v3070, 1.0
        %v3082 = vadd.f32 %v3072, 1.0
        %v3083 = vadd.f32 %v3074, 1.0
        %v3084 = vadd.f32 %v3076, 1.0
        %v3085 = vrcp.pop %v3077
        %v3086 = vmul.f32 %v3077, %v3085
        %v3087 = vsub.f32 1.0, %v3086
        %v3088 = vmul.f32 %v3085, %v3087
        %v3089 = vadd.f32 %v3085, %v3088
        %vm3090 = vweird.f32 %v3077
        %vm3091 = vweird.f32 %v3085
        %vm3092 = vmor %vm3090, %vm3091
        %v3093 = vsel %vm3092, %v3085, %v3089
        %v3094 = vand.u32 2147483647, %v3077
        %vm3095 = vcmp.eq.f32.partialorder %v3094, 8.507059e+37
        %v3096 = vand.u32 %v3077, 2147483648
        %v3097 = vor.u32 1.1754944e-38, %v3096
        %v3098 = vsel %vm3095, %v3097, %v3093
        %v3099 = vmul.f32 1.0, %v3098
        %v3100 = vrcp.pop %v3078
        %v3101 = vmul.f32 %v3078, %v3100
        %v3102 = vsub.f32 1.0, %v3101
        %v3103 = vmul.f32 %v3100, %v3102
        %v3104 = vadd.f32 %v3100, %v3103
        %vm3105 = vweird.f32 %v3078
        %vm3106 = vweird.f32 %v3100
        %vm3107 = vmor %vm3105, %vm3106
        %v3108 = vsel %vm3107, %v3100, %v3104
        %v3109 = vand.u32 2147483647, %v3078
        %vm3110 = vcmp.eq.f32.partialorder %v3109, 8.507059e+37
        %v3111 = vand.u32 %v3078, 2147483648
        %v3112 = vor.u32 1.1754944e-38, %v3111
        %v3113 = vsel %vm3110, %v3112, %v3108
        %v3114 = vmul.f32 1.0, %v3113
        %v3115 = vrcp.pop %v3079
        %v3116 = vmul.f32 %v3079, %v3115
        %v3117 = vsub.f32 1.0, %v3116
        %v3118 = vmul.f32 %v3115, %v3117
        %v3119 = vadd.f32 %v3115, %v3118
        %vm3120 = vweird.f32 %v3079
        %vm3121 = vweird.f32 %v3115
        %vm3122 = vmor %vm3120, %vm3121
        %v3123 = vsel %vm3122, %v3115, %v3119
        %v3124 = vand.u32 2147483647, %v3079
        %vm3125 = vcmp.eq.f32.partialorder %v3124, 8.507059e+37
        %v3126 = vand.u32 %v3079, 2147483648
        %v3127 = vor.u32 1.1754944e-38, %v3126
        %v3128 = vsel %vm3125, %v3127, %v3123
        %v3129 = vmul.f32 1.0, %v3128
        %v3130 = vrcp.pop %v3080
        %v3131 = vmul.f32 %v3080, %v3130
        %v3132 = vsub.f32 1.0, %v3131
        %v3133 = vmul.f32 %v3130, %v3132
        %v3134 = vadd.f32 %v3130, %v3133
        %vm3135 = vweird.f32 %v3080
        %vm3136 = vweird.f32 %v3130
        %vm3137 = vmor %vm3135, %vm3136
        %v3138 = vsel %vm3137, %v3130, %v3134
        %v3139 = vand.u32 2147483647, %v3080
        %vm3140 = vcmp.eq.f32.partialorder %v3139, 8.507059e+37
        %v3141 = vand.u32 %v3080, 2147483648
        %v3142 = vor.u32 1.1754944e-38, %v3141
        %v3143 = vsel %vm3140, %v3142, %v3138
        %v3144 = vmul.f32 1.0, %v3143
        %v3145 = vrcp.pop %v3081
        %v3146 = vmul.f32 %v3081, %v3145
        %v3147 = vsub.f32 1.0, %v3146
        %v3148 = vmul.f32 %v3145, %v3147
        %v3149 = vadd.f32 %v3145, %v3148
        %vm3150 = vweird.f32 %v3081
        %vm3151 = vweird.f32 %v3145
        %vm3152 = vmor %vm3150, %vm3151
        %v3153 = vsel %vm3152, %v3145, %v3149
        %v3154 = vand.u32 2147483647, %v3081
        %vm3155 = vcmp.eq.f32.partialorder %v3154, 8.507059e+37
        %v3156 = vand.u32 %v3081, 2147483648
        %v3157 = vor.u32 1.1754944e-38, %v3156
        %v3158 = vsel %vm3155, %v3157, %v3153
        %v3159 = vmul.f32 1.0, %v3158
        %v3160 = vrcp.pop %v3082
        %v3161 = vmul.f32 %v3082, %v3160
        %v3162 = vsub.f32 1.0, %v3161
        %v3163 = vmul.f32 %v3160, %v3162
        %v3164 = vadd.f32 %v3160, %v3163
        %vm3165 = vweird.f32 %v3082
        %vm3166 = vweird.f32 %v3160
        %vm3167 = vmor %vm3165, %vm3166
        %v3168 = vsel %vm3167, %v3160, %v3164
        %v3169 = vand.u32 2147483647, %v3082
        %vm3170 = vcmp.eq.f32.partialorder %v3169, 8.507059e+37
        %v3171 = vand.u32 %v3082, 2147483648
        %v3172 = vor.u32 1.1754944e-38, %v3171
        %v3173 = vsel %vm3170, %v3172, %v3168
        %v3174 = vmul.f32 1.0, %v3173
        %v3175 = vrcp.pop %v3083
        %v3176 = vmul.f32 %v3083, %v3175
        %v3177 = vsub.f32 1.0, %v3176
        %v3178 = vmul.f32 %v3175, %v3177
        %v3179 = vadd.f32 %v3175, %v3178
        %vm3180 = vweird.f32 %v3083
        %vm3181 = vweird.f32 %v3175
        %vm3182 = vmor %vm3180, %vm3181
        %v3183 = vsel %vm3182, %v3175, %v3179
        %v3184 = vand.u32 2147483647, %v3083
        %vm3185 = vcmp.eq.f32.partialorder %v3184, 8.507059e+37
        %v3186 = vand.u32 %v3083, 2147483648
        %v3187 = vor.u32 1.1754944e-38, %v3186
        %v3188 = vsel %vm3185, %v3187, %v3183
        %v3189 = vmul.f32 1.0, %v3188
        %v3190 = vrcp.pop %v3084
        %v3191 = vmul.f32 %v3084, %v3190
        %v3192 = vsub.f32 1.0, %v3191
        %v3193 = vmul.f32 %v3190, %v3192
        %v3194 = vadd.f32 %v3190, %v3193
        %vm3195 = vweird.f32 %v3084
        %vm3196 = vweird.f32 %v3190
        %vm3197 = vmor %vm3195, %vm3196
        %v3198 = vsel %vm3197, %v3190, %v3194
        %v3199 = vand.u32 2147483647, %v3084
        %vm3200 = vcmp.eq.f32.partialorder %v3199, 8.507059e+37
        %v3201 = vand.u32 %v3084, 2147483648
        %v3202 = vor.u32 1.1754944e-38, %v3201
        %v3203 = vsel %vm3200, %v3202, %v3198
        %v3204 = vmul.f32 1.0, %v3203
        %v3205 = vmul.f32 %v2900, %v2672
        %v3206 = vmul.f32 %v2915, %v2673
        %v3207 = vmul.f32 %v2930, %v2674
        %v3208 = vmul.f32 %v2945, %v2675
        %v3209 = vmul.f32 %v2960, %v2676
        %v3210 = vmul.f32 %v2975, %v2677
        %v3211 = vmul.f32 %v2990, %v2678
        %v3212 = vmul.f32 %v3005, %v2679
        %3221 = vst [vmem:[#allocation1] ss:$9 sm:$0xff] %v3205
        %s3222 = scalar_lea.vmem [#allocation1], 1
        %3223 = vst [vmem:[%s3222] ss:$9 sm:$0xff] %v3206
        %s3224 = scalar_lea.vmem [#allocation1], 2
        %3225 = vst [vmem:[%s3224] ss:$9 sm:$0xff] %v3207
        %s3226 = scalar_lea.vmem [#allocation1], 3
        %3227 = vst [vmem:[%s3226] ss:$9 sm:$0xff] %v3208
        %s3228 = scalar_lea.vmem [#allocation1], 4
        %3229 = vst [vmem:[%s3228] ss:$9 sm:$0xff] %v3209
        %s3230 = scalar_lea.vmem [#allocation1], 5
        %3231 = vst [vmem:[%s3230] ss:$9 sm:$0xff] %v3210
        %s3232 = scalar_lea.vmem [#allocation1], 6
        %3233 = vst [vmem:[%s3232] ss:$9 sm:$0xff] %v3211
        %s3234 = scalar_lea.vmem [#allocation1], 7
        %3235 = vst [vmem:[%s3234] ss:$9 sm:$0xff] %v3212
        %v3236 = vld [vmem:[#allocation1] sm:$0xff]
        %3238 = vmatpush.msra.mxu0 %v653
        %3239 = vmatpush.msra.mxu0 %v652
        %3240 = vmatpush.msra.mxu0 %v651
        %3241 = vmatpush.msra.mxu0 %v650
        %3242 = vmatpush.msra.mxu0 %v649
        %3243 = vmatpush.msra.mxu0 %v648
        %3244 = vmatpush.msra.mxu0 %v647
        %3245 = vmatpush.msra.mxu0 %v646
        %3246 = vmatpush.msra.mxu0 %v645
        %3247 = vmatpush.msra.mxu0 %v644
        %3248 = vmatpush.msra.mxu0 %v643
        %3249 = vmatpush.msra.mxu0 %v642
        %3250 = vmatpush.msra.mxu0 %v641
        %3251 = vmatpush.msra.mxu0 %v640
        %3252 = vmatpush.msra.mxu0 %v639
        %3253 = vmatpush.msra.mxu0 %v638
        %3254 = vmatmul.f32.gmra.mxu0 %v3236
        %v3255 = vpop.f32.mrf.mxu0
        %v3256 = vadd.f32 0.0, %v3255
        %3257 = vdwg.mxu0
        %v3258 = vrot.slane %v2745, 2
        %v3259 = vrot.slane %v2747, 2
        %v3260 = vrot.slane %v2749, 2
        %v3261 = vrot.slane %v2751, 2
        %v3262 = vrot.slane %v2753, 2
        %v3263 = vrot.slane %v2755, 2
        %v3264 = vrot.slane %v2757, 2
        %v3265 = vrot.slane %v2759, 2
        %v3275 = vrot.slane %v3256, 1
        %v3276 = vrot.slane %v3256, 2
        %v3277 = vrot.slane %v3256, 3
        %v3278 = vrot.slane %v3256, 4
        %v3279 = vrot.slane %v3256, 5
        %v3280 = vrot.slane %v3256, 6
        %v3281 = vrot.slane %v3256, 7
        %v3289 = vadd.f32 %v3258, %v3256
        %v3290 = vadd.f32 %v3259, %v3275
        %v3291 = vadd.f32 %v3260, %v3276
        %v3292 = vadd.f32 %v3261, %v3277
        %v3293 = vadd.f32 %v3262, %v3278
        %v3294 = vadd.f32 %v3263, %v3279
        %v3295 = vadd.f32 %v3264, %v3280
        %v3296 = vadd.f32 %v3265, %v3281
        %v3297 = vtanh.pop %v3289
        %v3298 = vtanh.pop %v3290
        %v3299 = vtanh.pop %v3291
        %v3300 = vtanh.pop %v3292
        %v3301 = vtanh.pop %v3293
        %v3302 = vtanh.pop %v3294
        %v3303 = vtanh.pop %v3295
        %v3304 = vtanh.pop %v3296
        %3306 = vset.pattern.permute.xlu0 0
        %3307 = vperm.xlu0 %3306, %v2760
        %v3308 = vpop.permute.xlu0 %3307
        %3311 = vset.pattern.permute.xlu0 0
        %3312 = vperm.xlu0 %3311, %v2761
        %v3313 = vpop.permute.xlu0 %3312
        %3316 = vset.pattern.permute.xlu0 0
        %3317 = vperm.xlu0 %3316, %v2762
        %v3318 = vpop.permute.xlu0 %3317
        %3321 = vset.pattern.permute.xlu0 0
        %3322 = vperm.xlu0 %3321, %v2763
        %v3323 = vpop.permute.xlu0 %3322
        %3326 = vset.pattern.permute.xlu0 0
        %3327 = vperm.xlu0 %3326, %v2764
        %v3328 = vpop.permute.xlu0 %3327
        %3331 = vset.pattern.permute.xlu0 0
        %3332 = vperm.xlu0 %3331, %v2765
        %v3333 = vpop.permute.xlu0 %3332
        %3336 = vset.pattern.permute.xlu0 0
        %3337 = vperm.xlu0 %3336, %v2766
        %v3338 = vpop.permute.xlu0 %3337
        %3341 = vset.pattern.permute.xlu0 0
        %3342 = vperm.xlu0 %3341, %v2767
        %v3343 = vpop.permute.xlu0 %3342
        %v3345 = vmul.f32 %v3308, %v3099
        %v3346 = vmul.f32 %v3313, %v3114
        %v3347 = vmul.f32 %v3318, %v3129
        %v3348 = vmul.f32 %v3323, %v3144
        %v3349 = vmul.f32 %v3328, %v3159
        %v3350 = vmul.f32 %v3333, %v3174
        %v3351 = vmul.f32 %v3338, %v3189
        %v3352 = vmul.f32 %v3343, %v3204
        %v3353 = vsub.f32 1.0, %v3345
        %v3354 = vsub.f32 1.0, %v3346
        %v3355 = vsub.f32 1.0, %v3347
        %v3356 = vsub.f32 1.0, %v3348
        %v3357 = vsub.f32 1.0, %v3349
        %v3358 = vsub.f32 1.0, %v3350
        %v3359 = vsub.f32 1.0, %v3351
        %v3360 = vsub.f32 1.0, %v3352
        %v3361 = vmul.f32 %v3353, %v2672
        %v3362 = vmul.f32 %v3354, %v2673
        %v3363 = vmul.f32 %v3355, %v2674
        %v3364 = vmul.f32 %v3356, %v2675
        %v3365 = vmul.f32 %v3357, %v2676
        %v3366 = vmul.f32 %v3358, %v2677
        %v3367 = vmul.f32 %v3359, %v2678
        %v3368 = vmul.f32 %v3360, %v2679
        %v3369 = vmul.f32 %v3345, %v3297
        %v3370 = vmul.f32 %v3346, %v3298
        %v3371 = vmul.f32 %v3347, %v3299
        %v3372 = vmul.f32 %v3348, %v3300
        %v3373 = vmul.f32 %v3349, %v3301
        %v3374 = vmul.f32 %v3350, %v3302
        %v3375 = vmul.f32 %v3351, %v3303
        %v3376 = vmul.f32 %v3352, %v3304
        %v3377 = vadd.f32 %v3361, %v3369
        %v3378 = vadd.f32 %v3362, %v3370
        %v3379 = vadd.f32 %v3363, %v3371
        %v3380 = vadd.f32 %v3364, %v3372
        %v3381 = vadd.f32 %v3365, %v3373
        %v3382 = vadd.f32 %v3366, %v3374
        %v3383 = vadd.f32 %v3367, %v3375
        %v3384 = vadd.f32 %v3368, %v3376
        %vm3385 = vcmp.ne.f32.partialorder %v2760, 0.0
        %vm3386 = vcmp.ne.f32.partialorder %v2761, 0.0
        %vm3387 = vcmp.ne.f32.partialorder %v2762, 0.0
        %vm3388 = vcmp.ne.f32.partialorder %v2763, 0.0
        %vm3389 = vcmp.ne.f32.partialorder %v2764, 0.0
        %vm3390 = vcmp.ne.f32.partialorder %v2765, 0.0
        %vm3391 = vcmp.ne.f32.partialorder %v2766, 0.0
        %vm3392 = vcmp.ne.f32.partialorder %v2767, 0.0
        %v3393 = vsel %vm3385, 1, 0
        %v3394 = vsel %vm3386, 1, 0
        %v3395 = vsel %vm3387, 1, 0
        %v3396 = vsel %vm3388, 1, 0
        %v3397 = vsel %vm3389, 1, 0
        %v3398 = vsel %vm3390, 1, 0
        %v3399 = vsel %vm3391, 1, 0
        %v3400 = vsel %vm3392, 1, 0
        %3401 = vset.pattern.permute.xlu0 1
        %3402 = vperm.xlu0 %3401, %v3393
        %v3403 = vpop.permute.xlu0 %3402
        %3404 = vset.pattern.permute.xlu0 1
        %3405 = vperm.xlu0 %3404, %v3394
        %v3406 = vpop.permute.xlu0 %3405
        %3407 = vset.pattern.permute.xlu0 1
        %3408 = vperm.xlu0 %3407, %v3395
        %v3409 = vpop.permute.xlu0 %3408
        %3410 = vset.pattern.permute.xlu0 1
        %3411 = vperm.xlu0 %3410, %v3396
        %v3412 = vpop.permute.xlu0 %3411
        %3413 = vset.pattern.permute.xlu0 1
        %3414 = vperm.xlu0 %3413, %v3397
        %v3415 = vpop.permute.xlu0 %3414
        %3416 = vset.pattern.permute.xlu0 1
        %3417 = vperm.xlu0 %3416, %v3398
        %v3418 = vpop.permute.xlu0 %3417
        %3419 = vset.pattern.permute.xlu0 1
        %3420 = vperm.xlu0 %3419, %v3399
        %v3421 = vpop.permute.xlu0 %3420
        %3422 = vset.pattern.permute.xlu0 1
        %3423 = vperm.xlu0 %3422, %v3400
        %v3424 = vpop.permute.xlu0 %3423
        %vm3425 = vcmp.eq.s32.totalorder %v3403, 1
        %vm3426 = vcmp.eq.s32.totalorder %v3406, 1
        %vm3427 = vcmp.eq.s32.totalorder %v3409, 1
        %vm3428 = vcmp.eq.s32.totalorder %v3412, 1
        %vm3429 = vcmp.eq.s32.totalorder %v3415, 1
        %vm3430 = vcmp.eq.s32.totalorder %v3418, 1
        %vm3431 = vcmp.eq.s32.totalorder %v3421, 1
        %vm3432 = vcmp.eq.s32.totalorder %v3424, 1
        %v3433 = vsel %vm3425, %v3377, 0.0
        %v3434 = vsel %vm3426, %v3378, 0.0
        %v3435 = vsel %vm3427, %v3379, 0.0
        %v3436 = vsel %vm3428, %v3380, 0.0
        %v3437 = vsel %vm3429, %v3381, 0.0
        %v3438 = vsel %vm3430, %v3382, 0.0
        %v3439 = vsel %vm3431, %v3383, 0.0
        %v3440 = vsel %vm3432, %v3384, 0.0
        %v3441 = vmax.f32 %v2736, %v3433
        %v3442 = vmax.f32 %v2737, %v3434
        %v3443 = vmax.f32 %v2738, %v3435
        %v3444 = vmax.f32 %v2739, %v3436
        %v3445 = vmax.f32 %v2740, %v3437
        %v3446 = vmax.f32 %v2741, %v3438
        %v3447 = vmax.f32 %v2742, %v3439
        %v3448 = vmax.f32 %v2743, %v3440
        %s3449 = scalar_lea.vmem [#allocation2], 4
        %v3450 = vld [vmem:[%s3449] ss:$8 sm:$0x7]
        %s3451 = scalar_lea.vmem [#allocation2], 28
        %v3452 = vld [vmem:[%s3451] ss:$8 sm:$0x7]
        %s3453 = scalar_lea.vmem [#allocation2], 52
        %v3454 = vld [vmem:[%s3453] ss:$8 sm:$0x7]
        %s3455 = scalar_lea.vmem [#allocation2], 76
        %v3456 = vld [vmem:[%s3455] ss:$8 sm:$0x7]
        %s3457 = scalar_lea.vmem [#allocation2], 100
        %v3458 = vld [vmem:[%s3457] ss:$8 sm:$0x7]
        %s3459 = scalar_lea.vmem [#allocation2], 124
        %v3460 = vld [vmem:[%s3459] ss:$8 sm:$0x7]
        %s3461 = scalar_lea.vmem [#allocation2], 148
        %v3462 = vld [vmem:[%s3461] ss:$8 sm:$0x7]
        %s3463 = scalar_lea.vmem [#allocation2], 172
        %v3464 = vld [vmem:[%s3463] ss:$8 sm:$0x7]
        %v3465 = vld [vmem:[%s393 + $0x4] sm:$0x1]
        %v3466 = vld [vmem:[%s393 + $0xc] sm:$0x1]
        %v3467 = vld [vmem:[%s393 + $0x14] sm:$0x1]
        %v3468 = vld [vmem:[%s393 + $0x1c] sm:$0x1]
        %v3469 = vld [vmem:[%s393 + $0x24] sm:$0x1]
        %v3470 = vld [vmem:[%s393 + $0x2c] sm:$0x1]
        %v3471 = vld [vmem:[%s393 + $0x34] sm:$0x1]
        %v3472 = vld [vmem:[%s393 + $0x3c] sm:$0x1]
        %v3481 = vrot.slane %v3378, 7
        %v3482 = vsel %vm1360, %v3481, %v3377
        %v3483 = vrot.slane %v3379, 6
        %v3484 = vsel %vm1363, %v3483, %v3482
        %v3485 = vrot.slane %v3380, 5
        %v3486 = vsel %vm1366, %v3485, %v3484
        %v3487 = vrot.slane %v3381, 4
        %v3488 = vsel %vm1369, %v3487, %v3486
        %v3489 = vrot.slane %v3382, 3
        %v3490 = vsel %vm1372, %v3489, %v3488
        %v3491 = vrot.slane %v3383, 2
        %v3492 = vsel %vm1375, %v3491, %v3490
        %v3493 = vrot.slane %v3384, 1
        %v3494 = vsel %vm1378, %v3493, %v3492
        %3496 = vmatpush.msra.mxu0 %v636
        %3497 = vmatpush.msra.mxu0 %v634
        %3498 = vmatpush.msra.mxu0 %v632
        %3499 = vmatpush.msra.mxu0 %v630
        %3500 = vmatpush.msra.mxu0 %v628
        %3501 = vmatpush.msra.mxu0 %v626
        %3502 = vmatpush.msra.mxu0 %v624
        %3503 = vmatpush.msra.mxu0 %v622
        %3504 = vmatpush.msra.mxu0 %v620
        %3505 = vmatpush.msra.mxu0 %v618
        %3506 = vmatpush.msra.mxu0 %v616
        %3507 = vmatpush.msra.mxu0 %v614
        %3508 = vmatpush.msra.mxu0 %v612
        %3509 = vmatpush.msra.mxu0 %v610
        %3510 = vmatpush.msra.mxu0 %v608
        %3511 = vmatpush.msra.mxu0 %v606
        %3512 = vmatmul.f32.gmra.mxu0 %v3494
        %v3513 = vpop.f32.mrf.mxu0
        %v3514 = vadd.f32 0.0, %v3513
        %3515 = vdwg.mxu0
        %3516 = vmatpush.msra.mxu0 %v637
        %3517 = vmatpush.msra.mxu0 %v635
        %3518 = vmatpush.msra.mxu0 %v633
        %3519 = vmatpush.msra.mxu0 %v631
        %3520 = vmatpush.msra.mxu0 %v629
        %3521 = vmatpush.msra.mxu0 %v627
        %3522 = vmatpush.msra.mxu0 %v625
        %3523 = vmatpush.msra.mxu0 %v623
        %3524 = vmatpush.msra.mxu0 %v621
        %3525 = vmatpush.msra.mxu0 %v619
        %3526 = vmatpush.msra.mxu0 %v617
        %3527 = vmatpush.msra.mxu0 %v615
        %3528 = vmatpush.msra.mxu0 %v613
        %3529 = vmatpush.msra.mxu0 %v611
        %3530 = vmatpush.msra.mxu0 %v609
        %3531 = vmatpush.msra.mxu0 %v607
        %3532 = vmatmul.f32.gmra.mxu0 %v3494
        %v3533 = vpop.f32.mrf.mxu0
        %v3534 = vadd.f32 0.0, %v3533
        %3535 = vdwg.mxu0
        %v3537 = vrot.slane %v3514, 1
        %v3538 = vrot.slane %v3514, 2
        %v3539 = vrot.slane %v3514, 3
        %v3540 = vrot.slane %v3514, 4
        %v3541 = vrot.slane %v3514, 5
        %v3542 = vrot.slane %v3514, 6
        %v3543 = vrot.slane %v3514, 7
        %v3551 = vadd.f32 %v3450, %v3514
        %v3552 = vadd.f32 %v3452, %v3537
        %v3553 = vadd.f32 %v3454, %v3538
        %v3554 = vadd.f32 %v3456, %v3539
        %v3555 = vadd.f32 %v3458, %v3540
        %v3556 = vadd.f32 %v3460, %v3541
        %v3557 = vadd.f32 %v3462, %v3542
        %v3558 = vadd.f32 %v3464, %v3543
        %v3559 = vxor.u32 %v3551, 2147483648
        %v3560 = vxor.u32 %v3552, 2147483648
        %v3561 = vxor.u32 %v3553, 2147483648
        %v3562 = vxor.u32 %v3554, 2147483648
        %v3563 = vxor.u32 %v3555, 2147483648
        %v3564 = vxor.u32 %v3556, 2147483648
        %v3565 = vxor.u32 %v3557, 2147483648
        %v3566 = vxor.u32 %v3558, 2147483648
        %v3567 = vmul.f32 %v3559, 1.442695
        %v3568 = vpow.pop %v3567
        %v3569 = vmul.f32 %v3560, 1.442695
        %v3570 = vpow.pop %v3569
        %v3571 = vmul.f32 %v3561, 1.442695
        %v3572 = vpow.pop %v3571
        %v3573 = vmul.f32 %v3562, 1.442695
        %v3574 = vpow.pop %v3573
        %v3575 = vmul.f32 %v3563, 1.442695
        %v3576 = vpow.pop %v3575
        %v3577 = vmul.f32 %v3564, 1.442695
        %v3578 = vpow.pop %v3577
        %v3579 = vmul.f32 %v3565, 1.442695
        %v3580 = vpow.pop %v3579
        %v3581 = vmul.f32 %v3566, 1.442695
        %v3582 = vpow.pop %v3581
        %v3583 = vadd.f32 %v3568, 1.0
        %v3584 = vadd.f32 %v3570, 1.0
        %v3585 = vadd.f32 %v3572, 1.0
        %v3586 = vadd.f32 %v3574, 1.0
        %v3587 = vadd.f32 %v3576, 1.0
        %v3588 = vadd.f32 %v3578, 1.0
        %v3589 = vadd.f32 %v3580, 1.0
        %v3590 = vadd.f32 %v3582, 1.0
        %v3591 = vrcp.pop %v3583
        %v3592 = vmul.f32 %v3583, %v3591
        %v3593 = vsub.f32 1.0, %v3592
        %v3594 = vmul.f32 %v3591, %v3593
        %v3595 = vadd.f32 %v3591, %v3594
        %vm3596 = vweird.f32 %v3583
        %vm3597 = vweird.f32 %v3591
        %vm3598 = vmor %vm3596, %vm3597
        %v3599 = vsel %vm3598, %v3591, %v3595
        %v3600 = vand.u32 2147483647, %v3583
        %vm3601 = vcmp.eq.f32.partialorder %v3600, 8.507059e+37
        %v3602 = vand.u32 %v3583, 2147483648
        %v3603 = vor.u32 1.1754944e-38, %v3602
        %v3604 = vsel %vm3601, %v3603, %v3599
        %v3605 = vmul.f32 1.0, %v3604
        %v3606 = vrcp.pop %v3584
        %v3607 = vmul.f32 %v3584, %v3606
        %v3608 = vsub.f32 1.0, %v3607
        %v3609 = vmul.f32 %v3606, %v3608
        %v3610 = vadd.f32 %v3606, %v3609
        %vm3611 = vweird.f32 %v3584
        %vm3612 = vweird.f32 %v3606
        %vm3613 = vmor %vm3611, %vm3612
        %v3614 = vsel %vm3613, %v3606, %v3610
        %v3615 = vand.u32 2147483647, %v3584
        %vm3616 = vcmp.eq.f32.partialorder %v3615, 8.507059e+37
        %v3617 = vand.u32 %v3584, 2147483648
        %v3618 = vor.u32 1.1754944e-38, %v3617
        %v3619 = vsel %vm3616, %v3618, %v3614
        %v3620 = vmul.f32 1.0, %v3619
        %v3621 = vrcp.pop %v3585
        %v3622 = vmul.f32 %v3585, %v3621
        %v3623 = vsub.f32 1.0, %v3622
        %v3624 = vmul.f32 %v3621, %v3623
        %v3625 = vadd.f32 %v3621, %v3624
        %vm3626 = vweird.f32 %v3585
        %vm3627 = vweird.f32 %v3621
        %vm3628 = vmor %vm3626, %vm3627
        %v3629 = vsel %vm3628, %v3621, %v3625
        %v3630 = vand.u32 2147483647, %v3585
        %vm3631 = vcmp.eq.f32.partialorder %v3630, 8.507059e+37
        %v3632 = vand.u32 %v3585, 2147483648
        %v3633 = vor.u32 1.1754944e-38, %v3632
        %v3634 = vsel %vm3631, %v3633, %v3629
        %v3635 = vmul.f32 1.0, %v3634
        %v3636 = vrcp.pop %v3586
        %v3637 = vmul.f32 %v3586, %v3636
        %v3638 = vsub.f32 1.0, %v3637
        %v3639 = vmul.f32 %v3636, %v3638
        %v3640 = vadd.f32 %v3636, %v3639
        %vm3641 = vweird.f32 %v3586
        %vm3642 = vweird.f32 %v3636
        %vm3643 = vmor %vm3641, %vm3642
        %v3644 = vsel %vm3643, %v3636, %v3640
        %v3645 = vand.u32 2147483647, %v3586
        %vm3646 = vcmp.eq.f32.partialorder %v3645, 8.507059e+37
        %v3647 = vand.u32 %v3586, 2147483648
        %v3648 = vor.u32 1.1754944e-38, %v3647
        %v3649 = vsel %vm3646, %v3648, %v3644
        %v3650 = vmul.f32 1.0, %v3649
        %v3651 = vrcp.pop %v3587
        %v3652 = vmul.f32 %v3587, %v3651
        %v3653 = vsub.f32 1.0, %v3652
        %v3654 = vmul.f32 %v3651, %v3653
        %v3655 = vadd.f32 %v3651, %v3654
        %vm3656 = vweird.f32 %v3587
        %vm3657 = vweird.f32 %v3651
        %vm3658 = vmor %vm3656, %vm3657
        %v3659 = vsel %vm3658, %v3651, %v3655
        %v3660 = vand.u32 2147483647, %v3587
        %vm3661 = vcmp.eq.f32.partialorder %v3660, 8.507059e+37
        %v3662 = vand.u32 %v3587, 2147483648
        %v3663 = vor.u32 1.1754944e-38, %v3662
        %v3664 = vsel %vm3661, %v3663, %v3659
        %v3665 = vmul.f32 1.0, %v3664
        %v3666 = vrcp.pop %v3588
        %v3667 = vmul.f32 %v3588, %v3666
        %v3668 = vsub.f32 1.0, %v3667
        %v3669 = vmul.f32 %v3666, %v3668
        %v3670 = vadd.f32 %v3666, %v3669
        %vm3671 = vweird.f32 %v3588
        %vm3672 = vweird.f32 %v3666
        %vm3673 = vmor %vm3671, %vm3672
        %v3674 = vsel %vm3673, %v3666, %v3670
        %v3675 = vand.u32 2147483647, %v3588
        %vm3676 = vcmp.eq.f32.partialorder %v3675, 8.507059e+37
        %v3677 = vand.u32 %v3588, 2147483648
        %v3678 = vor.u32 1.1754944e-38, %v3677
        %v3679 = vsel %vm3676, %v3678, %v3674
        %v3680 = vmul.f32 1.0, %v3679
        %v3681 = vrcp.pop %v3589
        %v3682 = vmul.f32 %v3589, %v3681
        %v3683 = vsub.f32 1.0, %v3682
        %v3684 = vmul.f32 %v3681, %v3683
        %v3685 = vadd.f32 %v3681, %v3684
        %vm3686 = vweird.f32 %v3589
        %vm3687 = vweird.f32 %v3681
        %vm3688 = vmor %vm3686, %vm3687
        %v3689 = vsel %vm3688, %v3681, %v3685
        %v3690 = vand.u32 2147483647, %v3589
        %vm3691 = vcmp.eq.f32.partialorder %v3690, 8.507059e+37
        %v3692 = vand.u32 %v3589, 2147483648
        %v3693 = vor.u32 1.1754944e-38, %v3692
        %v3694 = vsel %vm3691, %v3693, %v3689
        %v3695 = vmul.f32 1.0, %v3694
        %v3696 = vrcp.pop %v3590
        %v3697 = vmul.f32 %v3590, %v3696
        %v3698 = vsub.f32 1.0, %v3697
        %v3699 = vmul.f32 %v3696, %v3698
        %v3700 = vadd.f32 %v3696, %v3699
        %vm3701 = vweird.f32 %v3590
        %vm3702 = vweird.f32 %v3696
        %vm3703 = vmor %vm3701, %vm3702
        %v3704 = vsel %vm3703, %v3696, %v3700
        %v3705 = vand.u32 2147483647, %v3590
        %vm3706 = vcmp.eq.f32.partialorder %v3705, 8.507059e+37
        %v3707 = vand.u32 %v3590, 2147483648
        %v3708 = vor.u32 1.1754944e-38, %v3707
        %v3709 = vsel %vm3706, %v3708, %v3704
        %v3710 = vmul.f32 1.0, %v3709
        %v3719 = vrot.slane %v3450, 1
        %v3720 = vrot.slane %v3452, 1
        %v3721 = vrot.slane %v3454, 1
        %v3722 = vrot.slane %v3456, 1
        %v3723 = vrot.slane %v3458, 1
        %v3724 = vrot.slane %v3460, 1
        %v3725 = vrot.slane %v3462, 1
        %v3726 = vrot.slane %v3464, 1
        %v3736 = vrot.slane %v3534, 1
        %v3737 = vrot.slane %v3534, 2
        %v3738 = vrot.slane %v3534, 3
        %v3739 = vrot.slane %v3534, 4
        %v3740 = vrot.slane %v3534, 5
        %v3741 = vrot.slane %v3534, 6
        %v3742 = vrot.slane %v3534, 7
        %v3750 = vadd.f32 %v3719, %v3534
        %v3751 = vadd.f32 %v3720, %v3736
        %v3752 = vadd.f32 %v3721, %v3737
        %v3753 = vadd.f32 %v3722, %v3738
        %v3754 = vadd.f32 %v3723, %v3739
        %v3755 = vadd.f32 %v3724, %v3740
        %v3756 = vadd.f32 %v3725, %v3741
        %v3757 = vadd.f32 %v3726, %v3742
        %v3758 = vxor.u32 %v3750, 2147483648
        %v3759 = vxor.u32 %v3751, 2147483648
        %v3760 = vxor.u32 %v3752, 2147483648
        %v3761 = vxor.u32 %v3753, 2147483648
        %v3762 = vxor.u32 %v3754, 2147483648
        %v3763 = vxor.u32 %v3755, 2147483648
        %v3764 = vxor.u32 %v3756, 2147483648
        %v3765 = vxor.u32 %v3757, 2147483648
        %v3766 = vmul.f32 %v3758, 1.442695
        %v3767 = vpow.pop %v3766
        %v3768 = vmul.f32 %v3759, 1.442695
        %v3769 = vpow.pop %v3768
        %v3770 = vmul.f32 %v3760, 1.442695
        %v3771 = vpow.pop %v3770
        %v3772 = vmul.f32 %v3761, 1.442695
        %v3773 = vpow.pop %v3772
        %v3774 = vmul.f32 %v3762, 1.442695
        %v3775 = vpow.pop %v3774
        %v3776 = vmul.f32 %v3763, 1.442695
        %v3777 = vpow.pop %v3776
        %v3778 = vmul.f32 %v3764, 1.442695
        %v3779 = vpow.pop %v3778
        %v3780 = vmul.f32 %v3765, 1.442695
        %v3781 = vpow.pop %v3780
        %v3782 = vadd.f32 %v3767, 1.0
        %v3783 = vadd.f32 %v3769, 1.0
        %v3784 = vadd.f32 %v3771, 1.0
        %v3785 = vadd.f32 %v3773, 1.0
        %v3786 = vadd.f32 %v3775, 1.0
        %v3787 = vadd.f32 %v3777, 1.0
        %v3788 = vadd.f32 %v3779, 1.0
        %v3789 = vadd.f32 %v3781, 1.0
        %v3790 = vrcp.pop %v3782
        %v3791 = vmul.f32 %v3782, %v3790
        %v3792 = vsub.f32 1.0, %v3791
        %v3793 = vmul.f32 %v3790, %v3792
        %v3794 = vadd.f32 %v3790, %v3793
        %vm3795 = vweird.f32 %v3782
        %vm3796 = vweird.f32 %v3790
        %vm3797 = vmor %vm3795, %vm3796
        %v3798 = vsel %vm3797, %v3790, %v3794
        %v3799 = vand.u32 2147483647, %v3782
        %vm3800 = vcmp.eq.f32.partialorder %v3799, 8.507059e+37
        %v3801 = vand.u32 %v3782, 2147483648
        %v3802 = vor.u32 1.1754944e-38, %v3801
        %v3803 = vsel %vm3800, %v3802, %v3798
        %v3804 = vmul.f32 1.0, %v3803
        %v3805 = vrcp.pop %v3783
        %v3806 = vmul.f32 %v3783, %v3805
        %v3807 = vsub.f32 1.0, %v3806
        %v3808 = vmul.f32 %v3805, %v3807
        %v3809 = vadd.f32 %v3805, %v3808
        %vm3810 = vweird.f32 %v3783
        %vm3811 = vweird.f32 %v3805
        %vm3812 = vmor %vm3810, %vm3811
        %v3813 = vsel %vm3812, %v3805, %v3809
        %v3814 = vand.u32 2147483647, %v3783
        %vm3815 = vcmp.eq.f32.partialorder %v3814, 8.507059e+37
        %v3816 = vand.u32 %v3783, 2147483648
        %v3817 = vor.u32 1.1754944e-38, %v3816
        %v3818 = vsel %vm3815, %v3817, %v3813
        %v3819 = vmul.f32 1.0, %v3818
        %v3820 = vrcp.pop %v3784
        %v3821 = vmul.f32 %v3784, %v3820
        %v3822 = vsub.f32 1.0, %v3821
        %v3823 = vmul.f32 %v3820, %v3822
        %v3824 = vadd.f32 %v3820, %v3823
        %vm3825 = vweird.f32 %v3784
        %vm3826 = vweird.f32 %v3820
        %vm3827 = vmor %vm3825, %vm3826
        %v3828 = vsel %vm3827, %v3820, %v3824
        %v3829 = vand.u32 2147483647, %v3784
        %vm3830 = vcmp.eq.f32.partialorder %v3829, 8.507059e+37
        %v3831 = vand.u32 %v3784, 2147483648
        %v3832 = vor.u32 1.1754944e-38, %v3831
        %v3833 = vsel %vm3830, %v3832, %v3828
        %v3834 = vmul.f32 1.0, %v3833
        %v3835 = vrcp.pop %v3785
        %v3836 = vmul.f32 %v3785, %v3835
        %v3837 = vsub.f32 1.0, %v3836
        %v3838 = vmul.f32 %v3835, %v3837
        %v3839 = vadd.f32 %v3835, %v3838
        %vm3840 = vweird.f32 %v3785
        %vm3841 = vweird.f32 %v3835
        %vm3842 = vmor %vm3840, %vm3841
        %v3843 = vsel %vm3842, %v3835, %v3839
        %v3844 = vand.u32 2147483647, %v3785
        %vm3845 = vcmp.eq.f32.partialorder %v3844, 8.507059e+37
        %v3846 = vand.u32 %v3785, 2147483648
        %v3847 = vor.u32 1.1754944e-38, %v3846
        %v3848 = vsel %vm3845, %v3847, %v3843
        %v3849 = vmul.f32 1.0, %v3848
        %v3850 = vrcp.pop %v3786
        %v3851 = vmul.f32 %v3786, %v3850
        %v3852 = vsub.f32 1.0, %v3851
        %v3853 = vmul.f32 %v3850, %v3852
        %v3854 = vadd.f32 %v3850, %v3853
        %vm3855 = vweird.f32 %v3786
        %vm3856 = vweird.f32 %v3850
        %vm3857 = vmor %vm3855, %vm3856
        %v3858 = vsel %vm3857, %v3850, %v3854
        %v3859 = vand.u32 2147483647, %v3786
        %vm3860 = vcmp.eq.f32.partialorder %v3859, 8.507059e+37
        %v3861 = vand.u32 %v3786, 2147483648
        %v3862 = vor.u32 1.1754944e-38, %v3861
        %v3863 = vsel %vm3860, %v3862, %v3858
        %v3864 = vmul.f32 1.0, %v3863
        %v3865 = vrcp.pop %v3787
        %v3866 = vmul.f32 %v3787, %v3865
        %v3867 = vsub.f32 1.0, %v3866
        %v3868 = vmul.f32 %v3865, %v3867
        %v3869 = vadd.f32 %v3865, %v3868
        %vm3870 = vweird.f32 %v3787
        %vm3871 = vweird.f32 %v3865
        %vm3872 = vmor %vm3870, %vm3871
        %v3873 = vsel %vm3872, %v3865, %v3869
        %v3874 = vand.u32 2147483647, %v3787
        %vm3875 = vcmp.eq.f32.partialorder %v3874, 8.507059e+37
        %v3876 = vand.u32 %v3787, 2147483648
        %v3877 = vor.u32 1.1754944e-38, %v3876
        %v3878 = vsel %vm3875, %v3877, %v3873
        %v3879 = vmul.f32 1.0, %v3878
        %v3880 = vrcp.pop %v3788
        %v3881 = vmul.f32 %v3788, %v3880
        %v3882 = vsub.f32 1.0, %v3881
        %v3883 = vmul.f32 %v3880, %v3882
        %v3884 = vadd.f32 %v3880, %v3883
        %vm3885 = vweird.f32 %v3788
        %vm3886 = vweird.f32 %v3880
        %vm3887 = vmor %vm3885, %vm3886
        %v3888 = vsel %vm3887, %v3880, %v3884
        %v3889 = vand.u32 2147483647, %v3788
        %vm3890 = vcmp.eq.f32.partialorder %v3889, 8.507059e+37
        %v3891 = vand.u32 %v3788, 2147483648
        %v3892 = vor.u32 1.1754944e-38, %v3891
        %v3893 = vsel %vm3890, %v3892, %v3888
        %v3894 = vmul.f32 1.0, %v3893
        %v3895 = vrcp.pop %v3789
        %v3896 = vmul.f32 %v3789, %v3895
        %v3897 = vsub.f32 1.0, %v3896
        %v3898 = vmul.f32 %v3895, %v3897
        %v3899 = vadd.f32 %v3895, %v3898
        %vm3900 = vweird.f32 %v3789
        %vm3901 = vweird.f32 %v3895
        %vm3902 = vmor %vm3900, %vm3901
        %v3903 = vsel %vm3902, %v3895, %v3899
        %v3904 = vand.u32 2147483647, %v3789
        %vm3905 = vcmp.eq.f32.partialorder %v3904, 8.507059e+37
        %v3906 = vand.u32 %v3789, 2147483648
        %v3907 = vor.u32 1.1754944e-38, %v3906
        %v3908 = vsel %vm3905, %v3907, %v3903
        %v3909 = vmul.f32 1.0, %v3908
        %v3910 = vmul.f32 %v3605, %v3377
        %v3911 = vmul.f32 %v3620, %v3378
        %v3912 = vmul.f32 %v3635, %v3379
        %v3913 = vmul.f32 %v3650, %v3380
        %v3914 = vmul.f32 %v3665, %v3381
        %v3915 = vmul.f32 %v3680, %v3382
        %v3916 = vmul.f32 %v3695, %v3383
        %v3917 = vmul.f32 %v3710, %v3384
        %3926 = vst [vmem:[#allocation1] ss:$9 sm:$0xff] %v3910
        %s3927 = scalar_lea.vmem [#allocation1], 1
        %3928 = vst [vmem:[%s3927] ss:$9 sm:$0xff] %v3911
        %s3929 = scalar_lea.vmem [#allocation1], 2
        %3930 = vst [vmem:[%s3929] ss:$9 sm:$0xff] %v3912
        %s3931 = scalar_lea.vmem [#allocation1], 3
        %3932 = vst [vmem:[%s3931] ss:$9 sm:$0xff] %v3913
        %s3933 = scalar_lea.vmem [#allocation1], 4
        %3934 = vst [vmem:[%s3933] ss:$9 sm:$0xff] %v3914
        %s3935 = scalar_lea.vmem [#allocation1], 5
        %3936 = vst [vmem:[%s3935] ss:$9 sm:$0xff] %v3915
        %s3937 = scalar_lea.vmem [#allocation1], 6
        %3938 = vst [vmem:[%s3937] ss:$9 sm:$0xff] %v3916
        %s3939 = scalar_lea.vmem [#allocation1], 7
        %3940 = vst [vmem:[%s3939] ss:$9 sm:$0xff] %v3917
        %v3941 = vld [vmem:[#allocation1] sm:$0xff]
        %3943 = vmatpush.msra.mxu0 %v653
        %3944 = vmatpush.msra.mxu0 %v652
        %3945 = vmatpush.msra.mxu0 %v651
        %3946 = vmatpush.msra.mxu0 %v650
        %3947 = vmatpush.msra.mxu0 %v649
        %3948 = vmatpush.msra.mxu0 %v648
        %3949 = vmatpush.msra.mxu0 %v647
        %3950 = vmatpush.msra.mxu0 %v646
        %3951 = vmatpush.msra.mxu0 %v645
        %3952 = vmatpush.msra.mxu0 %v644
        %3953 = vmatpush.msra.mxu0 %v643
        %3954 = vmatpush.msra.mxu0 %v642
        %3955 = vmatpush.msra.mxu0 %v641
        %3956 = vmatpush.msra.mxu0 %v640
        %3957 = vmatpush.msra.mxu0 %v639
        %3958 = vmatpush.msra.mxu0 %v638
        %3959 = vmatmul.f32.gmra.mxu0 %v3941
        %v3960 = vpop.f32.mrf.mxu0
        %v3961 = vadd.f32 0.0, %v3960
        %3962 = vdwg.mxu0
        %v3963 = vrot.slane %v3450, 2
        %v3964 = vrot.slane %v3452, 2
        %v3965 = vrot.slane %v3454, 2
        %v3966 = vrot.slane %v3456, 2
        %v3967 = vrot.slane %v3458, 2
        %v3968 = vrot.slane %v3460, 2
        %v3969 = vrot.slane %v3462, 2
        %v3970 = vrot.slane %v3464, 2
        %v3980 = vrot.slane %v3961, 1
        %v3981 = vrot.slane %v3961, 2
        %v3982 = vrot.slane %v3961, 3
        %v3983 = vrot.slane %v3961, 4
        %v3984 = vrot.slane %v3961, 5
        %v3985 = vrot.slane %v3961, 6
        %v3986 = vrot.slane %v3961, 7
        %v3994 = vadd.f32 %v3963, %v3961
        %v3995 = vadd.f32 %v3964, %v3980
        %v3996 = vadd.f32 %v3965, %v3981
        %v3997 = vadd.f32 %v3966, %v3982
        %v3998 = vadd.f32 %v3967, %v3983
        %v3999 = vadd.f32 %v3968, %v3984
        %v4000 = vadd.f32 %v3969, %v3985
        %v4001 = vadd.f32 %v3970, %v3986
        %v4002 = vtanh.pop %v3994
        %v4003 = vtanh.pop %v3995
        %v4004 = vtanh.pop %v3996
        %v4005 = vtanh.pop %v3997
        %v4006 = vtanh.pop %v3998
        %v4007 = vtanh.pop %v3999
        %v4008 = vtanh.pop %v4000
        %v4009 = vtanh.pop %v4001
        %4011 = vset.pattern.permute.xlu0 0
        %4012 = vperm.xlu0 %4011, %v3465
        %v4013 = vpop.permute.xlu0 %4012
        %4016 = vset.pattern.permute.xlu0 0
        %4017 = vperm.xlu0 %4016, %v3466
        %v4018 = vpop.permute.xlu0 %4017
        %4021 = vset.pattern.permute.xlu0 0
        %4022 = vperm.xlu0 %4021, %v3467
        %v4023 = vpop.permute.xlu0 %4022
        %4026 = vset.pattern.permute.xlu0 0
        %4027 = vperm.xlu0 %4026, %v3468
        %v4028 = vpop.permute.xlu0 %4027
        %4031 = vset.pattern.permute.xlu0 0
        %4032 = vperm.xlu0 %4031, %v3469
        %v4033 = vpop.permute.xlu0 %4032
        %4036 = vset.pattern.permute.xlu0 0
        %4037 = vperm.xlu0 %4036, %v3470
        %v4038 = vpop.permute.xlu0 %4037
        %4041 = vset.pattern.permute.xlu0 0
        %4042 = vperm.xlu0 %4041, %v3471
        %v4043 = vpop.permute.xlu0 %4042
        %4046 = vset.pattern.permute.xlu0 0
        %4047 = vperm.xlu0 %4046, %v3472
        %v4048 = vpop.permute.xlu0 %4047
        %v4050 = vmul.f32 %v4013, %v3804
        %v4051 = vmul.f32 %v4018, %v3819
        %v4052 = vmul.f32 %v4023, %v3834
        %v4053 = vmul.f32 %v4028, %v3849
        %v4054 = vmul.f32 %v4033, %v3864
        %v4055 = vmul.f32 %v4038, %v3879
        %v4056 = vmul.f32 %v4043, %v3894
        %v4057 = vmul.f32 %v4048, %v3909
        %v4058 = vsub.f32 1.0, %v4050
        %v4059 = vsub.f32 1.0, %v4051
        %v4060 = vsub.f32 1.0, %v4052
        %v4061 = vsub.f32 1.0, %v4053
        %v4062 = vsub.f32 1.0, %v4054
        %v4063 = vsub.f32 1.0, %v4055
        %v4064 = vsub.f32 1.0, %v4056
        %v4065 = vsub.f32 1.0, %v4057
        %v4066 = vmul.f32 %v4058, %v3377
        %v4067 = vmul.f32 %v4059, %v3378
        %v4068 = vmul.f32 %v4060, %v3379
        %v4069 = vmul.f32 %v4061, %v3380
        %v4070 = vmul.f32 %v4062, %v3381
        %v4071 = vmul.f32 %v4063, %v3382
        %v4072 = vmul.f32 %v4064, %v3383
        %v4073 = vmul.f32 %v4065, %v3384
        %v4074 = vmul.f32 %v4050, %v4002
        %v4075 = vmul.f32 %v4051, %v4003
        %v4076 = vmul.f32 %v4052, %v4004
        %v4077 = vmul.f32 %v4053, %v4005
        %v4078 = vmul.f32 %v4054, %v4006
        %v4079 = vmul.f32 %v4055, %v4007
        %v4080 = vmul.f32 %v4056, %v4008
        %v4081 = vmul.f32 %v4057, %v4009
        %v4082 = vadd.f32 %v4066, %v4074
        %v4083 = vadd.f32 %v4067, %v4075
        %v4084 = vadd.f32 %v4068, %v4076
        %v4085 = vadd.f32 %v4069, %v4077
        %v4086 = vadd.f32 %v4070, %v4078
        %v4087 = vadd.f32 %v4071, %v4079
        %v4088 = vadd.f32 %v4072, %v4080
        %v4089 = vadd.f32 %v4073, %v4081
        %vm4090 = vcmp.ne.f32.partialorder %v3465, 0.0
        %vm4091 = vcmp.ne.f32.partialorder %v3466, 0.0
        %vm4092 = vcmp.ne.f32.partialorder %v3467, 0.0
        %vm4093 = vcmp.ne.f32.partialorder %v3468, 0.0
        %vm4094 = vcmp.ne.f32.partialorder %v3469, 0.0
        %vm4095 = vcmp.ne.f32.partialorder %v3470, 0.0
        %vm4096 = vcmp.ne.f32.partialorder %v3471, 0.0
        %vm4097 = vcmp.ne.f32.partialorder %v3472, 0.0
        %v4098 = vsel %vm4090, 1, 0
        %v4099 = vsel %vm4091, 1, 0
        %v4100 = vsel %vm4092, 1, 0
        %v4101 = vsel %vm4093, 1, 0
        %v4102 = vsel %vm4094, 1, 0
        %v4103 = vsel %vm4095, 1, 0
        %v4104 = vsel %vm4096, 1, 0
        %v4105 = vsel %vm4097, 1, 0
        %4106 = vset.pattern.permute.xlu0 1
        %4107 = vperm.xlu0 %4106, %v4098
        %v4108 = vpop.permute.xlu0 %4107
        %4109 = vset.pattern.permute.xlu0 1
        %4110 = vperm.xlu0 %4109, %v4099
        %v4111 = vpop.permute.xlu0 %4110
        %4112 = vset.pattern.permute.xlu0 1
        %4113 = vperm.xlu0 %4112, %v4100
        %v4114 = vpop.permute.xlu0 %4113
        %4115 = vset.pattern.permute.xlu0 1
        %4116 = vperm.xlu0 %4115, %v4101
        %v4117 = vpop.permute.xlu0 %4116
        %4118 = vset.pattern.permute.xlu0 1
        %4119 = vperm.xlu0 %4118, %v4102
        %v4120 = vpop.permute.xlu0 %4119
        %4121 = vset.pattern.permute.xlu0 1
        %4122 = vperm.xlu0 %4121, %v4103
        %v4123 = vpop.permute.xlu0 %4122
        %4124 = vset.pattern.permute.xlu0 1
        %4125 = vperm.xlu0 %4124, %v4104
        %v4126 = vpop.permute.xlu0 %4125
        %4127 = vset.pattern.permute.xlu0 1
        %4128 = vperm.xlu0 %4127, %v4105
        %v4129 = vpop.permute.xlu0 %4128
        %vm4130 = vcmp.eq.s32.totalorder %v4108, 1
        %vm4131 = vcmp.eq.s32.totalorder %v4111, 1
        %vm4132 = vcmp.eq.s32.totalorder %v4114, 1
        %vm4133 = vcmp.eq.s32.totalorder %v4117, 1
        %vm4134 = vcmp.eq.s32.totalorder %v4120, 1
        %vm4135 = vcmp.eq.s32.totalorder %v4123, 1
        %vm4136 = vcmp.eq.s32.totalorder %v4126, 1
        %vm4137 = vcmp.eq.s32.totalorder %v4129, 1
        %v4138 = vsel %vm4130, %v4082, 0.0
        %v4139 = vsel %vm4131, %v4083, 0.0
        %v4140 = vsel %vm4132, %v4084, 0.0
        %v4141 = vsel %vm4133, %v4085, 0.0
        %v4142 = vsel %vm4134, %v4086, 0.0
        %v4143 = vsel %vm4135, %v4087, 0.0
        %v4144 = vsel %vm4136, %v4088, 0.0
        %v4145 = vsel %vm4137, %v4089, 0.0
        %v4146 = vmax.f32 %v3441, %v4138
        %v4147 = vmax.f32 %v3442, %v4139
        %v4148 = vmax.f32 %v3443, %v4140
        %v4149 = vmax.f32 %v3444, %v4141
        %v4150 = vmax.f32 %v3445, %v4142
        %v4151 = vmax.f32 %v3446, %v4143
        %v4152 = vmax.f32 %v3447, %v4144
        %v4153 = vmax.f32 %v3448, %v4145
        %s4154 = scalar_lea.vmem [#allocation2], 5
        %v4155 = vld [vmem:[%s4154] ss:$8 sm:$0x7]
        %s4156 = scalar_lea.vmem [#allocation2], 29
        %v4157 = vld [vmem:[%s4156] ss:$8 sm:$0x7]
        %s4158 = scalar_lea.vmem [#allocation2], 53
        %v4159 = vld [vmem:[%s4158] ss:$8 sm:$0x7]
        %s4160 = scalar_lea.vmem [#allocation2], 77
        %v4161 = vld [vmem:[%s4160] ss:$8 sm:$0x7]
        %s4162 = scalar_lea.vmem [#allocation2], 101
        %v4163 = vld [vmem:[%s4162] ss:$8 sm:$0x7]
        %s4164 = scalar_lea.vmem [#allocation2], 125
        %v4165 = vld [vmem:[%s4164] ss:$8 sm:$0x7]
        %s4166 = scalar_lea.vmem [#allocation2], 149
        %v4167 = vld [vmem:[%s4166] ss:$8 sm:$0x7]
        %s4168 = scalar_lea.vmem [#allocation2], 173
        %v4169 = vld [vmem:[%s4168] ss:$8 sm:$0x7]
        %v4170 = vld [vmem:[%s393 + $0x5] sm:$0x1]
        %v4171 = vld [vmem:[%s393 + $0xd] sm:$0x1]
        %v4172 = vld [vmem:[%s393 + $0x15] sm:$0x1]
        %v4173 = vld [vmem:[%s393 + $0x1d] sm:$0x1]
        %v4174 = vld [vmem:[%s393 + $0x25] sm:$0x1]
        %v4175 = vld [vmem:[%s393 + $0x2d] sm:$0x1]
        %v4176 = vld [vmem:[%s393 + $0x35] sm:$0x1]
        %v4177 = vld [vmem:[%s393 + $0x3d] sm:$0x1]
        %v4186 = vrot.slane %v4083, 7
        %v4187 = vsel %vm1360, %v4186, %v4082
        %v4188 = vrot.slane %v4084, 6
        %v4189 = vsel %vm1363, %v4188, %v4187
        %v4190 = vrot.slane %v4085, 5
        %v4191 = vsel %vm1366, %v4190, %v4189
        %v4192 = vrot.slane %v4086, 4
        %v4193 = vsel %vm1369, %v4192, %v4191
        %v4194 = vrot.slane %v4087, 3
        %v4195 = vsel %vm1372, %v4194, %v4193
        %v4196 = vrot.slane %v4088, 2
        %v4197 = vsel %vm1375, %v4196, %v4195
        %v4198 = vrot.slane %v4089, 1
        %v4199 = vsel %vm1378, %v4198, %v4197
        %4201 = vmatpush.msra.mxu0 %v636
        %4202 = vmatpush.msra.mxu0 %v634
        %4203 = vmatpush.msra.mxu0 %v632
        %4204 = vmatpush.msra.mxu0 %v630
        %4205 = vmatpush.msra.mxu0 %v628
        %4206 = vmatpush.msra.mxu0 %v626
        %4207 = vmatpush.msra.mxu0 %v624
        %4208 = vmatpush.msra.mxu0 %v622
        %4209 = vmatpush.msra.mxu0 %v620
        %4210 = vmatpush.msra.mxu0 %v618
        %4211 = vmatpush.msra.mxu0 %v616
        %4212 = vmatpush.msra.mxu0 %v614
        %4213 = vmatpush.msra.mxu0 %v612
        %4214 = vmatpush.msra.mxu0 %v610
        %4215 = vmatpush.msra.mxu0 %v608
        %4216 = vmatpush.msra.mxu0 %v606
        %4217 = vmatmul.f32.gmra.mxu0 %v4199
        %v4218 = vpop.f32.mrf.mxu0
        %v4219 = vadd.f32 0.0, %v4218
        %4220 = vdwg.mxu0
        %4221 = vmatpush.msra.mxu0 %v637
        %4222 = vmatpush.msra.mxu0 %v635
        %4223 = vmatpush.msra.mxu0 %v633
        %4224 = vmatpush.msra.mxu0 %v631
        %4225 = vmatpush.msra.mxu0 %v629
        %4226 = vmatpush.msra.mxu0 %v627
        %4227 = vmatpush.msra.mxu0 %v625
        %4228 = vmatpush.msra.mxu0 %v623
        %4229 = vmatpush.msra.mxu0 %v621
        %4230 = vmatpush.msra.mxu0 %v619
        %4231 = vmatpush.msra.mxu0 %v617
        %4232 = vmatpush.msra.mxu0 %v615
        %4233 = vmatpush.msra.mxu0 %v613
        %4234 = vmatpush.msra.mxu0 %v611
        %4235 = vmatpush.msra.mxu0 %v609
        %4236 = vmatpush.msra.mxu0 %v607
        %4237 = vmatmul.f32.gmra.mxu0 %v4199
        %v4238 = vpop.f32.mrf.mxu0
        %v4239 = vadd.f32 0.0, %v4238
        %4240 = vdwg.mxu0
        %v4242 = vrot.slane %v4219, 1
        %v4243 = vrot.slane %v4219, 2
        %v4244 = vrot.slane %v4219, 3
        %v4245 = vrot.slane %v4219, 4
        %v4246 = vrot.slane %v4219, 5
        %v4247 = vrot.slane %v4219, 6
        %v4248 = vrot.slane %v4219, 7
        %v4256 = vadd.f32 %v4155, %v4219
        %v4257 = vadd.f32 %v4157, %v4242
        %v4258 = vadd.f32 %v4159, %v4243
        %v4259 = vadd.f32 %v4161, %v4244
        %v4260 = vadd.f32 %v4163, %v4245
        %v4261 = vadd.f32 %v4165, %v4246
        %v4262 = vadd.f32 %v4167, %v4247
        %v4263 = vadd.f32 %v4169, %v4248
        %v4264 = vxor.u32 %v4256, 2147483648
        %v4265 = vxor.u32 %v4257, 2147483648
        %v4266 = vxor.u32 %v4258, 2147483648
        %v4267 = vxor.u32 %v4259, 2147483648
        %v4268 = vxor.u32 %v4260, 2147483648
        %v4269 = vxor.u32 %v4261, 2147483648
        %v4270 = vxor.u32 %v4262, 2147483648
        %v4271 = vxor.u32 %v4263, 2147483648
        %v4272 = vmul.f32 %v4264, 1.442695
        %v4273 = vpow.pop %v4272
        %v4274 = vmul.f32 %v4265, 1.442695
        %v4275 = vpow.pop %v4274
        %v4276 = vmul.f32 %v4266, 1.442695
        %v4277 = vpow.pop %v4276
        %v4278 = vmul.f32 %v4267, 1.442695
        %v4279 = vpow.pop %v4278
        %v4280 = vmul.f32 %v4268, 1.442695
        %v4281 = vpow.pop %v4280
        %v4282 = vmul.f32 %v4269, 1.442695
        %v4283 = vpow.pop %v4282
        %v4284 = vmul.f32 %v4270, 1.442695
        %v4285 = vpow.pop %v4284
        %v4286 = vmul.f32 %v4271, 1.442695
        %v4287 = vpow.pop %v4286
        %v4288 = vadd.f32 %v4273, 1.0
        %v4289 = vadd.f32 %v4275, 1.0
        %v4290 = vadd.f32 %v4277, 1.0
        %v4291 = vadd.f32 %v4279, 1.0
        %v4292 = vadd.f32 %v4281, 1.0
        %v4293 = vadd.f32 %v4283, 1.0
        %v4294 = vadd.f32 %v4285, 1.0
        %v4295 = vadd.f32 %v4287, 1.0
        %v4296 = vrcp.pop %v4288
        %v4297 = vmul.f32 %v4288, %v4296
        %v4298 = vsub.f32 1.0, %v4297
        %v4299 = vmul.f32 %v4296, %v4298
        %v4300 = vadd.f32 %v4296, %v4299
        %vm4301 = vweird.f32 %v4288
        %vm4302 = vweird.f32 %v4296
        %vm4303 = vmor %vm4301, %vm4302
        %v4304 = vsel %vm4303, %v4296, %v4300
        %v4305 = vand.u32 2147483647, %v4288
        %vm4306 = vcmp.eq.f32.partialorder %v4305, 8.507059e+37
        %v4307 = vand.u32 %v4288, 2147483648
        %v4308 = vor.u32 1.1754944e-38, %v4307
        %v4309 = vsel %vm4306, %v4308, %v4304
        %v4310 = vmul.f32 1.0, %v4309
        %v4311 = vrcp.pop %v4289
        %v4312 = vmul.f32 %v4289, %v4311
        %v4313 = vsub.f32 1.0, %v4312
        %v4314 = vmul.f32 %v4311, %v4313
        %v4315 = vadd.f32 %v4311, %v4314
        %vm4316 = vweird.f32 %v4289
        %vm4317 = vweird.f32 %v4311
        %vm4318 = vmor %vm4316, %vm4317
        %v4319 = vsel %vm4318, %v4311, %v4315
        %v4320 = vand.u32 2147483647, %v4289
        %vm4321 = vcmp.eq.f32.partialorder %v4320, 8.507059e+37
        %v4322 = vand.u32 %v4289, 2147483648
        %v4323 = vor.u32 1.1754944e-38, %v4322
        %v4324 = vsel %vm4321, %v4323, %v4319
        %v4325 = vmul.f32 1.0, %v4324
        %v4326 = vrcp.pop %v4290
        %v4327 = vmul.f32 %v4290, %v4326
        %v4328 = vsub.f32 1.0, %v4327
        %v4329 = vmul.f32 %v4326, %v4328
        %v4330 = vadd.f32 %v4326, %v4329
        %vm4331 = vweird.f32 %v4290
        %vm4332 = vweird.f32 %v4326
        %vm4333 = vmor %vm4331, %vm4332
        %v4334 = vsel %vm4333, %v4326, %v4330
        %v4335 = vand.u32 2147483647, %v4290
        %vm4336 = vcmp.eq.f32.partialorder %v4335, 8.507059e+37
        %v4337 = vand.u32 %v4290, 2147483648
        %v4338 = vor.u32 1.1754944e-38, %v4337
        %v4339 = vsel %vm4336, %v4338, %v4334
        %v4340 = vmul.f32 1.0, %v4339
        %v4341 = vrcp.pop %v4291
        %v4342 = vmul.f32 %v4291, %v4341
        %v4343 = vsub.f32 1.0, %v4342
        %v4344 = vmul.f32 %v4341, %v4343
        %v4345 = vadd.f32 %v4341, %v4344
        %vm4346 = vweird.f32 %v4291
        %vm4347 = vweird.f32 %v4341
        %vm4348 = vmor %vm4346, %vm4347
        %v4349 = vsel %vm4348, %v4341, %v4345
        %v4350 = vand.u32 2147483647, %v4291
        %vm4351 = vcmp.eq.f32.partialorder %v4350, 8.507059e+37
        %v4352 = vand.u32 %v4291, 2147483648
        %v4353 = vor.u32 1.1754944e-38, %v4352
        %v4354 = vsel %vm4351, %v4353, %v4349
        %v4355 = vmul.f32 1.0, %v4354
        %v4356 = vrcp.pop %v4292
        %v4357 = vmul.f32 %v4292, %v4356
        %v4358 = vsub.f32 1.0, %v4357
        %v4359 = vmul.f32 %v4356, %v4358
        %v4360 = vadd.f32 %v4356, %v4359
        %vm4361 = vweird.f32 %v4292
        %vm4362 = vweird.f32 %v4356
        %vm4363 = vmor %vm4361, %vm4362
        %v4364 = vsel %vm4363, %v4356, %v4360
        %v4365 = vand.u32 2147483647, %v4292
        %vm4366 = vcmp.eq.f32.partialorder %v4365, 8.507059e+37
        %v4367 = vand.u32 %v4292, 2147483648
        %v4368 = vor.u32 1.1754944e-38, %v4367
        %v4369 = vsel %vm4366, %v4368, %v4364
        %v4370 = vmul.f32 1.0, %v4369
        %v4371 = vrcp.pop %v4293
        %v4372 = vmul.f32 %v4293, %v4371
        %v4373 = vsub.f32 1.0, %v4372
        %v4374 = vmul.f32 %v4371, %v4373
        %v4375 = vadd.f32 %v4371, %v4374
        %vm4376 = vweird.f32 %v4293
        %vm4377 = vweird.f32 %v4371
        %vm4378 = vmor %vm4376, %vm4377
        %v4379 = vsel %vm4378, %v4371, %v4375
        %v4380 = vand.u32 2147483647, %v4293
        %vm4381 = vcmp.eq.f32.partialorder %v4380, 8.507059e+37
        %v4382 = vand.u32 %v4293, 2147483648
        %v4383 = vor.u32 1.1754944e-38, %v4382
        %v4384 = vsel %vm4381, %v4383, %v4379
        %v4385 = vmul.f32 1.0, %v4384
        %v4386 = vrcp.pop %v4294
        %v4387 = vmul.f32 %v4294, %v4386
        %v4388 = vsub.f32 1.0, %v4387
        %v4389 = vmul.f32 %v4386, %v4388
        %v4390 = vadd.f32 %v4386, %v4389
        %vm4391 = vweird.f32 %v4294
        %vm4392 = vweird.f32 %v4386
        %vm4393 = vmor %vm4391, %vm4392
        %v4394 = vsel %vm4393, %v4386, %v4390
        %v4395 = vand.u32 2147483647, %v4294
        %vm4396 = vcmp.eq.f32.partialorder %v4395, 8.507059e+37
        %v4397 = vand.u32 %v4294, 2147483648
        %v4398 = vor.u32 1.1754944e-38, %v4397
        %v4399 = vsel %vm4396, %v4398, %v4394
        %v4400 = vmul.f32 1.0, %v4399
        %v4401 = vrcp.pop %v4295
        %v4402 = vmul.f32 %v4295, %v4401
        %v4403 = vsub.f32 1.0, %v4402
        %v4404 = vmul.f32 %v4401, %v4403
        %v4405 = vadd.f32 %v4401, %v4404
        %vm4406 = vweird.f32 %v4295
        %vm4407 = vweird.f32 %v4401
        %vm4408 = vmor %vm4406, %vm4407
        %v4409 = vsel %vm4408, %v4401, %v4405
        %v4410 = vand.u32 2147483647, %v4295
        %vm4411 = vcmp.eq.f32.partialorder %v4410, 8.507059e+37
        %v4412 = vand.u32 %v4295, 2147483648
        %v4413 = vor.u32 1.1754944e-38, %v4412
        %v4414 = vsel %vm4411, %v4413, %v4409
        %v4415 = vmul.f32 1.0, %v4414
        %v4424 = vrot.slane %v4155, 1
        %v4425 = vrot.slane %v4157, 1
        %v4426 = vrot.slane %v4159, 1
        %v4427 = vrot.slane %v4161, 1
        %v4428 = vrot.slane %v4163, 1
        %v4429 = vrot.slane %v4165, 1
        %v4430 = vrot.slane %v4167, 1
        %v4431 = vrot.slane %v4169, 1
        %v4441 = vrot.slane %v4239, 1
        %v4442 = vrot.slane %v4239, 2
        %v4443 = vrot.slane %v4239, 3
        %v4444 = vrot.slane %v4239, 4
        %v4445 = vrot.slane %v4239, 5
        %v4446 = vrot.slane %v4239, 6
        %v4447 = vrot.slane %v4239, 7
        %v4455 = vadd.f32 %v4424, %v4239
        %v4456 = vadd.f32 %v4425, %v4441
        %v4457 = vadd.f32 %v4426, %v4442
        %v4458 = vadd.f32 %v4427, %v4443
        %v4459 = vadd.f32 %v4428, %v4444
        %v4460 = vadd.f32 %v4429, %v4445
        %v4461 = vadd.f32 %v4430, %v4446
        %v4462 = vadd.f32 %v4431, %v4447
        %v4463 = vxor.u32 %v4455, 2147483648
        %v4464 = vxor.u32 %v4456, 2147483648
        %v4465 = vxor.u32 %v4457, 2147483648
        %v4466 = vxor.u32 %v4458, 2147483648
        %v4467 = vxor.u32 %v4459, 2147483648
        %v4468 = vxor.u32 %v4460, 2147483648
        %v4469 = vxor.u32 %v4461, 2147483648
        %v4470 = vxor.u32 %v4462, 2147483648
        %v4471 = vmul.f32 %v4463, 1.442695
        %v4472 = vpow.pop %v4471
        %v4473 = vmul.f32 %v4464, 1.442695
        %v4474 = vpow.pop %v4473
        %v4475 = vmul.f32 %v4465, 1.442695
        %v4476 = vpow.pop %v4475
        %v4477 = vmul.f32 %v4466, 1.442695
        %v4478 = vpow.pop %v4477
        %v4479 = vmul.f32 %v4467, 1.442695
        %v4480 = vpow.pop %v4479
        %v4481 = vmul.f32 %v4468, 1.442695
        %v4482 = vpow.pop %v4481
        %v4483 = vmul.f32 %v4469, 1.442695
        %v4484 = vpow.pop %v4483
        %v4485 = vmul.f32 %v4470, 1.442695
        %v4486 = vpow.pop %v4485
        %v4487 = vadd.f32 %v4472, 1.0
        %v4488 = vadd.f32 %v4474, 1.0
        %v4489 = vadd.f32 %v4476, 1.0
        %v4490 = vadd.f32 %v4478, 1.0
        %v4491 = vadd.f32 %v4480, 1.0
        %v4492 = vadd.f32 %v4482, 1.0
        %v4493 = vadd.f32 %v4484, 1.0
        %v4494 = vadd.f32 %v4486, 1.0
        %v4495 = vrcp.pop %v4487
        %v4496 = vmul.f32 %v4487, %v4495
        %v4497 = vsub.f32 1.0, %v4496
        %v4498 = vmul.f32 %v4495, %v4497
        %v4499 = vadd.f32 %v4495, %v4498
        %vm4500 = vweird.f32 %v4487
        %vm4501 = vweird.f32 %v4495
        %vm4502 = vmor %vm4500, %vm4501
        %v4503 = vsel %vm4502, %v4495, %v4499
        %v4504 = vand.u32 2147483647, %v4487
        %vm4505 = vcmp.eq.f32.partialorder %v4504, 8.507059e+37
        %v4506 = vand.u32 %v4487, 2147483648
        %v4507 = vor.u32 1.1754944e-38, %v4506
        %v4508 = vsel %vm4505, %v4507, %v4503
        %v4509 = vmul.f32 1.0, %v4508
        %v4510 = vrcp.pop %v4488
        %v4511 = vmul.f32 %v4488, %v4510
        %v4512 = vsub.f32 1.0, %v4511
        %v4513 = vmul.f32 %v4510, %v4512
        %v4514 = vadd.f32 %v4510, %v4513
        %vm4515 = vweird.f32 %v4488
        %vm4516 = vweird.f32 %v4510
        %vm4517 = vmor %vm4515, %vm4516
        %v4518 = vsel %vm4517, %v4510, %v4514
        %v4519 = vand.u32 2147483647, %v4488
        %vm4520 = vcmp.eq.f32.partialorder %v4519, 8.507059e+37
        %v4521 = vand.u32 %v4488, 2147483648
        %v4522 = vor.u32 1.1754944e-38, %v4521
        %v4523 = vsel %vm4520, %v4522, %v4518
        %v4524 = vmul.f32 1.0, %v4523
        %v4525 = vrcp.pop %v4489
        %v4526 = vmul.f32 %v4489, %v4525
        %v4527 = vsub.f32 1.0, %v4526
        %v4528 = vmul.f32 %v4525, %v4527
        %v4529 = vadd.f32 %v4525, %v4528
        %vm4530 = vweird.f32 %v4489
        %vm4531 = vweird.f32 %v4525
        %vm4532 = vmor %vm4530, %vm4531
        %v4533 = vsel %vm4532, %v4525, %v4529
        %v4534 = vand.u32 2147483647, %v4489
        %vm4535 = vcmp.eq.f32.partialorder %v4534, 8.507059e+37
        %v4536 = vand.u32 %v4489, 2147483648
        %v4537 = vor.u32 1.1754944e-38, %v4536
        %v4538 = vsel %vm4535, %v4537, %v4533
        %v4539 = vmul.f32 1.0, %v4538
        %v4540 = vrcp.pop %v4490
        %v4541 = vmul.f32 %v4490, %v4540
        %v4542 = vsub.f32 1.0, %v4541
        %v4543 = vmul.f32 %v4540, %v4542
        %v4544 = vadd.f32 %v4540, %v4543
        %vm4545 = vweird.f32 %v4490
        %vm4546 = vweird.f32 %v4540
        %vm4547 = vmor %vm4545, %vm4546
        %v4548 = vsel %vm4547, %v4540, %v4544
        %v4549 = vand.u32 2147483647, %v4490
        %vm4550 = vcmp.eq.f32.partialorder %v4549, 8.507059e+37
        %v4551 = vand.u32 %v4490, 2147483648
        %v4552 = vor.u32 1.1754944e-38, %v4551
        %v4553 = vsel %vm4550, %v4552, %v4548
        %v4554 = vmul.f32 1.0, %v4553
        %v4555 = vrcp.pop %v4491
        %v4556 = vmul.f32 %v4491, %v4555
        %v4557 = vsub.f32 1.0, %v4556
        %v4558 = vmul.f32 %v4555, %v4557
        %v4559 = vadd.f32 %v4555, %v4558
        %vm4560 = vweird.f32 %v4491
        %vm4561 = vweird.f32 %v4555
        %vm4562 = vmor %vm4560, %vm4561
        %v4563 = vsel %vm4562, %v4555, %v4559
        %v4564 = vand.u32 2147483647, %v4491
        %vm4565 = vcmp.eq.f32.partialorder %v4564, 8.507059e+37
        %v4566 = vand.u32 %v4491, 2147483648
        %v4567 = vor.u32 1.1754944e-38, %v4566
        %v4568 = vsel %vm4565, %v4567, %v4563
        %v4569 = vmul.f32 1.0, %v4568
        %v4570 = vrcp.pop %v4492
        %v4571 = vmul.f32 %v4492, %v4570
        %v4572 = vsub.f32 1.0, %v4571
        %v4573 = vmul.f32 %v4570, %v4572
        %v4574 = vadd.f32 %v4570, %v4573
        %vm4575 = vweird.f32 %v4492
        %vm4576 = vweird.f32 %v4570
        %vm4577 = vmor %vm4575, %vm4576
        %v4578 = vsel %vm4577, %v4570, %v4574
        %v4579 = vand.u32 2147483647, %v4492
        %vm4580 = vcmp.eq.f32.partialorder %v4579, 8.507059e+37
        %v4581 = vand.u32 %v4492, 2147483648
        %v4582 = vor.u32 1.1754944e-38, %v4581
        %v4583 = vsel %vm4580, %v4582, %v4578
        %v4584 = vmul.f32 1.0, %v4583
        %v4585 = vrcp.pop %v4493
        %v4586 = vmul.f32 %v4493, %v4585
        %v4587 = vsub.f32 1.0, %v4586
        %v4588 = vmul.f32 %v4585, %v4587
        %v4589 = vadd.f32 %v4585, %v4588
        %vm4590 = vweird.f32 %v4493
        %vm4591 = vweird.f32 %v4585
        %vm4592 = vmor %vm4590, %vm4591
        %v4593 = vsel %vm4592, %v4585, %v4589
        %v4594 = vand.u32 2147483647, %v4493
        %vm4595 = vcmp.eq.f32.partialorder %v4594, 8.507059e+37
        %v4596 = vand.u32 %v4493, 2147483648
        %v4597 = vor.u32 1.1754944e-38, %v4596
        %v4598 = vsel %vm4595, %v4597, %v4593
        %v4599 = vmul.f32 1.0, %v4598
        %v4600 = vrcp.pop %v4494
        %v4601 = vmul.f32 %v4494, %v4600
        %v4602 = vsub.f32 1.0, %v4601
        %v4603 = vmul.f32 %v4600, %v4602
        %v4604 = vadd.f32 %v4600, %v4603
        %vm4605 = vweird.f32 %v4494
        %vm4606 = vweird.f32 %v4600
        %vm4607 = vmor %vm4605, %vm4606
        %v4608 = vsel %vm4607, %v4600, %v4604
        %v4609 = vand.u32 2147483647, %v4494
        %vm4610 = vcmp.eq.f32.partialorder %v4609, 8.507059e+37
        %v4611 = vand.u32 %v4494, 2147483648
        %v4612 = vor.u32 1.1754944e-38, %v4611
        %v4613 = vsel %vm4610, %v4612, %v4608
        %v4614 = vmul.f32 1.0, %v4613
        %v4615 = vmul.f32 %v4310, %v4082
        %v4616 = vmul.f32 %v4325, %v4083
        %v4617 = vmul.f32 %v4340, %v4084
        %v4618 = vmul.f32 %v4355, %v4085
        %v4619 = vmul.f32 %v4370, %v4086
        %v4620 = vmul.f32 %v4385, %v4087
        %v4621 = vmul.f32 %v4400, %v4088
        %v4622 = vmul.f32 %v4415, %v4089
        %4631 = vst [vmem:[#allocation1] ss:$9 sm:$0xff] %v4615
        %s4632 = scalar_lea.vmem [#allocation1], 1
        %4633 = vst [vmem:[%s4632] ss:$9 sm:$0xff] %v4616
        %s4634 = scalar_lea.vmem [#allocation1], 2
        %4635 = vst [vmem:[%s4634] ss:$9 sm:$0xff] %v4617
        %s4636 = scalar_lea.vmem [#allocation1], 3
        %4637 = vst [vmem:[%s4636] ss:$9 sm:$0xff] %v4618
        %s4638 = scalar_lea.vmem [#allocation1], 4
        %4639 = vst [vmem:[%s4638] ss:$9 sm:$0xff] %v4619
        %s4640 = scalar_lea.vmem [#allocation1], 5
        %4641 = vst [vmem:[%s4640] ss:$9 sm:$0xff] %v4620
        %s4642 = scalar_lea.vmem [#allocation1], 6
        %4643 = vst [vmem:[%s4642] ss:$9 sm:$0xff] %v4621
        %s4644 = scalar_lea.vmem [#allocation1], 7
        %4645 = vst [vmem:[%s4644] ss:$9 sm:$0xff] %v4622
        %v4646 = vld [vmem:[#allocation1] sm:$0xff]
        %4648 = vmatpush.msra.mxu0 %v653
        %4649 = vmatpush.msra.mxu0 %v652
        %4650 = vmatpush.msra.mxu0 %v651
        %4651 = vmatpush.msra.mxu0 %v650
        %4652 = vmatpush.msra.mxu0 %v649
        %4653 = vmatpush.msra.mxu0 %v648
        %4654 = vmatpush.msra.mxu0 %v647
        %4655 = vmatpush.msra.mxu0 %v646
        %4656 = vmatpush.msra.mxu0 %v645
        %4657 = vmatpush.msra.mxu0 %v644
        %4658 = vmatpush.msra.mxu0 %v643
        %4659 = vmatpush.msra.mxu0 %v642
        %4660 = vmatpush.msra.mxu0 %v641
        %4661 = vmatpush.msra.mxu0 %v640
        %4662 = vmatpush.msra.mxu0 %v639
        %4663 = vmatpush.msra.mxu0 %v638
        %4664 = vmatmul.f32.gmra.mxu0 %v4646
        %v4665 = vpop.f32.mrf.mxu0
        %v4666 = vadd.f32 0.0, %v4665
        %4667 = vdwg.mxu0
        %v4668 = vrot.slane %v4155, 2
        %v4669 = vrot.slane %v4157, 2
        %v4670 = vrot.slane %v4159, 2
        %v4671 = vrot.slane %v4161, 2
        %v4672 = vrot.slane %v4163, 2
        %v4673 = vrot.slane %v4165, 2
        %v4674 = vrot.slane %v4167, 2
        %v4675 = vrot.slane %v4169, 2
        %v4685 = vrot.slane %v4666, 1
        %v4686 = vrot.slane %v4666, 2
        %v4687 = vrot.slane %v4666, 3
        %v4688 = vrot.slane %v4666, 4
        %v4689 = vrot.slane %v4666, 5
        %v4690 = vrot.slane %v4666, 6
        %v4691 = vrot.slane %v4666, 7
        %v4699 = vadd.f32 %v4668, %v4666
        %v4700 = vadd.f32 %v4669, %v4685
        %v4701 = vadd.f32 %v4670, %v4686
        %v4702 = vadd.f32 %v4671, %v4687
        %v4703 = vadd.f32 %v4672, %v4688
        %v4704 = vadd.f32 %v4673, %v4689
        %v4705 = vadd.f32 %v4674, %v4690
        %v4706 = vadd.f32 %v4675, %v4691
        %v4707 = vtanh.pop %v4699
        %v4708 = vtanh.pop %v4700
        %v4709 = vtanh.pop %v4701
        %v4710 = vtanh.pop %v4702
        %v4711 = vtanh.pop %v4703
        %v4712 = vtanh.pop %v4704
        %v4713 = vtanh.pop %v4705
        %v4714 = vtanh.pop %v4706
        %4716 = vset.pattern.permute.xlu0 0
        %4717 = vperm.xlu0 %4716, %v4170
        %v4718 = vpop.permute.xlu0 %4717
        %4721 = vset.pattern.permute.xlu0 0
        %4722 = vperm.xlu0 %4721, %v4171
        %v4723 = vpop.permute.xlu0 %4722
        %4726 = vset.pattern.permute.xlu0 0
        %4727 = vperm.xlu0 %4726, %v4172
        %v4728 = vpop.permute.xlu0 %4727
        %4731 = vset.pattern.permute.xlu0 0
        %4732 = vperm.xlu0 %4731, %v4173
        %v4733 = vpop.permute.xlu0 %4732
        %4736 = vset.pattern.permute.xlu0 0
        %4737 = vperm.xlu0 %4736, %v4174
        %v4738 = vpop.permute.xlu0 %4737
        %4741 = vset.pattern.permute.xlu0 0
        %4742 = vperm.xlu0 %4741, %v4175
        %v4743 = vpop.permute.xlu0 %4742
        %4746 = vset.pattern.permute.xlu0 0
        %4747 = vperm.xlu0 %4746, %v4176
        %v4748 = vpop.permute.xlu0 %4747
        %4751 = vset.pattern.permute.xlu0 0
        %4752 = vperm.xlu0 %4751, %v4177
        %v4753 = vpop.permute.xlu0 %4752
        %v4755 = vmul.f32 %v4718, %v4509
        %v4756 = vmul.f32 %v4723, %v4524
        %v4757 = vmul.f32 %v4728, %v4539
        %v4758 = vmul.f32 %v4733, %v4554
        %v4759 = vmul.f32 %v4738, %v4569
        %v4760 = vmul.f32 %v4743, %v4584
        %v4761 = vmul.f32 %v4748, %v4599
        %v4762 = vmul.f32 %v4753, %v4614
        %v4763 = vsub.f32 1.0, %v4755
        %v4764 = vsub.f32 1.0, %v4756
        %v4765 = vsub.f32 1.0, %v4757
        %v4766 = vsub.f32 1.0, %v4758
        %v4767 = vsub.f32 1.0, %v4759
        %v4768 = vsub.f32 1.0, %v4760
        %v4769 = vsub.f32 1.0, %v4761
        %v4770 = vsub.f32 1.0, %v4762
        %v4771 = vmul.f32 %v4763, %v4082
        %v4772 = vmul.f32 %v4764, %v4083
        %v4773 = vmul.f32 %v4765, %v4084
        %v4774 = vmul.f32 %v4766, %v4085
        %v4775 = vmul.f32 %v4767, %v4086
        %v4776 = vmul.f32 %v4768, %v4087
        %v4777 = vmul.f32 %v4769, %v4088
        %v4778 = vmul.f32 %v4770, %v4089
        %v4779 = vmul.f32 %v4755, %v4707
        %v4780 = vmul.f32 %v4756, %v4708
        %v4781 = vmul.f32 %v4757, %v4709
        %v4782 = vmul.f32 %v4758, %v4710
        %v4783 = vmul.f32 %v4759, %v4711
        %v4784 = vmul.f32 %v4760, %v4712
        %v4785 = vmul.f32 %v4761, %v4713
        %v4786 = vmul.f32 %v4762, %v4714
        %v4787 = vadd.f32 %v4771, %v4779
        %v4788 = vadd.f32 %v4772, %v4780
        %v4789 = vadd.f32 %v4773, %v4781
        %v4790 = vadd.f32 %v4774, %v4782
        %v4791 = vadd.f32 %v4775, %v4783
        %v4792 = vadd.f32 %v4776, %v4784
        %v4793 = vadd.f32 %v4777, %v4785
        %v4794 = vadd.f32 %v4778, %v4786
        %vm4795 = vcmp.ne.f32.partialorder %v4170, 0.0
        %vm4796 = vcmp.ne.f32.partialorder %v4171, 0.0
        %vm4797 = vcmp.ne.f32.partialorder %v4172, 0.0
        %vm4798 = vcmp.ne.f32.partialorder %v4173, 0.0
        %vm4799 = vcmp.ne.f32.partialorder %v4174, 0.0
        %vm4800 = vcmp.ne.f32.partialorder %v4175, 0.0
        %vm4801 = vcmp.ne.f32.partialorder %v4176, 0.0
        %vm4802 = vcmp.ne.f32.partialorder %v4177, 0.0
        %v4803 = vsel %vm4795, 1, 0
        %v4804 = vsel %vm4796, 1, 0
        %v4805 = vsel %vm4797, 1, 0
        %v4806 = vsel %vm4798, 1, 0
        %v4807 = vsel %vm4799, 1, 0
        %v4808 = vsel %vm4800, 1, 0
        %v4809 = vsel %vm4801, 1, 0
        %v4810 = vsel %vm4802, 1, 0
        %4811 = vset.pattern.permute.xlu0 1
        %4812 = vperm.xlu0 %4811, %v4803
        %v4813 = vpop.permute.xlu0 %4812
        %4814 = vset.pattern.permute.xlu0 1
        %4815 = vperm.xlu0 %4814, %v4804
        %v4816 = vpop.permute.xlu0 %4815
        %4817 = vset.pattern.permute.xlu0 1
        %4818 = vperm.xlu0 %4817, %v4805
        %v4819 = vpop.permute.xlu0 %4818
        %4820 = vset.pattern.permute.xlu0 1
        %4821 = vperm.xlu0 %4820, %v4806
        %v4822 = vpop.permute.xlu0 %4821
        %4823 = vset.pattern.permute.xlu0 1
        %4824 = vperm.xlu0 %4823, %v4807
        %v4825 = vpop.permute.xlu0 %4824
        %4826 = vset.pattern.permute.xlu0 1
        %4827 = vperm.xlu0 %4826, %v4808
        %v4828 = vpop.permute.xlu0 %4827
        %4829 = vset.pattern.permute.xlu0 1
        %4830 = vperm.xlu0 %4829, %v4809
        %v4831 = vpop.permute.xlu0 %4830
        %4832 = vset.pattern.permute.xlu0 1
        %4833 = vperm.xlu0 %4832, %v4810
        %v4834 = vpop.permute.xlu0 %4833
        %vm4835 = vcmp.eq.s32.totalorder %v4813, 1
        %vm4836 = vcmp.eq.s32.totalorder %v4816, 1
        %vm4837 = vcmp.eq.s32.totalorder %v4819, 1
        %vm4838 = vcmp.eq.s32.totalorder %v4822, 1
        %vm4839 = vcmp.eq.s32.totalorder %v4825, 1
        %vm4840 = vcmp.eq.s32.totalorder %v4828, 1
        %vm4841 = vcmp.eq.s32.totalorder %v4831, 1
        %vm4842 = vcmp.eq.s32.totalorder %v4834, 1
        %v4843 = vsel %vm4835, %v4787, 0.0
        %v4844 = vsel %vm4836, %v4788, 0.0
        %v4845 = vsel %vm4837, %v4789, 0.0
        %v4846 = vsel %vm4838, %v4790, 0.0
        %v4847 = vsel %vm4839, %v4791, 0.0
        %v4848 = vsel %vm4840, %v4792, 0.0
        %v4849 = vsel %vm4841, %v4793, 0.0
        %v4850 = vsel %vm4842, %v4794, 0.0
        %v4851 = vmax.f32 %v4146, %v4843
        %v4852 = vmax.f32 %v4147, %v4844
        %v4853 = vmax.f32 %v4148, %v4845
        %v4854 = vmax.f32 %v4149, %v4846
        %v4855 = vmax.f32 %v4150, %v4847
        %v4856 = vmax.f32 %v4151, %v4848
        %v4857 = vmax.f32 %v4152, %v4849
        %v4858 = vmax.f32 %v4153, %v4850
        %s4859 = scalar_lea.vmem [#allocation2], 6
        %v4860 = vld [vmem:[%s4859] ss:$8 sm:$0x7]
        %s4861 = scalar_lea.vmem [#allocation2], 30
        %v4862 = vld [vmem:[%s4861] ss:$8 sm:$0x7]
        %s4863 = scalar_lea.vmem [#allocation2], 54
        %v4864 = vld [vmem:[%s4863] ss:$8 sm:$0x7]
        %s4865 = scalar_lea.vmem [#allocation2], 78
        %v4866 = vld [vmem:[%s4865] ss:$8 sm:$0x7]
        %s4867 = scalar_lea.vmem [#allocation2], 102
        %v4868 = vld [vmem:[%s4867] ss:$8 sm:$0x7]
        %s4869 = scalar_lea.vmem [#allocation2], 126
        %v4870 = vld [vmem:[%s4869] ss:$8 sm:$0x7]
        %s4871 = scalar_lea.vmem [#allocation2], 150
        %v4872 = vld [vmem:[%s4871] ss:$8 sm:$0x7]
        %s4873 = scalar_lea.vmem [#allocation2], 174
        %v4874 = vld [vmem:[%s4873] ss:$8 sm:$0x7]
        %v4875 = vld [vmem:[%s393 + $0x6] sm:$0x1]
        %v4876 = vld [vmem:[%s393 + $0xe] sm:$0x1]
        %v4877 = vld [vmem:[%s393 + $0x16] sm:$0x1]
        %v4878 = vld [vmem:[%s393 + $0x1e] sm:$0x1]
        %v4879 = vld [vmem:[%s393 + $0x26] sm:$0x1]
        %v4880 = vld [vmem:[%s393 + $0x2e] sm:$0x1]
        %v4881 = vld [vmem:[%s393 + $0x36] sm:$0x1]
        %v4882 = vld [vmem:[%s393 + $0x3e] sm:$0x1]
        %v4891 = vrot.slane %v4788, 7
        %v4892 = vsel %vm1360, %v4891, %v4787
        %v4893 = vrot.slane %v4789, 6
        %v4894 = vsel %vm1363, %v4893, %v4892
        %v4895 = vrot.slane %v4790, 5
        %v4896 = vsel %vm1366, %v4895, %v4894
        %v4897 = vrot.slane %v4791, 4
        %v4898 = vsel %vm1369, %v4897, %v4896
        %v4899 = vrot.slane %v4792, 3
        %v4900 = vsel %vm1372, %v4899, %v4898
        %v4901 = vrot.slane %v4793, 2
        %v4902 = vsel %vm1375, %v4901, %v4900
        %v4903 = vrot.slane %v4794, 1
        %v4904 = vsel %vm1378, %v4903, %v4902
        %4906 = vmatpush.msra.mxu0 %v636
        %4907 = vmatpush.msra.mxu0 %v634
        %4908 = vmatpush.msra.mxu0 %v632
        %4909 = vmatpush.msra.mxu0 %v630
        %4910 = vmatpush.msra.mxu0 %v628
        %4911 = vmatpush.msra.mxu0 %v626
        %4912 = vmatpush.msra.mxu0 %v624
        %4913 = vmatpush.msra.mxu0 %v622
        %4914 = vmatpush.msra.mxu0 %v620
        %4915 = vmatpush.msra.mxu0 %v618
        %4916 = vmatpush.msra.mxu0 %v616
        %4917 = vmatpush.msra.mxu0 %v614
        %4918 = vmatpush.msra.mxu0 %v612
        %4919 = vmatpush.msra.mxu0 %v610
        %4920 = vmatpush.msra.mxu0 %v608
        %4921 = vmatpush.msra.mxu0 %v606
        %4922 = vmatmul.f32.gmra.mxu0 %v4904
        %v4923 = vpop.f32.mrf.mxu0
        %v4924 = vadd.f32 0.0, %v4923
        %4925 = vdwg.mxu0
        %4926 = vmatpush.msra.mxu0 %v637
        %4927 = vmatpush.msra.mxu0 %v635
        %4928 = vmatpush.msra.mxu0 %v633
        %4929 = vmatpush.msra.mxu0 %v631
        %4930 = vmatpush.msra.mxu0 %v629
        %4931 = vmatpush.msra.mxu0 %v627
        %4932 = vmatpush.msra.mxu0 %v625
        %4933 = vmatpush.msra.mxu0 %v623
        %4934 = vmatpush.msra.mxu0 %v621
        %4935 = vmatpush.msra.mxu0 %v619
        %4936 = vmatpush.msra.mxu0 %v617
        %4937 = vmatpush.msra.mxu0 %v615
        %4938 = vmatpush.msra.mxu0 %v613
        %4939 = vmatpush.msra.mxu0 %v611
        %4940 = vmatpush.msra.mxu0 %v609
        %4941 = vmatpush.msra.mxu0 %v607
        %4942 = vmatmul.f32.gmra.mxu0 %v4904
        %v4943 = vpop.f32.mrf.mxu0
        %v4944 = vadd.f32 0.0, %v4943
        %4945 = vdwg.mxu0
        %v4947 = vrot.slane %v4924, 1
        %v4948 = vrot.slane %v4924, 2
        %v4949 = vrot.slane %v4924, 3
        %v4950 = vrot.slane %v4924, 4
        %v4951 = vrot.slane %v4924, 5
        %v4952 = vrot.slane %v4924, 6
        %v4953 = vrot.slane %v4924, 7
        %v4961 = vadd.f32 %v4860, %v4924
        %v4962 = vadd.f32 %v4862, %v4947
        %v4963 = vadd.f32 %v4864, %v4948
        %v4964 = vadd.f32 %v4866, %v4949
        %v4965 = vadd.f32 %v4868, %v4950
        %v4966 = vadd.f32 %v4870, %v4951
        %v4967 = vadd.f32 %v4872, %v4952
        %v4968 = vadd.f32 %v4874, %v4953
        %v4969 = vxor.u32 %v4961, 2147483648
        %v4970 = vxor.u32 %v4962, 2147483648
        %v4971 = vxor.u32 %v4963, 2147483648
        %v4972 = vxor.u32 %v4964, 2147483648
        %v4973 = vxor.u32 %v4965, 2147483648
        %v4974 = vxor.u32 %v4966, 2147483648
        %v4975 = vxor.u32 %v4967, 2147483648
        %v4976 = vxor.u32 %v4968, 2147483648
        %v4977 = vmul.f32 %v4969, 1.442695
        %v4978 = vpow.pop %v4977
        %v4979 = vmul.f32 %v4970, 1.442695
        %v4980 = vpow.pop %v4979
        %v4981 = vmul.f32 %v4971, 1.442695
        %v4982 = vpow.pop %v4981
        %v4983 = vmul.f32 %v4972, 1.442695
        %v4984 = vpow.pop %v4983
        %v4985 = vmul.f32 %v4973, 1.442695
        %v4986 = vpow.pop %v4985
        %v4987 = vmul.f32 %v4974, 1.442695
        %v4988 = vpow.pop %v4987
        %v4989 = vmul.f32 %v4975, 1.442695
        %v4990 = vpow.pop %v4989
        %v4991 = vmul.f32 %v4976, 1.442695
        %v4992 = vpow.pop %v4991
        %v4993 = vadd.f32 %v4978, 1.0
        %v4994 = vadd.f32 %v4980, 1.0
        %v4995 = vadd.f32 %v4982, 1.0
        %v4996 = vadd.f32 %v4984, 1.0
        %v4997 = vadd.f32 %v4986, 1.0
        %v4998 = vadd.f32 %v4988, 1.0
        %v4999 = vadd.f32 %v4990, 1.0
        %v5000 = vadd.f32 %v4992, 1.0
        %v5001 = vrcp.pop %v4993
        %v5002 = vmul.f32 %v4993, %v5001
        %v5003 = vsub.f32 1.0, %v5002
        %v5004 = vmul.f32 %v5001, %v5003
        %v5005 = vadd.f32 %v5001, %v5004
        %vm5006 = vweird.f32 %v4993
        %vm5007 = vweird.f32 %v5001
        %vm5008 = vmor %vm5006, %vm5007
        %v5009 = vsel %vm5008, %v5001, %v5005
        %v5010 = vand.u32 2147483647, %v4993
        %vm5011 = vcmp.eq.f32.partialorder %v5010, 8.507059e+37
        %v5012 = vand.u32 %v4993, 2147483648
        %v5013 = vor.u32 1.1754944e-38, %v5012
        %v5014 = vsel %vm5011, %v5013, %v5009
        %v5015 = vmul.f32 1.0, %v5014
        %v5016 = vrcp.pop %v4994
        %v5017 = vmul.f32 %v4994, %v5016
        %v5018 = vsub.f32 1.0, %v5017
        %v5019 = vmul.f32 %v5016, %v5018
        %v5020 = vadd.f32 %v5016, %v5019
        %vm5021 = vweird.f32 %v4994
        %vm5022 = vweird.f32 %v5016
        %vm5023 = vmor %vm5021, %vm5022
        %v5024 = vsel %vm5023, %v5016, %v5020
        %v5025 = vand.u32 2147483647, %v4994
        %vm5026 = vcmp.eq.f32.partialorder %v5025, 8.507059e+37
        %v5027 = vand.u32 %v4994, 2147483648
        %v5028 = vor.u32 1.1754944e-38, %v5027
        %v5029 = vsel %vm5026, %v5028, %v5024
        %v5030 = vmul.f32 1.0, %v5029
        %v5031 = vrcp.pop %v4995
        %v5032 = vmul.f32 %v4995, %v5031
        %v5033 = vsub.f32 1.0, %v5032
        %v5034 = vmul.f32 %v5031, %v5033
        %v5035 = vadd.f32 %v5031, %v5034
        %vm5036 = vweird.f32 %v4995
        %vm5037 = vweird.f32 %v5031
        %vm5038 = vmor %vm5036, %vm5037
        %v5039 = vsel %vm5038, %v5031, %v5035
        %v5040 = vand.u32 2147483647, %v4995
        %vm5041 = vcmp.eq.f32.partialorder %v5040, 8.507059e+37
        %v5042 = vand.u32 %v4995, 2147483648
        %v5043 = vor.u32 1.1754944e-38, %v5042
        %v5044 = vsel %vm5041, %v5043, %v5039
        %v5045 = vmul.f32 1.0, %v5044
        %v5046 = vrcp.pop %v4996
        %v5047 = vmul.f32 %v4996, %v5046
        %v5048 = vsub.f32 1.0, %v5047
        %v5049 = vmul.f32 %v5046, %v5048
        %v5050 = vadd.f32 %v5046, %v5049
        %vm5051 = vweird.f32 %v4996
        %vm5052 = vweird.f32 %v5046
        %vm5053 = vmor %vm5051, %vm5052
        %v5054 = vsel %vm5053, %v5046, %v5050
        %v5055 = vand.u32 2147483647, %v4996
        %vm5056 = vcmp.eq.f32.partialorder %v5055, 8.507059e+37
        %v5057 = vand.u32 %v4996, 2147483648
        %v5058 = vor.u32 1.1754944e-38, %v5057
        %v5059 = vsel %vm5056, %v5058, %v5054
        %v5060 = vmul.f32 1.0, %v5059
        %v5061 = vrcp.pop %v4997
        %v5062 = vmul.f32 %v4997, %v5061
        %v5063 = vsub.f32 1.0, %v5062
        %v5064 = vmul.f32 %v5061, %v5063
        %v5065 = vadd.f32 %v5061, %v5064
        %vm5066 = vweird.f32 %v4997
        %vm5067 = vweird.f32 %v5061
        %vm5068 = vmor %vm5066, %vm5067
        %v5069 = vsel %vm5068, %v5061, %v5065
        %v5070 = vand.u32 2147483647, %v4997
        %vm5071 = vcmp.eq.f32.partialorder %v5070, 8.507059e+37
        %v5072 = vand.u32 %v4997, 2147483648
        %v5073 = vor.u32 1.1754944e-38, %v5072
        %v5074 = vsel %vm5071, %v5073, %v5069
        %v5075 = vmul.f32 1.0, %v5074
        %v5076 = vrcp.pop %v4998
        %v5077 = vmul.f32 %v4998, %v5076
        %v5078 = vsub.f32 1.0, %v5077
        %v5079 = vmul.f32 %v5076, %v5078
        %v5080 = vadd.f32 %v5076, %v5079
        %vm5081 = vweird.f32 %v4998
        %vm5082 = vweird.f32 %v5076
        %vm5083 = vmor %vm5081, %vm5082
        %v5084 = vsel %vm5083, %v5076, %v5080
        %v5085 = vand.u32 2147483647, %v4998
        %vm5086 = vcmp.eq.f32.partialorder %v5085, 8.507059e+37
        %v5087 = vand.u32 %v4998, 2147483648
        %v5088 = vor.u32 1.1754944e-38, %v5087
        %v5089 = vsel %vm5086, %v5088, %v5084
        %v5090 = vmul.f32 1.0, %v5089
        %v5091 = vrcp.pop %v4999
        %v5092 = vmul.f32 %v4999, %v5091
        %v5093 = vsub.f32 1.0, %v5092
        %v5094 = vmul.f32 %v5091, %v5093
        %v5095 = vadd.f32 %v5091, %v5094
        %vm5096 = vweird.f32 %v4999
        %vm5097 = vweird.f32 %v5091
        %vm5098 = vmor %vm5096, %vm5097
        %v5099 = vsel %vm5098, %v5091, %v5095
        %v5100 = vand.u32 2147483647, %v4999
        %vm5101 = vcmp.eq.f32.partialorder %v5100, 8.507059e+37
        %v5102 = vand.u32 %v4999, 2147483648
        %v5103 = vor.u32 1.1754944e-38, %v5102
        %v5104 = vsel %vm5101, %v5103, %v5099
        %v5105 = vmul.f32 1.0, %v5104
        %v5106 = vrcp.pop %v5000
        %v5107 = vmul.f32 %v5000, %v5106
        %v5108 = vsub.f32 1.0, %v5107
        %v5109 = vmul.f32 %v5106, %v5108
        %v5110 = vadd.f32 %v5106, %v5109
        %vm5111 = vweird.f32 %v5000
        %vm5112 = vweird.f32 %v5106
        %vm5113 = vmor %vm5111, %vm5112
        %v5114 = vsel %vm5113, %v5106, %v5110
        %v5115 = vand.u32 2147483647, %v5000
        %vm5116 = vcmp.eq.f32.partialorder %v5115, 8.507059e+37
        %v5117 = vand.u32 %v5000, 2147483648
        %v5118 = vor.u32 1.1754944e-38, %v5117
        %v5119 = vsel %vm5116, %v5118, %v5114
        %v5120 = vmul.f32 1.0, %v5119
        %v5129 = vrot.slane %v4860, 1
        %v5130 = vrot.slane %v4862, 1
        %v5131 = vrot.slane %v4864, 1
        %v5132 = vrot.slane %v4866, 1
        %v5133 = vrot.slane %v4868, 1
        %v5134 = vrot.slane %v4870, 1
        %v5135 = vrot.slane %v4872, 1
        %v5136 = vrot.slane %v4874, 1
        %v5146 = vrot.slane %v4944, 1
        %v5147 = vrot.slane %v4944, 2
        %v5148 = vrot.slane %v4944, 3
        %v5149 = vrot.slane %v4944, 4
        %v5150 = vrot.slane %v4944, 5
        %v5151 = vrot.slane %v4944, 6
        %v5152 = vrot.slane %v4944, 7
        %v5160 = vadd.f32 %v5129, %v4944
        %v5161 = vadd.f32 %v5130, %v5146
        %v5162 = vadd.f32 %v5131, %v5147
        %v5163 = vadd.f32 %v5132, %v5148
        %v5164 = vadd.f32 %v5133, %v5149
        %v5165 = vadd.f32 %v5134, %v5150
        %v5166 = vadd.f32 %v5135, %v5151
        %v5167 = vadd.f32 %v5136, %v5152
        %v5168 = vxor.u32 %v5160, 2147483648
        %v5169 = vxor.u32 %v5161, 2147483648
        %v5170 = vxor.u32 %v5162, 2147483648
        %v5171 = vxor.u32 %v5163, 2147483648
        %v5172 = vxor.u32 %v5164, 2147483648
        %v5173 = vxor.u32 %v5165, 2147483648
        %v5174 = vxor.u32 %v5166, 2147483648
        %v5175 = vxor.u32 %v5167, 2147483648
        %v5176 = vmul.f32 %v5168, 1.442695
        %v5177 = vpow.pop %v5176
        %v5178 = vmul.f32 %v5169, 1.442695
        %v5179 = vpow.pop %v5178
        %v5180 = vmul.f32 %v5170, 1.442695
        %v5181 = vpow.pop %v5180
        %v5182 = vmul.f32 %v5171, 1.442695
        %v5183 = vpow.pop %v5182
        %v5184 = vmul.f32 %v5172, 1.442695
        %v5185 = vpow.pop %v5184
        %v5186 = vmul.f32 %v5173, 1.442695
        %v5187 = vpow.pop %v5186
        %v5188 = vmul.f32 %v5174, 1.442695
        %v5189 = vpow.pop %v5188
        %v5190 = vmul.f32 %v5175, 1.442695
        %v5191 = vpow.pop %v5190
        %v5192 = vadd.f32 %v5177, 1.0
        %v5193 = vadd.f32 %v5179, 1.0
        %v5194 = vadd.f32 %v5181, 1.0
        %v5195 = vadd.f32 %v5183, 1.0
        %v5196 = vadd.f32 %v5185, 1.0
        %v5197 = vadd.f32 %v5187, 1.0
        %v5198 = vadd.f32 %v5189, 1.0
        %v5199 = vadd.f32 %v5191, 1.0
        %v5200 = vrcp.pop %v5192
        %v5201 = vmul.f32 %v5192, %v5200
        %v5202 = vsub.f32 1.0, %v5201
        %v5203 = vmul.f32 %v5200, %v5202
        %v5204 = vadd.f32 %v5200, %v5203
        %vm5205 = vweird.f32 %v5192
        %vm5206 = vweird.f32 %v5200
        %vm5207 = vmor %vm5205, %vm5206
        %v5208 = vsel %vm5207, %v5200, %v5204
        %v5209 = vand.u32 2147483647, %v5192
        %vm5210 = vcmp.eq.f32.partialorder %v5209, 8.507059e+37
        %v5211 = vand.u32 %v5192, 2147483648
        %v5212 = vor.u32 1.1754944e-38, %v5211
        %v5213 = vsel %vm5210, %v5212, %v5208
        %v5214 = vmul.f32 1.0, %v5213
        %v5215 = vrcp.pop %v5193
        %v5216 = vmul.f32 %v5193, %v5215
        %v5217 = vsub.f32 1.0, %v5216
        %v5218 = vmul.f32 %v5215, %v5217
        %v5219 = vadd.f32 %v5215, %v5218
        %vm5220 = vweird.f32 %v5193
        %vm5221 = vweird.f32 %v5215
        %vm5222 = vmor %vm5220, %vm5221
        %v5223 = vsel %vm5222, %v5215, %v5219
        %v5224 = vand.u32 2147483647, %v5193
        %vm5225 = vcmp.eq.f32.partialorder %v5224, 8.507059e+37
        %v5226 = vand.u32 %v5193, 2147483648
        %v5227 = vor.u32 1.1754944e-38, %v5226
        %v5228 = vsel %vm5225, %v5227, %v5223
        %v5229 = vmul.f32 1.0, %v5228
        %v5230 = vrcp.pop %v5194
        %v5231 = vmul.f32 %v5194, %v5230
        %v5232 = vsub.f32 1.0, %v5231
        %v5233 = vmul.f32 %v5230, %v5232
        %v5234 = vadd.f32 %v5230, %v5233
        %vm5235 = vweird.f32 %v5194
        %vm5236 = vweird.f32 %v5230
        %vm5237 = vmor %vm5235, %vm5236
        %v5238 = vsel %vm5237, %v5230, %v5234
        %v5239 = vand.u32 2147483647, %v5194
        %vm5240 = vcmp.eq.f32.partialorder %v5239, 8.507059e+37
        %v5241 = vand.u32 %v5194, 2147483648
        %v5242 = vor.u32 1.1754944e-38, %v5241
        %v5243 = vsel %vm5240, %v5242, %v5238
        %v5244 = vmul.f32 1.0, %v5243
        %v5245 = vrcp.pop %v5195
        %v5246 = vmul.f32 %v5195, %v5245
        %v5247 = vsub.f32 1.0, %v5246
        %v5248 = vmul.f32 %v5245, %v5247
        %v5249 = vadd.f32 %v5245, %v5248
        %vm5250 = vweird.f32 %v5195
        %vm5251 = vweird.f32 %v5245
        %vm5252 = vmor %vm5250, %vm5251
        %v5253 = vsel %vm5252, %v5245, %v5249
        %v5254 = vand.u32 2147483647, %v5195
        %vm5255 = vcmp.eq.f32.partialorder %v5254, 8.507059e+37
        %v5256 = vand.u32 %v5195, 2147483648
        %v5257 = vor.u32 1.1754944e-38, %v5256
        %v5258 = vsel %vm5255, %v5257, %v5253
        %v5259 = vmul.f32 1.0, %v5258
        %v5260 = vrcp.pop %v5196
        %v5261 = vmul.f32 %v5196, %v5260
        %v5262 = vsub.f32 1.0, %v5261
        %v5263 = vmul.f32 %v5260, %v5262
        %v5264 = vadd.f32 %v5260, %v5263
        %vm5265 = vweird.f32 %v5196
        %vm5266 = vweird.f32 %v5260
        %vm5267 = vmor %vm5265, %vm5266
        %v5268 = vsel %vm5267, %v5260, %v5264
        %v5269 = vand.u32 2147483647, %v5196
        %vm5270 = vcmp.eq.f32.partialorder %v5269, 8.507059e+37
        %v5271 = vand.u32 %v5196, 2147483648
        %v5272 = vor.u32 1.1754944e-38, %v5271
        %v5273 = vsel %vm5270, %v5272, %v5268
        %v5274 = vmul.f32 1.0, %v5273
        %v5275 = vrcp.pop %v5197
        %v5276 = vmul.f32 %v5197, %v5275
        %v5277 = vsub.f32 1.0, %v5276
        %v5278 = vmul.f32 %v5275, %v5277
        %v5279 = vadd.f32 %v5275, %v5278
        %vm5280 = vweird.f32 %v5197
        %vm5281 = vweird.f32 %v5275
        %vm5282 = vmor %vm5280, %vm5281
        %v5283 = vsel %vm5282, %v5275, %v5279
        %v5284 = vand.u32 2147483647, %v5197
        %vm5285 = vcmp.eq.f32.partialorder %v5284, 8.507059e+37
        %v5286 = vand.u32 %v5197, 2147483648
        %v5287 = vor.u32 1.1754944e-38, %v5286
        %v5288 = vsel %vm5285, %v5287, %v5283
        %v5289 = vmul.f32 1.0, %v5288
        %v5290 = vrcp.pop %v5198
        %v5291 = vmul.f32 %v5198, %v5290
        %v5292 = vsub.f32 1.0, %v5291
        %v5293 = vmul.f32 %v5290, %v5292
        %v5294 = vadd.f32 %v5290, %v5293
        %vm5295 = vweird.f32 %v5198
        %vm5296 = vweird.f32 %v5290
        %vm5297 = vmor %vm5295, %vm5296
        %v5298 = vsel %vm5297, %v5290, %v5294
        %v5299 = vand.u32 2147483647, %v5198
        %vm5300 = vcmp.eq.f32.partialorder %v5299, 8.507059e+37
        %v5301 = vand.u32 %v5198, 2147483648
        %v5302 = vor.u32 1.1754944e-38, %v5301
        %v5303 = vsel %vm5300, %v5302, %v5298
        %v5304 = vmul.f32 1.0, %v5303
        %v5305 = vrcp.pop %v5199
        %v5306 = vmul.f32 %v5199, %v5305
        %v5307 = vsub.f32 1.0, %v5306
        %v5308 = vmul.f32 %v5305, %v5307
        %v5309 = vadd.f32 %v5305, %v5308
        %vm5310 = vweird.f32 %v5199
        %vm5311 = vweird.f32 %v5305
        %vm5312 = vmor %vm5310, %vm5311
        %v5313 = vsel %vm5312, %v5305, %v5309
        %v5314 = vand.u32 2147483647, %v5199
        %vm5315 = vcmp.eq.f32.partialorder %v5314, 8.507059e+37
        %v5316 = vand.u32 %v5199, 2147483648
        %v5317 = vor.u32 1.1754944e-38, %v5316
        %v5318 = vsel %vm5315, %v5317, %v5313
        %v5319 = vmul.f32 1.0, %v5318
        %v5320 = vmul.f32 %v5015, %v4787
        %v5321 = vmul.f32 %v5030, %v4788
        %v5322 = vmul.f32 %v5045, %v4789
        %v5323 = vmul.f32 %v5060, %v4790
        %v5324 = vmul.f32 %v5075, %v4791
        %v5325 = vmul.f32 %v5090, %v4792
        %v5326 = vmul.f32 %v5105, %v4793
        %v5327 = vmul.f32 %v5120, %v4794
        %5336 = vst [vmem:[#allocation1] ss:$9 sm:$0xff] %v5320
        %s5337 = scalar_lea.vmem [#allocation1], 1
        %5338 = vst [vmem:[%s5337] ss:$9 sm:$0xff] %v5321
        %s5339 = scalar_lea.vmem [#allocation1], 2
        %5340 = vst [vmem:[%s5339] ss:$9 sm:$0xff] %v5322
        %s5341 = scalar_lea.vmem [#allocation1], 3
        %5342 = vst [vmem:[%s5341] ss:$9 sm:$0xff] %v5323
        %s5343 = scalar_lea.vmem [#allocation1], 4
        %5344 = vst [vmem:[%s5343] ss:$9 sm:$0xff] %v5324
        %s5345 = scalar_lea.vmem [#allocation1], 5
        %5346 = vst [vmem:[%s5345] ss:$9 sm:$0xff] %v5325
        %s5347 = scalar_lea.vmem [#allocation1], 6
        %5348 = vst [vmem:[%s5347] ss:$9 sm:$0xff] %v5326
        %s5349 = scalar_lea.vmem [#allocation1], 7
        %5350 = vst [vmem:[%s5349] ss:$9 sm:$0xff] %v5327
        %v5351 = vld [vmem:[#allocation1] sm:$0xff]
        %5353 = vmatpush.msra.mxu0 %v653
        %5354 = vmatpush.msra.mxu0 %v652
        %5355 = vmatpush.msra.mxu0 %v651
        %5356 = vmatpush.msra.mxu0 %v650
        %5357 = vmatpush.msra.mxu0 %v649
        %5358 = vmatpush.msra.mxu0 %v648
        %5359 = vmatpush.msra.mxu0 %v647
        %5360 = vmatpush.msra.mxu0 %v646
        %5361 = vmatpush.msra.mxu0 %v645
        %5362 = vmatpush.msra.mxu0 %v644
        %5363 = vmatpush.msra.mxu0 %v643
        %5364 = vmatpush.msra.mxu0 %v642
        %5365 = vmatpush.msra.mxu0 %v641
        %5366 = vmatpush.msra.mxu0 %v640
        %5367 = vmatpush.msra.mxu0 %v639
        %5368 = vmatpush.msra.mxu0 %v638
        %5369 = vmatmul.f32.gmra.mxu0 %v5351
        %v5370 = vpop.f32.mrf.mxu0
        %v5371 = vadd.f32 0.0, %v5370
        %5372 = vdwg.mxu0
        %v5373 = vrot.slane %v4860, 2
        %v5374 = vrot.slane %v4862, 2
        %v5375 = vrot.slane %v4864, 2
        %v5376 = vrot.slane %v4866, 2
        %v5377 = vrot.slane %v4868, 2
        %v5378 = vrot.slane %v4870, 2
        %v5379 = vrot.slane %v4872, 2
        %v5380 = vrot.slane %v4874, 2
        %v5390 = vrot.slane %v5371, 1
        %v5391 = vrot.slane %v5371, 2
        %v5392 = vrot.slane %v5371, 3
        %v5393 = vrot.slane %v5371, 4
        %v5394 = vrot.slane %v5371, 5
        %v5395 = vrot.slane %v5371, 6
        %v5396 = vrot.slane %v5371, 7
        %v5404 = vadd.f32 %v5373, %v5371
        %v5405 = vadd.f32 %v5374, %v5390
        %v5406 = vadd.f32 %v5375, %v5391
        %v5407 = vadd.f32 %v5376, %v5392
        %v5408 = vadd.f32 %v5377, %v5393
        %v5409 = vadd.f32 %v5378, %v5394
        %v5410 = vadd.f32 %v5379, %v5395
        %v5411 = vadd.f32 %v5380, %v5396
        %v5412 = vtanh.pop %v5404
        %v5413 = vtanh.pop %v5405
        %v5414 = vtanh.pop %v5406
        %v5415 = vtanh.pop %v5407
        %v5416 = vtanh.pop %v5408
        %v5417 = vtanh.pop %v5409
        %v5418 = vtanh.pop %v5410
        %v5419 = vtanh.pop %v5411
        %5421 = vset.pattern.permute.xlu0 0
        %5422 = vperm.xlu0 %5421, %v4875
        %v5423 = vpop.permute.xlu0 %5422
        %5426 = vset.pattern.permute.xlu0 0
        %5427 = vperm.xlu0 %5426, %v4876
        %v5428 = vpop.permute.xlu0 %5427
        %5431 = vset.pattern.permute.xlu0 0
        %5432 = vperm.xlu0 %5431, %v4877
        %v5433 = vpop.permute.xlu0 %5432
        %5436 = vset.pattern.permute.xlu0 0
        %5437 = vperm.xlu0 %5436, %v4878
        %v5438 = vpop.permute.xlu0 %5437
        %5441 = vset.pattern.permute.xlu0 0
        %5442 = vperm.xlu0 %5441, %v4879
        %v5443 = vpop.permute.xlu0 %5442
        %5446 = vset.pattern.permute.xlu0 0
        %5447 = vperm.xlu0 %5446, %v4880
        %v5448 = vpop.permute.xlu0 %5447
        %5451 = vset.pattern.permute.xlu0 0
        %5452 = vperm.xlu0 %5451, %v4881
        %v5453 = vpop.permute.xlu0 %5452
        %5456 = vset.pattern.permute.xlu0 0
        %5457 = vperm.xlu0 %5456, %v4882
        %v5458 = vpop.permute.xlu0 %5457
        %v5460 = vmul.f32 %v5423, %v5214
        %v5461 = vmul.f32 %v5428, %v5229
        %v5462 = vmul.f32 %v5433, %v5244
        %v5463 = vmul.f32 %v5438, %v5259
        %v5464 = vmul.f32 %v5443, %v5274
        %v5465 = vmul.f32 %v5448, %v5289
        %v5466 = vmul.f32 %v5453, %v5304
        %v5467 = vmul.f32 %v5458, %v5319
        %v5468 = vsub.f32 1.0, %v5460
        %v5469 = vsub.f32 1.0, %v5461
        %v5470 = vsub.f32 1.0, %v5462
        %v5471 = vsub.f32 1.0, %v5463
        %v5472 = vsub.f32 1.0, %v5464
        %v5473 = vsub.f32 1.0, %v5465
        %v5474 = vsub.f32 1.0, %v5466
        %v5475 = vsub.f32 1.0, %v5467
        %v5476 = vmul.f32 %v5468, %v4787
        %v5477 = vmul.f32 %v5469, %v4788
        %v5478 = vmul.f32 %v5470, %v4789
        %v5479 = vmul.f32 %v5471, %v4790
        %v5480 = vmul.f32 %v5472, %v4791
        %v5481 = vmul.f32 %v5473, %v4792
        %v5482 = vmul.f32 %v5474, %v4793
        %v5483 = vmul.f32 %v5475, %v4794
        %v5484 = vmul.f32 %v5460, %v5412
        %v5485 = vmul.f32 %v5461, %v5413
        %v5486 = vmul.f32 %v5462, %v5414
        %v5487 = vmul.f32 %v5463, %v5415
        %v5488 = vmul.f32 %v5464, %v5416
        %v5489 = vmul.f32 %v5465, %v5417
        %v5490 = vmul.f32 %v5466, %v5418
        %v5491 = vmul.f32 %v5467, %v5419
        %v5492 = vadd.f32 %v5476, %v5484
        %v5493 = vadd.f32 %v5477, %v5485
        %v5494 = vadd.f32 %v5478, %v5486
        %v5495 = vadd.f32 %v5479, %v5487
        %v5496 = vadd.f32 %v5480, %v5488
        %v5497 = vadd.f32 %v5481, %v5489
        %v5498 = vadd.f32 %v5482, %v5490
        %v5499 = vadd.f32 %v5483, %v5491
        %vm5500 = vcmp.ne.f32.partialorder %v4875, 0.0
        %vm5501 = vcmp.ne.f32.partialorder %v4876, 0.0
        %vm5502 = vcmp.ne.f32.partialorder %v4877, 0.0
        %vm5503 = vcmp.ne.f32.partialorder %v4878, 0.0
        %vm5504 = vcmp.ne.f32.partialorder %v4879, 0.0
        %vm5505 = vcmp.ne.f32.partialorder %v4880, 0.0
        %vm5506 = vcmp.ne.f32.partialorder %v4881, 0.0
        %vm5507 = vcmp.ne.f32.partialorder %v4882, 0.0
        %v5508 = vsel %vm5500, 1, 0
        %v5509 = vsel %vm5501, 1, 0
        %v5510 = vsel %vm5502, 1, 0
        %v5511 = vsel %vm5503, 1, 0
        %v5512 = vsel %vm5504, 1, 0
        %v5513 = vsel %vm5505, 1, 0
        %v5514 = vsel %vm5506, 1, 0
        %v5515 = vsel %vm5507, 1, 0
        %5516 = vset.pattern.permute.xlu0 1
        %5517 = vperm.xlu0 %5516, %v5508
        %v5518 = vpop.permute.xlu0 %5517
        %5519 = vset.pattern.permute.xlu0 1
        %5520 = vperm.xlu0 %5519, %v5509
        %v5521 = vpop.permute.xlu0 %5520
        %5522 = vset.pattern.permute.xlu0 1
        %5523 = vperm.xlu0 %5522, %v5510
        %v5524 = vpop.permute.xlu0 %5523
        %5525 = vset.pattern.permute.xlu0 1
        %5526 = vperm.xlu0 %5525, %v5511
        %v5527 = vpop.permute.xlu0 %5526
        %5528 = vset.pattern.permute.xlu0 1
        %5529 = vperm.xlu0 %5528, %v5512
        %v5530 = vpop.permute.xlu0 %5529
        %5531 = vset.pattern.permute.xlu0 1
        %5532 = vperm.xlu0 %5531, %v5513
        %v5533 = vpop.permute.xlu0 %5532
        %5534 = vset.pattern.permute.xlu0 1
        %5535 = vperm.xlu0 %5534, %v5514
        %v5536 = vpop.permute.xlu0 %5535
        %5537 = vset.pattern.permute.xlu0 1
        %5538 = vperm.xlu0 %5537, %v5515
        %v5539 = vpop.permute.xlu0 %5538
        %vm5540 = vcmp.eq.s32.totalorder %v5518, 1
        %vm5541 = vcmp.eq.s32.totalorder %v5521, 1
        %vm5542 = vcmp.eq.s32.totalorder %v5524, 1
        %vm5543 = vcmp.eq.s32.totalorder %v5527, 1
        %vm5544 = vcmp.eq.s32.totalorder %v5530, 1
        %vm5545 = vcmp.eq.s32.totalorder %v5533, 1
        %vm5546 = vcmp.eq.s32.totalorder %v5536, 1
        %vm5547 = vcmp.eq.s32.totalorder %v5539, 1
        %v5548 = vsel %vm5540, %v5492, 0.0
        %v5549 = vsel %vm5541, %v5493, 0.0
        %v5550 = vsel %vm5542, %v5494, 0.0
        %v5551 = vsel %vm5543, %v5495, 0.0
        %v5552 = vsel %vm5544, %v5496, 0.0
        %v5553 = vsel %vm5545, %v5497, 0.0
        %v5554 = vsel %vm5546, %v5498, 0.0
        %v5555 = vsel %vm5547, %v5499, 0.0
        %v5556 = vmax.f32 %v4851, %v5548
        %v5557 = vmax.f32 %v4852, %v5549
        %v5558 = vmax.f32 %v4853, %v5550
        %v5559 = vmax.f32 %v4854, %v5551
        %v5560 = vmax.f32 %v4855, %v5552
        %v5561 = vmax.f32 %v4856, %v5553
        %v5562 = vmax.f32 %v4857, %v5554
        %v5563 = vmax.f32 %v4858, %v5555
        %s5564 = scalar_lea.vmem [#allocation2], 7
        %v5565 = vld [vmem:[%s5564] ss:$8 sm:$0x7]
        %s5566 = scalar_lea.vmem [#allocation2], 31
        %v5567 = vld [vmem:[%s5566] ss:$8 sm:$0x7]
        %s5568 = scalar_lea.vmem [#allocation2], 55
        %v5569 = vld [vmem:[%s5568] ss:$8 sm:$0x7]
        %s5570 = scalar_lea.vmem [#allocation2], 79
        %v5571 = vld [vmem:[%s5570] ss:$8 sm:$0x7]
        %s5572 = scalar_lea.vmem [#allocation2], 103
        %v5573 = vld [vmem:[%s5572] ss:$8 sm:$0x7]
        %s5574 = scalar_lea.vmem [#allocation2], 127
        %v5575 = vld [vmem:[%s5574] ss:$8 sm:$0x7]
        %s5576 = scalar_lea.vmem [#allocation2], 151
        %v5577 = vld [vmem:[%s5576] ss:$8 sm:$0x7]
        %s5578 = scalar_lea.vmem [#allocation2], 175
        %v5579 = vld [vmem:[%s5578] ss:$8 sm:$0x7]
        %v5580 = vld [vmem:[%s393 + $0x7] sm:$0x1]
        %v5581 = vld [vmem:[%s393 + $0xf] sm:$0x1]
        %v5582 = vld [vmem:[%s393 + $0x17] sm:$0x1]
        %v5583 = vld [vmem:[%s393 + $0x1f] sm:$0x1]
        %v5584 = vld [vmem:[%s393 + $0x27] sm:$0x1]
        %v5585 = vld [vmem:[%s393 + $0x2f] sm:$0x1]
        %v5586 = vld [vmem:[%s393 + $0x37] sm:$0x1]
        %v5587 = vld [vmem:[%s393 + $0x3f] sm:$0x1]
        %v5596 = vrot.slane %v5493, 7
        %v5597 = vsel %vm1360, %v5596, %v5492
        %v5598 = vrot.slane %v5494, 6
        %v5599 = vsel %vm1363, %v5598, %v5597
        %v5600 = vrot.slane %v5495, 5
        %v5601 = vsel %vm1366, %v5600, %v5599
        %v5602 = vrot.slane %v5496, 4
        %v5603 = vsel %vm1369, %v5602, %v5601
        %v5604 = vrot.slane %v5497, 3
        %v5605 = vsel %vm1372, %v5604, %v5603
        %v5606 = vrot.slane %v5498, 2
        %v5607 = vsel %vm1375, %v5606, %v5605
        %v5608 = vrot.slane %v5499, 1
        %v5609 = vsel %vm1378, %v5608, %v5607
        %5611 = vmatpush.msra.mxu0 %v636
        %5612 = vmatpush.msra.mxu0 %v634
        %5613 = vmatpush.msra.mxu0 %v632
        %5614 = vmatpush.msra.mxu0 %v630
        %5615 = vmatpush.msra.mxu0 %v628
        %5616 = vmatpush.msra.mxu0 %v626
        %5617 = vmatpush.msra.mxu0 %v624
        %5618 = vmatpush.msra.mxu0 %v622
        %5619 = vmatpush.msra.mxu0 %v620
        %5620 = vmatpush.msra.mxu0 %v618
        %5621 = vmatpush.msra.mxu0 %v616
        %5622 = vmatpush.msra.mxu0 %v614
        %5623 = vmatpush.msra.mxu0 %v612
        %5624 = vmatpush.msra.mxu0 %v610
        %5625 = vmatpush.msra.mxu0 %v608
        %5626 = vmatpush.msra.mxu0 %v606
        %5627 = vmatmul.f32.gmra.mxu0 %v5609
        %v5628 = vpop.f32.mrf.mxu0
        %v5629 = vadd.f32 0.0, %v5628
        %5630 = vdwg.mxu0
        %5631 = vmatpush.msra.mxu0 %v637
        %5632 = vmatpush.msra.mxu0 %v635
        %5633 = vmatpush.msra.mxu0 %v633
        %5634 = vmatpush.msra.mxu0 %v631
        %5635 = vmatpush.msra.mxu0 %v629
        %5636 = vmatpush.msra.mxu0 %v627
        %5637 = vmatpush.msra.mxu0 %v625
        %5638 = vmatpush.msra.mxu0 %v623
        %5639 = vmatpush.msra.mxu0 %v621
        %5640 = vmatpush.msra.mxu0 %v619
        %5641 = vmatpush.msra.mxu0 %v617
        %5642 = vmatpush.msra.mxu0 %v615
        %5643 = vmatpush.msra.mxu0 %v613
        %5644 = vmatpush.msra.mxu0 %v611
        %5645 = vmatpush.msra.mxu0 %v609
        %5646 = vmatpush.msra.mxu0 %v607
        %5647 = vmatmul.f32.gmra.mxu0 %v5609
        %v5648 = vpop.f32.mrf.mxu0
        %v5649 = vadd.f32 0.0, %v5648
        %5650 = vdwg.mxu0
        %v5652 = vrot.slane %v5629, 1
        %v5653 = vrot.slane %v5629, 2
        %v5654 = vrot.slane %v5629, 3
        %v5655 = vrot.slane %v5629, 4
        %v5656 = vrot.slane %v5629, 5
        %v5657 = vrot.slane %v5629, 6
        %v5658 = vrot.slane %v5629, 7
        %v5666 = vadd.f32 %v5565, %v5629
        %v5667 = vadd.f32 %v5567, %v5652
        %v5668 = vadd.f32 %v5569, %v5653
        %v5669 = vadd.f32 %v5571, %v5654
        %v5670 = vadd.f32 %v5573, %v5655
        %v5671 = vadd.f32 %v5575, %v5656
        %v5672 = vadd.f32 %v5577, %v5657
        %v5673 = vadd.f32 %v5579, %v5658
        %v5674 = vxor.u32 %v5666, 2147483648
        %v5675 = vxor.u32 %v5667, 2147483648
        %v5676 = vxor.u32 %v5668, 2147483648
        %v5677 = vxor.u32 %v5669, 2147483648
        %v5678 = vxor.u32 %v5670, 2147483648
        %v5679 = vxor.u32 %v5671, 2147483648
        %v5680 = vxor.u32 %v5672, 2147483648
        %v5681 = vxor.u32 %v5673, 2147483648
        %v5682 = vmul.f32 %v5674, 1.442695
        %v5683 = vpow.pop %v5682
        %v5684 = vmul.f32 %v5675, 1.442695
        %v5685 = vpow.pop %v5684
        %v5686 = vmul.f32 %v5676, 1.442695
        %v5687 = vpow.pop %v5686
        %v5688 = vmul.f32 %v5677, 1.442695
        %v5689 = vpow.pop %v5688
        %v5690 = vmul.f32 %v5678, 1.442695
        %v5691 = vpow.pop %v5690
        %v5692 = vmul.f32 %v5679, 1.442695
        %v5693 = vpow.pop %v5692
        %v5694 = vmul.f32 %v5680, 1.442695
        %v5695 = vpow.pop %v5694
        %v5696 = vmul.f32 %v5681, 1.442695
        %v5697 = vpow.pop %v5696
        %v5698 = vadd.f32 %v5683, 1.0
        %v5699 = vadd.f32 %v5685, 1.0
        %v5700 = vadd.f32 %v5687, 1.0
        %v5701 = vadd.f32 %v5689, 1.0
        %v5702 = vadd.f32 %v5691, 1.0
        %v5703 = vadd.f32 %v5693, 1.0
        %v5704 = vadd.f32 %v5695, 1.0
        %v5705 = vadd.f32 %v5697, 1.0
        %v5706 = vrcp.pop %v5698
        %v5707 = vmul.f32 %v5698, %v5706
        %v5708 = vsub.f32 1.0, %v5707
        %v5709 = vmul.f32 %v5706, %v5708
        %v5710 = vadd.f32 %v5706, %v5709
        %vm5711 = vweird.f32 %v5698
        %vm5712 = vweird.f32 %v5706
        %vm5713 = vmor %vm5711, %vm5712
        %v5714 = vsel %vm5713, %v5706, %v5710
        %v5715 = vand.u32 2147483647, %v5698
        %vm5716 = vcmp.eq.f32.partialorder %v5715, 8.507059e+37
        %v5717 = vand.u32 %v5698, 2147483648
        %v5718 = vor.u32 1.1754944e-38, %v5717
        %v5719 = vsel %vm5716, %v5718, %v5714
        %v5720 = vmul.f32 1.0, %v5719
        %v5721 = vrcp.pop %v5699
        %v5722 = vmul.f32 %v5699, %v5721
        %v5723 = vsub.f32 1.0, %v5722
        %v5724 = vmul.f32 %v5721, %v5723
        %v5725 = vadd.f32 %v5721, %v5724
        %vm5726 = vweird.f32 %v5699
        %vm5727 = vweird.f32 %v5721
        %vm5728 = vmor %vm5726, %vm5727
        %v5729 = vsel %vm5728, %v5721, %v5725
        %v5730 = vand.u32 2147483647, %v5699
        %vm5731 = vcmp.eq.f32.partialorder %v5730, 8.507059e+37
        %v5732 = vand.u32 %v5699, 2147483648
        %v5733 = vor.u32 1.1754944e-38, %v5732
        %v5734 = vsel %vm5731, %v5733, %v5729
        %v5735 = vmul.f32 1.0, %v5734
        %v5736 = vrcp.pop %v5700
        %v5737 = vmul.f32 %v5700, %v5736
        %v5738 = vsub.f32 1.0, %v5737
        %v5739 = vmul.f32 %v5736, %v5738
        %v5740 = vadd.f32 %v5736, %v5739
        %vm5741 = vweird.f32 %v5700
        %vm5742 = vweird.f32 %v5736
        %vm5743 = vmor %vm5741, %vm5742
        %v5744 = vsel %vm5743, %v5736, %v5740
        %v5745 = vand.u32 2147483647, %v5700
        %vm5746 = vcmp.eq.f32.partialorder %v5745, 8.507059e+37
        %v5747 = vand.u32 %v5700, 2147483648
        %v5748 = vor.u32 1.1754944e-38, %v5747
        %v5749 = vsel %vm5746, %v5748, %v5744
        %v5750 = vmul.f32 1.0, %v5749
        %v5751 = vrcp.pop %v5701
        %v5752 = vmul.f32 %v5701, %v5751
        %v5753 = vsub.f32 1.0, %v5752
        %v5754 = vmul.f32 %v5751, %v5753
        %v5755 = vadd.f32 %v5751, %v5754
        %vm5756 = vweird.f32 %v5701
        %vm5757 = vweird.f32 %v5751
        %vm5758 = vmor %vm5756, %vm5757
        %v5759 = vsel %vm5758, %v5751, %v5755
        %v5760 = vand.u32 2147483647, %v5701
        %vm5761 = vcmp.eq.f32.partialorder %v5760, 8.507059e+37
        %v5762 = vand.u32 %v5701, 2147483648
        %v5763 = vor.u32 1.1754944e-38, %v5762
        %v5764 = vsel %vm5761, %v5763, %v5759
        %v5765 = vmul.f32 1.0, %v5764
        %v5766 = vrcp.pop %v5702
        %v5767 = vmul.f32 %v5702, %v5766
        %v5768 = vsub.f32 1.0, %v5767
        %v5769 = vmul.f32 %v5766, %v5768
        %v5770 = vadd.f32 %v5766, %v5769
        %vm5771 = vweird.f32 %v5702
        %vm5772 = vweird.f32 %v5766
        %vm5773 = vmor %vm5771, %vm5772
        %v5774 = vsel %vm5773, %v5766, %v5770
        %v5775 = vand.u32 2147483647, %v5702
        %vm5776 = vcmp.eq.f32.partialorder %v5775, 8.507059e+37
        %v5777 = vand.u32 %v5702, 2147483648
        %v5778 = vor.u32 1.1754944e-38, %v5777
        %v5779 = vsel %vm5776, %v5778, %v5774
        %v5780 = vmul.f32 1.0, %v5779
        %v5781 = vrcp.pop %v5703
        %v5782 = vmul.f32 %v5703, %v5781
        %v5783 = vsub.f32 1.0, %v5782
        %v5784 = vmul.f32 %v5781, %v5783
        %v5785 = vadd.f32 %v5781, %v5784
        %vm5786 = vweird.f32 %v5703
        %vm5787 = vweird.f32 %v5781
        %vm5788 = vmor %vm5786, %vm5787
        %v5789 = vsel %vm5788, %v5781, %v5785
        %v5790 = vand.u32 2147483647, %v5703
        %vm5791 = vcmp.eq.f32.partialorder %v5790, 8.507059e+37
        %v5792 = vand.u32 %v5703, 2147483648
        %v5793 = vor.u32 1.1754944e-38, %v5792
        %v5794 = vsel %vm5791, %v5793, %v5789
        %v5795 = vmul.f32 1.0, %v5794
        %v5796 = vrcp.pop %v5704
        %v5797 = vmul.f32 %v5704, %v5796
        %v5798 = vsub.f32 1.0, %v5797
        %v5799 = vmul.f32 %v5796, %v5798
        %v5800 = vadd.f32 %v5796, %v5799
        %vm5801 = vweird.f32 %v5704
        %vm5802 = vweird.f32 %v5796
        %vm5803 = vmor %vm5801, %vm5802
        %v5804 = vsel %vm5803, %v5796, %v5800
        %v5805 = vand.u32 2147483647, %v5704
        %vm5806 = vcmp.eq.f32.partialorder %v5805, 8.507059e+37
        %v5807 = vand.u32 %v5704, 2147483648
        %v5808 = vor.u32 1.1754944e-38, %v5807
        %v5809 = vsel %vm5806, %v5808, %v5804
        %v5810 = vmul.f32 1.0, %v5809
        %v5811 = vrcp.pop %v5705
        %v5812 = vmul.f32 %v5705, %v5811
        %v5813 = vsub.f32 1.0, %v5812
        %v5814 = vmul.f32 %v5811, %v5813
        %v5815 = vadd.f32 %v5811, %v5814
        %vm5816 = vweird.f32 %v5705
        %vm5817 = vweird.f32 %v5811
        %vm5818 = vmor %vm5816, %vm5817
        %v5819 = vsel %vm5818, %v5811, %v5815
        %v5820 = vand.u32 2147483647, %v5705
        %vm5821 = vcmp.eq.f32.partialorder %v5820, 8.507059e+37
        %v5822 = vand.u32 %v5705, 2147483648
        %v5823 = vor.u32 1.1754944e-38, %v5822
        %v5824 = vsel %vm5821, %v5823, %v5819
        %v5825 = vmul.f32 1.0, %v5824
        %v5834 = vrot.slane %v5565, 1
        %v5835 = vrot.slane %v5567, 1
        %v5836 = vrot.slane %v5569, 1
        %v5837 = vrot.slane %v5571, 1
        %v5838 = vrot.slane %v5573, 1
        %v5839 = vrot.slane %v5575, 1
        %v5840 = vrot.slane %v5577, 1
        %v5841 = vrot.slane %v5579, 1
        %v5851 = vrot.slane %v5649, 1
        %v5852 = vrot.slane %v5649, 2
        %v5853 = vrot.slane %v5649, 3
        %v5854 = vrot.slane %v5649, 4
        %v5855 = vrot.slane %v5649, 5
        %v5856 = vrot.slane %v5649, 6
        %v5857 = vrot.slane %v5649, 7
        %v5865 = vadd.f32 %v5834, %v5649
        %v5866 = vadd.f32 %v5835, %v5851
        %v5867 = vadd.f32 %v5836, %v5852
        %v5868 = vadd.f32 %v5837, %v5853
        %v5869 = vadd.f32 %v5838, %v5854
        %v5870 = vadd.f32 %v5839, %v5855
        %v5871 = vadd.f32 %v5840, %v5856
        %v5872 = vadd.f32 %v5841, %v5857
        %v5873 = vxor.u32 %v5865, 2147483648
        %v5874 = vxor.u32 %v5866, 2147483648
        %v5875 = vxor.u32 %v5867, 2147483648
        %v5876 = vxor.u32 %v5868, 2147483648
        %v5877 = vxor.u32 %v5869, 2147483648
        %v5878 = vxor.u32 %v5870, 2147483648
        %v5879 = vxor.u32 %v5871, 2147483648
        %v5880 = vxor.u32 %v5872, 2147483648
        %v5881 = vmul.f32 %v5873, 1.442695
        %v5882 = vpow.pop %v5881
        %v5883 = vmul.f32 %v5874, 1.442695
        %v5884 = vpow.pop %v5883
        %v5885 = vmul.f32 %v5875, 1.442695
        %v5886 = vpow.pop %v5885
        %v5887 = vmul.f32 %v5876, 1.442695
        %v5888 = vpow.pop %v5887
        %v5889 = vmul.f32 %v5877, 1.442695
        %v5890 = vpow.pop %v5889
        %v5891 = vmul.f32 %v5878, 1.442695
        %v5892 = vpow.pop %v5891
        %v5893 = vmul.f32 %v5879, 1.442695
        %v5894 = vpow.pop %v5893
        %v5895 = vmul.f32 %v5880, 1.442695
        %v5896 = vpow.pop %v5895
        %v5897 = vadd.f32 %v5882, 1.0
        %v5898 = vadd.f32 %v5884, 1.0
        %v5899 = vadd.f32 %v5886, 1.0
        %v5900 = vadd.f32 %v5888, 1.0
        %v5901 = vadd.f32 %v5890, 1.0
        %v5902 = vadd.f32 %v5892, 1.0
        %v5903 = vadd.f32 %v5894, 1.0
        %v5904 = vadd.f32 %v5896, 1.0
        %v5905 = vrcp.pop %v5897
        %v5906 = vmul.f32 %v5897, %v5905
        %v5907 = vsub.f32 1.0, %v5906
        %v5908 = vmul.f32 %v5905, %v5907
        %v5909 = vadd.f32 %v5905, %v5908
        %vm5910 = vweird.f32 %v5897
        %vm5911 = vweird.f32 %v5905
        %vm5912 = vmor %vm5910, %vm5911
        %v5913 = vsel %vm5912, %v5905, %v5909
        %v5914 = vand.u32 2147483647, %v5897
        %vm5915 = vcmp.eq.f32.partialorder %v5914, 8.507059e+37
        %v5916 = vand.u32 %v5897, 2147483648
        %v5917 = vor.u32 1.1754944e-38, %v5916
        %v5918 = vsel %vm5915, %v5917, %v5913
        %v5919 = vmul.f32 1.0, %v5918
        %v5920 = vrcp.pop %v5898
        %v5921 = vmul.f32 %v5898, %v5920
        %v5922 = vsub.f32 1.0, %v5921
        %v5923 = vmul.f32 %v5920, %v5922
        %v5924 = vadd.f32 %v5920, %v5923
        %vm5925 = vweird.f32 %v5898
        %vm5926 = vweird.f32 %v5920
        %vm5927 = vmor %vm5925, %vm5926
        %v5928 = vsel %vm5927, %v5920, %v5924
        %v5929 = vand.u32 2147483647, %v5898
        %vm5930 = vcmp.eq.f32.partialorder %v5929, 8.507059e+37
        %v5931 = vand.u32 %v5898, 2147483648
        %v5932 = vor.u32 1.1754944e-38, %v5931
        %v5933 = vsel %vm5930, %v5932, %v5928
        %v5934 = vmul.f32 1.0, %v5933
        %v5935 = vrcp.pop %v5899
        %v5936 = vmul.f32 %v5899, %v5935
        %v5937 = vsub.f32 1.0, %v5936
        %v5938 = vmul.f32 %v5935, %v5937
        %v5939 = vadd.f32 %v5935, %v5938
        %vm5940 = vweird.f32 %v5899
        %vm5941 = vweird.f32 %v5935
        %vm5942 = vmor %vm5940, %vm5941
        %v5943 = vsel %vm5942, %v5935, %v5939
        %v5944 = vand.u32 2147483647, %v5899
        %vm5945 = vcmp.eq.f32.partialorder %v5944, 8.507059e+37
        %v5946 = vand.u32 %v5899, 2147483648
        %v5947 = vor.u32 1.1754944e-38, %v5946
        %v5948 = vsel %vm5945, %v5947, %v5943
        %v5949 = vmul.f32 1.0, %v5948
        %v5950 = vrcp.pop %v5900
        %v5951 = vmul.f32 %v5900, %v5950
        %v5952 = vsub.f32 1.0, %v5951
        %v5953 = vmul.f32 %v5950, %v5952
        %v5954 = vadd.f32 %v5950, %v5953
        %vm5955 = vweird.f32 %v5900
        %vm5956 = vweird.f32 %v5950
        %vm5957 = vmor %vm5955, %vm5956
        %v5958 = vsel %vm5957, %v5950, %v5954
        %v5959 = vand.u32 2147483647, %v5900
        %vm5960 = vcmp.eq.f32.partialorder %v5959, 8.507059e+37
        %v5961 = vand.u32 %v5900, 2147483648
        %v5962 = vor.u32 1.1754944e-38, %v5961
        %v5963 = vsel %vm5960, %v5962, %v5958
        %v5964 = vmul.f32 1.0, %v5963
        %v5965 = vrcp.pop %v5901
        %v5966 = vmul.f32 %v5901, %v5965
        %v5967 = vsub.f32 1.0, %v5966
        %v5968 = vmul.f32 %v5965, %v5967
        %v5969 = vadd.f32 %v5965, %v5968
        %vm5970 = vweird.f32 %v5901
        %vm5971 = vweird.f32 %v5965
        %vm5972 = vmor %vm5970, %vm5971
        %v5973 = vsel %vm5972, %v5965, %v5969
        %v5974 = vand.u32 2147483647, %v5901
        %vm5975 = vcmp.eq.f32.partialorder %v5974, 8.507059e+37
        %v5976 = vand.u32 %v5901, 2147483648
        %v5977 = vor.u32 1.1754944e-38, %v5976
        %v5978 = vsel %vm5975, %v5977, %v5973
        %v5979 = vmul.f32 1.0, %v5978
        %v5980 = vrcp.pop %v5902
        %v5981 = vmul.f32 %v5902, %v5980
        %v5982 = vsub.f32 1.0, %v5981
        %v5983 = vmul.f32 %v5980, %v5982
        %v5984 = vadd.f32 %v5980, %v5983
        %vm5985 = vweird.f32 %v5902
        %vm5986 = vweird.f32 %v5980
        %vm5987 = vmor %vm5985, %vm5986
        %v5988 = vsel %vm5987, %v5980, %v5984
        %v5989 = vand.u32 2147483647, %v5902
        %vm5990 = vcmp.eq.f32.partialorder %v5989, 8.507059e+37
        %v5991 = vand.u32 %v5902, 2147483648
        %v5992 = vor.u32 1.1754944e-38, %v5991
        %v5993 = vsel %vm5990, %v5992, %v5988
        %v5994 = vmul.f32 1.0, %v5993
        %v5995 = vrcp.pop %v5903
        %v5996 = vmul.f32 %v5903, %v5995
        %v5997 = vsub.f32 1.0, %v5996
        %v5998 = vmul.f32 %v5995, %v5997
        %v5999 = vadd.f32 %v5995, %v5998
        %vm6000 = vweird.f32 %v5903
        %vm6001 = vweird.f32 %v5995
        %vm6002 = vmor %vm6000, %vm6001
        %v6003 = vsel %vm6002, %v5995, %v5999
        %v6004 = vand.u32 2147483647, %v5903
        %vm6005 = vcmp.eq.f32.partialorder %v6004, 8.507059e+37
        %v6006 = vand.u32 %v5903, 2147483648
        %v6007 = vor.u32 1.1754944e-38, %v6006
        %v6008 = vsel %vm6005, %v6007, %v6003
        %v6009 = vmul.f32 1.0, %v6008
        %v6010 = vrcp.pop %v5904
        %v6011 = vmul.f32 %v5904, %v6010
        %v6012 = vsub.f32 1.0, %v6011
        %v6013 = vmul.f32 %v6010, %v6012
        %v6014 = vadd.f32 %v6010, %v6013
        %vm6015 = vweird.f32 %v5904
        %vm6016 = vweird.f32 %v6010
        %vm6017 = vmor %vm6015, %vm6016
        %v6018 = vsel %vm6017, %v6010, %v6014
        %v6019 = vand.u32 2147483647, %v5904
        %vm6020 = vcmp.eq.f32.partialorder %v6019, 8.507059e+37
        %v6021 = vand.u32 %v5904, 2147483648
        %v6022 = vor.u32 1.1754944e-38, %v6021
        %v6023 = vsel %vm6020, %v6022, %v6018
        %v6024 = vmul.f32 1.0, %v6023
        %v6025 = vmul.f32 %v5720, %v5492
        %v6026 = vmul.f32 %v5735, %v5493
        %v6027 = vmul.f32 %v5750, %v5494
        %v6028 = vmul.f32 %v5765, %v5495
        %v6029 = vmul.f32 %v5780, %v5496
        %v6030 = vmul.f32 %v5795, %v5497
        %v6031 = vmul.f32 %v5810, %v5498
        %v6032 = vmul.f32 %v5825, %v5499
        %6041 = vst [vmem:[#allocation1] ss:$9 sm:$0xff] %v6025
        %s6042 = scalar_lea.vmem [#allocation1], 1
        %6043 = vst [vmem:[%s6042] ss:$9 sm:$0xff] %v6026
        %s6044 = scalar_lea.vmem [#allocation1], 2
        %6045 = vst [vmem:[%s6044] ss:$9 sm:$0xff] %v6027
        %s6046 = scalar_lea.vmem [#allocation1], 3
        %6047 = vst [vmem:[%s6046] ss:$9 sm:$0xff] %v6028
        %s6048 = scalar_lea.vmem [#allocation1], 4
        %6049 = vst [vmem:[%s6048] ss:$9 sm:$0xff] %v6029
        %s6050 = scalar_lea.vmem [#allocation1], 5
        %6051 = vst [vmem:[%s6050] ss:$9 sm:$0xff] %v6030
        %s6052 = scalar_lea.vmem [#allocation1], 6
        %6053 = vst [vmem:[%s6052] ss:$9 sm:$0xff] %v6031
        %s6054 = scalar_lea.vmem [#allocation1], 7
        %6055 = vst [vmem:[%s6054] ss:$9 sm:$0xff] %v6032
        %v6056 = vld [vmem:[#allocation1] sm:$0xff]
        %6058 = vmatpush.msra.mxu0 %v653
        %6059 = vmatpush.msra.mxu0 %v652
        %6060 = vmatpush.msra.mxu0 %v651
        %6061 = vmatpush.msra.mxu0 %v650
        %6062 = vmatpush.msra.mxu0 %v649
        %6063 = vmatpush.msra.mxu0 %v648
        %6064 = vmatpush.msra.mxu0 %v647
        %6065 = vmatpush.msra.mxu0 %v646
        %6066 = vmatpush.msra.mxu0 %v645
        %6067 = vmatpush.msra.mxu0 %v644
        %6068 = vmatpush.msra.mxu0 %v643
        %6069 = vmatpush.msra.mxu0 %v642
        %6070 = vmatpush.msra.mxu0 %v641
        %6071 = vmatpush.msra.mxu0 %v640
        %6072 = vmatpush.msra.mxu0 %v639
        %6073 = vmatpush.msra.mxu0 %v638
        %6074 = vmatmul.f32.gmra.mxu0 %v6056
        %v6075 = vpop.f32.mrf.mxu0
        %v6076 = vadd.f32 0.0, %v6075
        %6077 = vdwg.mxu0
        %v6078 = vrot.slane %v5565, 2
        %v6079 = vrot.slane %v5567, 2
        %v6080 = vrot.slane %v5569, 2
        %v6081 = vrot.slane %v5571, 2
        %v6082 = vrot.slane %v5573, 2
        %v6083 = vrot.slane %v5575, 2
        %v6084 = vrot.slane %v5577, 2
        %v6085 = vrot.slane %v5579, 2
        %v6095 = vrot.slane %v6076, 1
        %v6096 = vrot.slane %v6076, 2
        %v6097 = vrot.slane %v6076, 3
        %v6098 = vrot.slane %v6076, 4
        %v6099 = vrot.slane %v6076, 5
        %v6100 = vrot.slane %v6076, 6
        %v6101 = vrot.slane %v6076, 7
        %v6109 = vadd.f32 %v6078, %v6076
        %v6110 = vadd.f32 %v6079, %v6095
        %v6111 = vadd.f32 %v6080, %v6096
        %v6112 = vadd.f32 %v6081, %v6097
        %v6113 = vadd.f32 %v6082, %v6098
        %v6114 = vadd.f32 %v6083, %v6099
        %v6115 = vadd.f32 %v6084, %v6100
        %v6116 = vadd.f32 %v6085, %v6101
        %v6117 = vtanh.pop %v6109
        %v6118 = vtanh.pop %v6110
        %v6119 = vtanh.pop %v6111
        %v6120 = vtanh.pop %v6112
        %v6121 = vtanh.pop %v6113
        %v6122 = vtanh.pop %v6114
        %v6123 = vtanh.pop %v6115
        %v6124 = vtanh.pop %v6116
        %6126 = vset.pattern.permute.xlu0 0
        %6127 = vperm.xlu0 %6126, %v5580
        %v6128 = vpop.permute.xlu0 %6127
        %6131 = vset.pattern.permute.xlu0 0
        %6132 = vperm.xlu0 %6131, %v5581
        %v6133 = vpop.permute.xlu0 %6132
        %6136 = vset.pattern.permute.xlu0 0
        %6137 = vperm.xlu0 %6136, %v5582
        %v6138 = vpop.permute.xlu0 %6137
        %6141 = vset.pattern.permute.xlu0 0
        %6142 = vperm.xlu0 %6141, %v5583
        %v6143 = vpop.permute.xlu0 %6142
        %6146 = vset.pattern.permute.xlu0 0
        %6147 = vperm.xlu0 %6146, %v5584
        %v6148 = vpop.permute.xlu0 %6147
        %6151 = vset.pattern.permute.xlu0 0
        %6152 = vperm.xlu0 %6151, %v5585
        %v6153 = vpop.permute.xlu0 %6152
        %6156 = vset.pattern.permute.xlu0 0
        %6157 = vperm.xlu0 %6156, %v5586
        %v6158 = vpop.permute.xlu0 %6157
        %6161 = vset.pattern.permute.xlu0 0
        %6162 = vperm.xlu0 %6161, %v5587
        %v6163 = vpop.permute.xlu0 %6162
        %v6165 = vmul.f32 %v6128, %v5919
        %v6166 = vmul.f32 %v6133, %v5934
        %v6167 = vmul.f32 %v6138, %v5949
        %v6168 = vmul.f32 %v6143, %v5964
        %v6169 = vmul.f32 %v6148, %v5979
        %v6170 = vmul.f32 %v6153, %v5994
        %v6171 = vmul.f32 %v6158, %v6009
        %v6172 = vmul.f32 %v6163, %v6024
        %v6173 = vsub.f32 1.0, %v6165
        %v6174 = vsub.f32 1.0, %v6166
        %v6175 = vsub.f32 1.0, %v6167
        %v6176 = vsub.f32 1.0, %v6168
        %v6177 = vsub.f32 1.0, %v6169
        %v6178 = vsub.f32 1.0, %v6170
        %v6179 = vsub.f32 1.0, %v6171
        %v6180 = vsub.f32 1.0, %v6172
        %v6181 = vmul.f32 %v6173, %v5492
        %v6182 = vmul.f32 %v6174, %v5493
        %v6183 = vmul.f32 %v6175, %v5494
        %v6184 = vmul.f32 %v6176, %v5495
        %v6185 = vmul.f32 %v6177, %v5496
        %v6186 = vmul.f32 %v6178, %v5497
        %v6187 = vmul.f32 %v6179, %v5498
        %v6188 = vmul.f32 %v6180, %v5499
        %v6189 = vmul.f32 %v6165, %v6117
        %v6190 = vmul.f32 %v6166, %v6118
        %v6191 = vmul.f32 %v6167, %v6119
        %v6192 = vmul.f32 %v6168, %v6120
        %v6193 = vmul.f32 %v6169, %v6121
        %v6194 = vmul.f32 %v6170, %v6122
        %v6195 = vmul.f32 %v6171, %v6123
        %v6196 = vmul.f32 %v6172, %v6124
        %v6197 = vadd.f32 %v6181, %v6189
        %v6198 = vadd.f32 %v6182, %v6190
        %v6199 = vadd.f32 %v6183, %v6191
        %v6200 = vadd.f32 %v6184, %v6192
        %v6201 = vadd.f32 %v6185, %v6193
        %v6202 = vadd.f32 %v6186, %v6194
        %v6203 = vadd.f32 %v6187, %v6195
        %v6204 = vadd.f32 %v6188, %v6196
        %vm6205 = vcmp.ne.f32.partialorder %v5580, 0.0
        %vm6206 = vcmp.ne.f32.partialorder %v5581, 0.0
        %vm6207 = vcmp.ne.f32.partialorder %v5582, 0.0
        %vm6208 = vcmp.ne.f32.partialorder %v5583, 0.0
        %vm6209 = vcmp.ne.f32.partialorder %v5584, 0.0
        %vm6210 = vcmp.ne.f32.partialorder %v5585, 0.0
        %vm6211 = vcmp.ne.f32.partialorder %v5586, 0.0
        %vm6212 = vcmp.ne.f32.partialorder %v5587, 0.0
        %v6213 = vsel %vm6205, 1, 0
        %v6214 = vsel %vm6206, 1, 0
        %v6215 = vsel %vm6207, 1, 0
        %v6216 = vsel %vm6208, 1, 0
        %v6217 = vsel %vm6209, 1, 0
        %v6218 = vsel %vm6210, 1, 0
        %v6219 = vsel %vm6211, 1, 0
        %v6220 = vsel %vm6212, 1, 0
        %6221 = vset.pattern.permute.xlu0 1
        %6222 = vperm.xlu0 %6221, %v6213
        %v6223 = vpop.permute.xlu0 %6222
        %6224 = vset.pattern.permute.xlu0 1
        %6225 = vperm.xlu0 %6224, %v6214
        %v6226 = vpop.permute.xlu0 %6225
        %6227 = vset.pattern.permute.xlu0 1
        %6228 = vperm.xlu0 %6227, %v6215
        %v6229 = vpop.permute.xlu0 %6228
        %6230 = vset.pattern.permute.xlu0 1
        %6231 = vperm.xlu0 %6230, %v6216
        %v6232 = vpop.permute.xlu0 %6231
        %6233 = vset.pattern.permute.xlu0 1
        %6234 = vperm.xlu0 %6233, %v6217
        %v6235 = vpop.permute.xlu0 %6234
        %6236 = vset.pattern.permute.xlu0 1
        %6237 = vperm.xlu0 %6236, %v6218
        %v6238 = vpop.permute.xlu0 %6237
        %6239 = vset.pattern.permute.xlu0 1
        %6240 = vperm.xlu0 %6239, %v6219
        %v6241 = vpop.permute.xlu0 %6240
        %6242 = vset.pattern.permute.xlu0 1
        %6243 = vperm.xlu0 %6242, %v6220
        %v6244 = vpop.permute.xlu0 %6243
        %vm6245 = vcmp.eq.s32.totalorder %v6223, 1
        %vm6246 = vcmp.eq.s32.totalorder %v6226, 1
        %vm6247 = vcmp.eq.s32.totalorder %v6229, 1
        %vm6248 = vcmp.eq.s32.totalorder %v6232, 1
        %vm6249 = vcmp.eq.s32.totalorder %v6235, 1
        %vm6250 = vcmp.eq.s32.totalorder %v6238, 1
        %vm6251 = vcmp.eq.s32.totalorder %v6241, 1
        %vm6252 = vcmp.eq.s32.totalorder %v6244, 1
        %v6253 = vsel %vm6245, %v6197, 0.0
        %v6254 = vsel %vm6246, %v6198, 0.0
        %v6255 = vsel %vm6247, %v6199, 0.0
        %v6256 = vsel %vm6248, %v6200, 0.0
        %v6257 = vsel %vm6249, %v6201, 0.0
        %v6258 = vsel %vm6250, %v6202, 0.0
        %v6259 = vsel %vm6251, %v6203, 0.0
        %v6260 = vsel %vm6252, %v6204, 0.0
        %v6261 = vmax.f32 %v5556, %v6253
        %v6262 = vmax.f32 %v5557, %v6254
        %v6263 = vmax.f32 %v5558, %v6255
        %v6264 = vmax.f32 %v5559, %v6256
        %v6265 = vmax.f32 %v5560, %v6257
        %v6266 = vmax.f32 %v5561, %v6258
        %v6267 = vmax.f32 %v5562, %v6259
        %v6268 = vmax.f32 %v5563, %v6260
        %v6269 = vld [vmem:[#allocation9] sm:$0xff]
        %v6270 = vld [vmem:[#allocation9 + $0x8] sm:$0xff]
        %v6271 = vld [vmem:[#allocation9 + $0x10] sm:$0xff]
        %v6272 = vld [vmem:[#allocation9 + $0x18] sm:$0xff]
        %v6273 = vld [vmem:[#allocation9 + $0x20] sm:$0xff]
        %v6274 = vld [vmem:[#allocation9 + $0x28] sm:$0xff]
        %v6275 = vld [vmem:[#allocation9 + $0x30] sm:$0xff]
        %v6276 = vld [vmem:[#allocation9 + $0x38] sm:$0xff]
        %v6277 = vld [vmem:[#allocation9 + $0x40] sm:$0xff]
        %v6278 = vld [vmem:[#allocation9 + $0x48] sm:$0xff]
        %v6279 = vld [vmem:[#allocation9 + $0x50] sm:$0xff]
        %v6280 = vld [vmem:[#allocation9 + $0x58] sm:$0xff]
        %v6281 = vld [vmem:[#allocation9 + $0x60] sm:$0xff]
        %v6282 = vld [vmem:[#allocation9 + $0x68] sm:$0xff]
        %v6283 = vld [vmem:[#allocation9 + $0x70] sm:$0xff]
        %v6284 = vld [vmem:[#allocation9 + $0x78] sm:$0xff]
        %v6285 = vld [vmem:[%s7] sm:$0x1]
        %v6287 = vperm.slane %v6285, 0
        %v6297 = vrot.slane %v6262, 7
        %v6298 = vsel %vm1360, %v6297, %v6261
        %v6299 = vrot.slane %v6263, 6
        %v6300 = vsel %vm1363, %v6299, %v6298
        %v6301 = vrot.slane %v6264, 5
        %v6302 = vsel %vm1366, %v6301, %v6300
        %v6303 = vrot.slane %v6265, 4
        %v6304 = vsel %vm1369, %v6303, %v6302
        %v6305 = vrot.slane %v6266, 3
        %v6306 = vsel %vm1372, %v6305, %v6304
        %v6307 = vrot.slane %v6267, 2
        %v6308 = vsel %vm1375, %v6307, %v6306
        %v6309 = vrot.slane %v6268, 1
        %v6310 = vsel %vm1378, %v6309, %v6308
        %6312 = vmatpush.msra.mxu0 %v6284
        %6313 = vmatpush.msra.mxu0 %v6283
        %6314 = vmatpush.msra.mxu0 %v6282
        %6315 = vmatpush.msra.mxu0 %v6281
        %6316 = vmatpush.msra.mxu0 %v6280
        %6317 = vmatpush.msra.mxu0 %v6279
        %6318 = vmatpush.msra.mxu0 %v6278
        %6319 = vmatpush.msra.mxu0 %v6277
        %6320 = vmatpush.msra.mxu0 %v6276
        %6321 = vmatpush.msra.mxu0 %v6275
        %6322 = vmatpush.msra.mxu0 %v6274
        %6323 = vmatpush.msra.mxu0 %v6273
        %6324 = vmatpush.msra.mxu0 %v6272
        %6325 = vmatpush.msra.mxu0 %v6271
        %6326 = vmatpush.msra.mxu0 %v6270
        %6327 = vmatpush.msra.mxu0 %v6269
        %6328 = vmatmul.f32.gmra.mxu0 %v6310
        %v6329 = vpop.f32.mrf.mxu0
        %v6330 = vadd.f32 %v6287, %v6329
        %6331 = vdwg.mxu0
        %v6340 = vrot.slane %v6198, 7
        %v6341 = vsel %vm1360, %v6340, %v6197
        %v6342 = vrot.slane %v6199, 6
        %v6343 = vsel %vm1363, %v6342, %v6341
        %v6344 = vrot.slane %v6200, 5
        %v6345 = vsel %vm1366, %v6344, %v6343
        %v6346 = vrot.slane %v6201, 4
        %v6347 = vsel %vm1369, %v6346, %v6345
        %v6348 = vrot.slane %v6202, 3
        %v6349 = vsel %vm1372, %v6348, %v6347
        %v6350 = vrot.slane %v6203, 2
        %v6351 = vsel %vm1375, %v6350, %v6349
        %v6352 = vrot.slane %v6204, 1
        %v6353 = vsel %vm1378, %v6352, %v6351
        %6355 = vst [vmem:[%s382] sm:$0xff] %v6353
        %6356 = vst [vmem:[%s382 + $0x8] sm:$0xff] %v6330
        %s6357 = sand.u32 %s211, 1
        %s6358 = scalar_lea.sflag [#allocation5], %s6357
        %s6359 = sand.u32 %s211, 1
        %s6360 = smul.addr %s6359, 16
        %s6361 = scalar_lea.vmem [#allocation11], %s6360
        // Predicated region
        $region69: #{tpu_custom_call.1} parent=51 // pred_check
          %p6362 = pneg %p221
        $region70: #{tpu_custom_call.1} parent=51 // pred_check_branch
          %6364 = sbr.rel (%p6362) target = $region72
        $region71: #{tpu_custom_call.1} parent=51 // pred_region
          %6366 = vsyncadd %s6358, 0
          %s6367 = smul.addr %s25, 2
          %s6368 = smul.addr %s6367, 8
          %s6369 = scalar_lea.hbm %s8, %s6368
          %s6371 = sshll.u32 %s6361, 4
          %s6372 = int_to_ptr.vmem [resolvable:$true] %s6371
          %s6373 = sshll.u32 %s6369, 4
          %s6374 = int_to_ptr.hbm [resolvable:$true] %s6373
          %6376 = dma.vmem_to_hbm [thread:$0]  %s6372, 256, %s6374, %s6358
        $region72: #{tpu_custom_call.1} parent=51 // pred_fallthru
          _
      $region52: #{tpu_custom_call.1} parent=5 // pred_fallthru
        _
      %p6377 = scmp.le.s32.totalorder 2, %s20
      // Predicated region
      $region73: #{tpu_custom_call.1} parent=5 // pred_check
        %p6378 = pneg %p6377
      $region74: #{tpu_custom_call.1} parent=5 // pred_check_branch
        %6380 = sbr.rel (%p6378) target = $region76
      $region75: #{tpu_custom_call.1} parent=5 // pred_region
        %s6381 = ssub.s32 %s20, 2
        // Predicated region
        $region77: #{tpu_custom_call.1} parent=75 // pred_check
          %p6382 = pneg %p227
        $region78: #{tpu_custom_call.1} parent=75 // pred_check_branch
          %6384 = sbr.rel (%p6382) target = $region80
        $region79: #{tpu_custom_call.1} parent=75 // pred_region
          %s6385 = sand.u32 %s212, 1
          %s6386 = scalar_lea.sflag [#allocation5], %s6385
          %s6387 = sand.u32 %s212, 1
          %s6388 = smul.addr %s6387, 16
          %s6389 = scalar_lea.vmem [#allocation11], %s6388
          %6391 = dma.done %s6386, 256
        $region80: #{tpu_custom_call.1} parent=75 // pred_fallthru
          _
      $region76: #{tpu_custom_call.1} parent=5 // pred_fallthru
        _
    $region6: #{tpu_custom_call.1} parent=1 // loop_footer
      %s24 = sadd.s32 1, %s20
    $region7: #{tpu_custom_call.1} parent=1 // loop_footer_branch
      %19 = sbr.rel target = $region3
    $region8: #{tpu_custom_call.1} parent=1 // loop_exit
      _
    %6392 = vsyncpa [#allocation4], 1
    %s6393 = scalar_lea.sflag [#allocation4], 1
    %6394 = vsyncpa %s6393, 1
    %6395 = vsyncpa [#allocation7], 1
    %6396 = vsyncpa [#allocation10], 1
    %6397 = vsyncpa [#allocation5], 1
    %s6398 = scalar_lea.sflag [#allocation5], 1
    %6399 = vsyncpa %s6398, 1

</llo_original>
